<compile_context>
chip_gen: v7x
topology: tpu7x:2x2x1
jax: 0.10.0
libtpu: 0.0.40
codegen_flags: <defaults>
</compile_context>

<pallas_src>
import functools
import math

import jax
import jax.numpy as jnp
from jax import lax
from jax.experimental import pallas as pl
from jax.experimental.pallas import tpu as pltpu


# ---------------------------------------------------------------------------
# Fused kernel: LayerNorm + q/kv projections + attention + output projection
# ---------------------------------------------------------------------------
def _fused_mca_kernel(x_ref, media_ref, gamma_ref, beta_ref,
                      wq_ref, wkv_ref, wo_ref, o_ref,
                      *, heads, dim_head, eps, scale, compute_dtype):
    inner = heads * dim_head

    # ---- LayerNorm (f32 statistics, VPU) ---------------------------------
    x = x_ref[...]                                           # (N, D) f32
    mean = jnp.mean(x, axis=-1, keepdims=True)
    xc = x - mean
    var = jnp.mean(xc * xc, axis=-1, keepdims=True)          # biased (nn.LayerNorm)
    xn = (xc * lax.rsqrt(var + eps)) * gamma_ref[...] + beta_ref[...]

    # ---- Projections (MXU); intermediates never leave VMEM ---------------
    q = jnp.dot(xn.astype(compute_dtype), wq_ref[...].astype(compute_dtype),
                preferred_element_type=jnp.float32)          # (N, inner) f32
    q = q * scale                                            # scale q, not scores
    kv = jnp.dot(media_ref[...].astype(compute_dtype),
                 wkv_ref[...].astype(compute_dtype),
                 preferred_element_type=jnp.float32)         # (Lk, 2*inner) f32
    k = kv[:, :inner]                                        # (Lk, inner)
    v = kv[:, inner:]                                        # (Lk, inner)
    wo = wo_ref[...].astype(compute_dtype)                   # (inner, D)

    # ---- Per-head attention; heads are static lane slices (no transposes).
    # Output projection folded into the head loop:
    #   concat_h(o_h) @ W_out == sum_h o_h @ W_out[h*dh:(h+1)*dh, :]
    y = jnp.zeros(o_ref.shape, jnp.float32)                  # (N, D) accumulator
    for h in range(heads):
        lo, hi = h * dim_head, (h + 1) * dim_head
        qh = q[:, lo:hi].astype(compute_dtype)               # (N, dh)
        kh = k[:, lo:hi].astype(compute_dtype)               # (Lk, dh)
        vh = v[:, lo:hi].astype(compute_dtype)               # (Lk, dh)
        # contract the shared last dim directly (avoids k.T / XLU transpose)
        s = lax.dot_general(qh, kh, (((1,), (1,)), ((), ())),
                            preferred_element_type=jnp.float32)   # (N, Lk) f32
        m = jnp.max(s, axis=-1, keepdims=True)
        p = jnp.exp(s - m)                                   # unnormalized, f32
        denom = jnp.sum(p, axis=-1, keepdims=True)           # (N, 1)
        oh = jnp.dot(p.astype(compute_dtype), vh,
                     preferred_element_type=jnp.float32)     # (N, dh) f32
        oh = oh * pl.reciprocal(denom, approx=True)          # normalize post-PV (EUP)
        y = y + jnp.dot(oh.astype(compute_dtype), wo[lo:hi, :],
                        preferred_element_type=jnp.float32)  # (N, D) f32
    o_ref[...] = y.astype(o_ref.dtype)                       # lane-dense (N, D) store


# ---------------------------------------------------------------------------
# Wrapper
# ---------------------------------------------------------------------------
def masked_cross_attention(x, media, params, *, heads, dim_head, eps=1e-5,
                           compute_dtype=jnp.float32):
    """x: (B, N, D) f32; media: (B, T, Nm, D) f32. Returns (B, N, D) f32."""
    B, N, D = x.shape
    _, T, Nm, _ = media.shape
    Lk = T * Nm
    inner = heads * dim_head
    scale = 1.0 / math.sqrt(dim_head)

    # 'b t n d -> b (t n) d' is a pure reshape (no transpose / data movement).
    media_flat = media.reshape(B, Lk, D).astype(compute_dtype)
    # Casting weights (and media) outside halves their HBM->VMEM traffic when
    # compute_dtype is bf16; x / gamma / beta stay f32 for LayerNorm stats.
    w_q = params["w_q"].astype(compute_dtype)
    w_kv = params["w_kv"].astype(compute_dtype)
    w_out = params["w_out"].astype(compute_dtype)
    gamma = params["ln_gamma"].reshape(1, D).astype(jnp.float32)
    beta = params["ln_beta"].reshape(1, D).astype(jnp.float32)

    kernel = functools.partial(
        _fused_mca_kernel, heads=heads, dim_head=dim_head, eps=eps,
        scale=scale, compute_dtype=compute_dtype)

    return pl.pallas_call(
        kernel,
        out_shape=jax.ShapeDtypeStruct((B, N, D), jnp.float32),
        grid=(B,),
        in_specs=[
            pl.BlockSpec((None, N, D), lambda b: (b, 0, 0)),      # x
            pl.BlockSpec((None, Lk, D), lambda b: (b, 0, 0)),     # media (flat)
            pl.BlockSpec((1, D), lambda b: (0, 0)),               # ln gamma
            pl.BlockSpec((1, D), lambda b: (0, 0)),               # ln beta
            pl.BlockSpec((D, inner), lambda b: (0, 0)),           # w_q
            pl.BlockSpec((D, 2 * inner), lambda b: (0, 0)),       # w_kv
            pl.BlockSpec((inner, D), lambda b: (0, 0)),           # w_out
        ],
        out_specs=pl.BlockSpec((None, N, D), lambda b: (b, 0, 0)),
        compiler_params=pltpu.CompilerParams(
            dimension_semantics=("parallel",)),                   # v7x: 2 TCs
    )(x, media_flat, gamma, beta, w_q, w_kv, w_out)


# ---------------------------------------------------------------------------
# Pure-JAX reference (sanity check)
# ---------------------------------------------------------------------------
def reference(x, media, params, *, heads, dim_head, eps=1e-5):
    B, N, D = x.shape
    _, T, Nm, _ = media.shape
    inner = heads * dim_head
    mean = jnp.mean(x, axis=-1, keepdims=True)
    var = jnp.mean((x - mean) ** 2, axis=-1, keepdims=True)
    xn = (x - mean) / jnp.sqrt(var + eps) * params["ln_gamma"] + params["ln_beta"]
    q = xn @ params["w_q"]
    m = media.reshape(B, T * Nm, D)
    kv = m @ params["w_kv"]
    k, v = kv[..., :inner], kv[..., inner:]
    qh = q.reshape(B, N, heads, dim_head).transpose(0, 2, 1, 3)
    kh = k.reshape(B, T * Nm, heads, dim_head).transpose(0, 2, 1, 3)
    vh = v.reshape(B, T * Nm, heads, dim_head).transpose(0, 2, 1, 3)
    s = jnp.einsum("bhqd,bhkd->bhqk", qh, kh) / math.sqrt(dim_head)
    p = jax.nn.softmax(s, axis=-1)
    o = jnp.einsum("bhqk,bhkd->bhqd", p, vh)
    o = o.transpose(0, 2, 1, 3).reshape(B, N, inner)
    return o @ params["w_out"]


# ---------------------------------------------------------------------------
if __name__ == "__main__":
    B, N, D = 2, 8, 128            # batch, query tokens, model dim
    T, Nm = 2, 4                   # media time steps, media tokens per step
    HEADS, DIM_HEAD = 8, 64        # module defaults
    INNER = HEADS * DIM_HEAD

    key = jax.random.PRNGKey(0)
    kx, km, k1, k2, k3, k4, k5 = jax.random.split(key, 7)

    x = jax.random.normal(kx, (B, N, D), dtype=jnp.float32)
    media = jax.random.normal(km, (B, T, Nm, D), dtype=jnp.float32)

    params = {
        "ln_gamma": 1.0 + 0.1 * jax.random.normal(k1, (D,), dtype=jnp.float32),
        "ln_beta": 0.1 * jax.random.normal(k2, (D,), dtype=jnp.float32),
        # weights stored (in, out) == PyTorch weight.T
        "w_q": jax.random.normal(k3, (D, INNER), dtype=jnp.float32) / math.sqrt(D),
        "w_kv": jax.random.normal(k4, (D, 2 * INNER), dtype=jnp.float32) / math.sqrt(D),
        "w_out": jax.random.normal(k5, (INNER, D), dtype=jnp.float32) / math.sqrt(INNER),
    }

    ref = reference(x, media, params, heads=HEADS, dim_head=DIM_HEAD)

    # f32 MXU operands (exactness check)
    out = masked_cross_attention(x, media, params, heads=HEADS, dim_head=DIM_HEAD)
    out = jax.block_until_ready(out)
    assert out.shape == (B, N, D)
    assert jnp.allclose(out, ref, atol=1e-2, rtol=1e-2), "f32 path mismatch vs reference"

    # bf16 MXU operands, f32 accumulation (v5e/v6e recommendation)
    out_bf16 = masked_cross_attention(x, media, params, heads=HEADS,
                                      dim_head=DIM_HEAD, compute_dtype=jnp.bfloat16)
    out_bf16 = jax.block_until_ready(out_bf16)
    assert jnp.allclose(out_bf16, ref, atol=1e-1, rtol=1e-1), "bf16 path mismatch vs reference"

    print("KERNEL_OK")
</pallas_src>

<mosaic_0001>
module attributes {stable_mosaic.version = 11 : i64} {
  func.func @_fused_mca_kernel(%arg0: i32, %arg1: memref<1x8x128xf32, #tpu.memory_space<vmem>>, %arg2: memref<1x8x128xf32, #tpu.memory_space<vmem>>, %arg3: memref<1x128xf32, #tpu.memory_space<vmem>>, %arg4: memref<1x128xf32, #tpu.memory_space<vmem>>, %arg5: memref<128x512xf32, #tpu.memory_space<vmem>>, %arg6: memref<128x1024xf32, #tpu.memory_space<vmem>>, %arg7: memref<512x128xf32, #tpu.memory_space<vmem>>, %arg8: memref<1x8x128xf32, #tpu.memory_space<vmem>>) attributes {dimension_semantics = [#tpu.dimension_semantics<parallel>], iteration_bounds = array<i64: 2>, scalar_prefetch = 0 : i64, scratch_operands = 0 : i64, tpu.core_type = #tpu.core_type<tc>, window_params = [{transform_indices = @transform_0, window_bounds = array<i64: 1, 8, 128>}, {transform_indices = @transform_1, window_bounds = array<i64: 1, 8, 128>}, {pipeline_mode = #tpu.pipeline_mode<synchronous>, transform_indices = @transform_2, window_bounds = array<i64: 1, 128>}, {pipeline_mode = #tpu.pipeline_mode<synchronous>, transform_indices = @transform_3, window_bounds = array<i64: 1, 128>}, {pipeline_mode = #tpu.pipeline_mode<synchronous>, transform_indices = @transform_4, window_bounds = array<i64: 128, 512>}, {pipeline_mode = #tpu.pipeline_mode<synchronous>, transform_indices = @transform_5, window_bounds = array<i64: 128, 1024>}, {pipeline_mode = #tpu.pipeline_mode<synchronous>, transform_indices = @transform_6, window_bounds = array<i64: 512, 128>}, {transform_indices = @transform_7, window_bounds = array<i64: 1, 8, 128>}]} {
    %c0 = arith.constant 0 : index
    %c0_0 = arith.constant 0 : index
    %c0_1 = arith.constant 0 : index
    %0 = vector.load %arg1[%c0, %c0_0, %c0_1] : memref<1x8x128xf32, #tpu.memory_space<vmem>>, vector<1x8x128xf32>
    %1 = vector.shape_cast %0 : vector<1x8x128xf32> to vector<8x128xf32>
    %cst = arith.constant dense<0.000000e+00> : vector<8xf32>
    %2 = vector.multi_reduction <add>, %1, %cst [1] : vector<8x128xf32> to vector<8xf32>
    %3 = vector.shape_cast %2 : vector<8xf32> to vector<8x1xf32>
    %cst_2 = arith.constant 1.280000e+02 : f32
    %4 = vector.broadcast %cst_2 : f32 to vector<8x1xf32>
    %5 = arith.divf %3, %4 : vector<8x1xf32>
    %6 = vector.broadcast %5 : vector<8x1xf32> to vector<8x128xf32>
    %7 = arith.subf %1, %6 : vector<8x128xf32>
    %8 = arith.mulf %7, %7 : vector<8x128xf32>
    %cst_3 = arith.constant dense<0.000000e+00> : vector<8xf32>
    %9 = vector.multi_reduction <add>, %8, %cst_3 [1] : vector<8x128xf32> to vector<8xf32>
    %10 = vector.shape_cast %9 : vector<8xf32> to vector<8x1xf32>
    %cst_4 = arith.constant 1.280000e+02 : f32
    %11 = vector.broadcast %cst_4 : f32 to vector<8x1xf32>
    %12 = arith.divf %10, %11 : vector<8x1xf32>
    %cst_5 = arith.constant 9.99999974E-6 : f32
    %13 = vector.broadcast %cst_5 : f32 to vector<8x1xf32>
    %14 = arith.addf %12, %13 : vector<8x1xf32>
    %15 = math.rsqrt %14 : vector<8x1xf32>
    %16 = vector.broadcast %15 : vector<8x1xf32> to vector<8x128xf32>
    %17 = arith.mulf %7, %16 : vector<8x128xf32>
    %c0_6 = arith.constant 0 : index
    %c0_7 = arith.constant 0 : index
    %18 = vector.load %arg3[%c0_6, %c0_7] : memref<1x128xf32, #tpu.memory_space<vmem>>, vector<1x128xf32>
    %19 = vector.broadcast %18 : vector<1x128xf32> to vector<8x128xf32>
    %20 = arith.mulf %17, %19 : vector<8x128xf32>
    %c0_8 = arith.constant 0 : index
    %c0_9 = arith.constant 0 : index
    %21 = vector.load %arg4[%c0_8, %c0_9] : memref<1x128xf32, #tpu.memory_space<vmem>>, vector<1x128xf32>
    %22 = vector.broadcast %21 : vector<1x128xf32> to vector<8x128xf32>
    %23 = arith.addf %20, %22 : vector<8x128xf32>
    %c0_10 = arith.constant 0 : index
    %c0_11 = arith.constant 0 : index
    %24 = vector.load %arg5[%c0_10, %c0_11] : memref<128x512xf32, #tpu.memory_space<vmem>>, vector<128x512xf32>
    %cst_12 = arith.constant dense<0.000000e+00> : vector<8x512xf32>
    %25 = tpu.matmul %23, %24, %cst_12 {dimension_numbers = #tpu.dot_dimension_numbers<[1], [0], [0], [1], [0, 0, 1, 1], [], []>} : vector<8x128xf32>, vector<128x512xf32>, vector<8x512xf32> -> vector<8x512xf32>
    %cst_13 = arith.constant 1.250000e-01 : f32
    %26 = vector.broadcast %cst_13 : f32 to vector<8x512xf32>
    %27 = arith.mulf %25, %26 : vector<8x512xf32>
    %c0_14 = arith.constant 0 : index
    %c0_15 = arith.constant 0 : index
    %c0_16 = arith.constant 0 : index
    %28 = vector.load %arg2[%c0_14, %c0_15, %c0_16] : memref<1x8x128xf32, #tpu.memory_space<vmem>>, vector<1x8x128xf32>
    %29 = vector.shape_cast %28 : vector<1x8x128xf32> to vector<8x128xf32>
    %c0_17 = arith.constant 0 : index
    %c0_18 = arith.constant 0 : index
    %30 = vector.load %arg6[%c0_17, %c0_18] : memref<128x1024xf32, #tpu.memory_space<vmem>>, vector<128x1024xf32>
    %cst_19 = arith.constant dense<0.000000e+00> : vector<8x1024xf32>
    %31 = tpu.matmul %29, %30, %cst_19 {dimension_numbers = #tpu.dot_dimension_numbers<[1], [0], [0], [1], [0, 0, 1, 1], [], []>} : vector<8x128xf32>, vector<128x1024xf32>, vector<8x1024xf32> -> vector<8x1024xf32>
    %32 = vector.extract_strided_slice %31 {offsets = [0, 0], sizes = [8, 512], strides = [1, 1]} : vector<8x1024xf32> to vector<8x512xf32>
    %33 = vector.extract_strided_slice %31 {offsets = [0, 512], sizes = [8, 512], strides = [1, 1]} : vector<8x1024xf32> to vector<8x512xf32>
    %c0_20 = arith.constant 0 : index
    %c0_21 = arith.constant 0 : index
    %34 = vector.load %arg7[%c0_20, %c0_21] : memref<512x128xf32, #tpu.memory_space<vmem>>, vector<512x128xf32>
    %cst_22 = arith.constant 0.000000e+00 : f32
    %35 = vector.broadcast %cst_22 : f32 to vector<8x128xf32>
    %36 = vector.extract_strided_slice %27 {offsets = [0, 0], sizes = [8, 64], strides = [1, 1]} : vector<8x512xf32> to vector<8x64xf32>
    %37 = vector.extract_strided_slice %32 {offsets = [0, 0], sizes = [8, 64], strides = [1, 1]} : vector<8x512xf32> to vector<8x64xf32>
    %38 = vector.extract_strided_slice %33 {offsets = [0, 0], sizes = [8, 64], strides = [1, 1]} : vector<8x512xf32> to vector<8x64xf32>
    %cst_23 = arith.constant dense<0.000000e+00> : vector<8x8xf32>
    %39 = tpu.matmul %36, %37, %cst_23 {dimension_numbers = #tpu.dot_dimension_numbers<[1], [1], [0], [0], [0, 0, 1, 0], [], []>} : vector<8x64xf32>, vector<8x64xf32>, vector<8x8xf32> -> vector<8x8xf32>
    %cst_24 = arith.constant dense<0xFF800000> : vector<8xf32>
    %40 = vector.multi_reduction <maximumf>, %39, %cst_24 [1] : vector<8x8xf32> to vector<8xf32>
    %41 = vector.shape_cast %40 : vector<8xf32> to vector<8x1xf32>
    %42 = vector.broadcast %41 : vector<8x1xf32> to vector<8x8xf32>
    %43 = arith.subf %39, %42 : vector<8x8xf32>
    %44 = math.exp %43 : vector<8x8xf32>
    %cst_25 = arith.constant dense<0.000000e+00> : vector<8xf32>
    %45 = vector.multi_reduction <add>, %44, %cst_25 [1] : vector<8x8xf32> to vector<8xf32>
    %46 = vector.shape_cast %45 : vector<8xf32> to vector<8x1xf32>
    %cst_26 = arith.constant dense<0.000000e+00> : vector<8x64xf32>
    %47 = tpu.matmul %44, %38, %cst_26 {dimension_numbers = #tpu.dot_dimension_numbers<[1], [0], [0], [1], [0, 0, 1, 1], [], []>} : vector<8x8xf32>, vector<8x64xf32>, vector<8x64xf32> -> vector<8x64xf32>
    %48 = tpu.reciprocal %46 {approx = true} : vector<8x1xf32> -> vector<8x1xf32>
    %49 = vector.broadcast %48 : vector<8x1xf32> to vector<8x64xf32>
    %50 = arith.mulf %47, %49 : vector<8x64xf32>
    %51 = vector.extract_strided_slice %34 {offsets = [0, 0], sizes = [64, 128], strides = [1, 1]} : vector<512x128xf32> to vector<64x128xf32>
    %cst_27 = arith.constant dense<0.000000e+00> : vector<8x128xf32>
    %52 = tpu.matmul %50, %51, %cst_27 {dimension_numbers = #tpu.dot_dimension_numbers<[1], [0], [0], [1], [0, 0, 1, 1], [], []>} : vector<8x64xf32>, vector<64x128xf32>, vector<8x128xf32> -> vector<8x128xf32>
    %53 = arith.addf %35, %52 : vector<8x128xf32>
    %54 = vector.extract_strided_slice %27 {offsets = [0, 64], sizes = [8, 64], strides = [1, 1]} : vector<8x512xf32> to vector<8x64xf32>
    %55 = vector.extract_strided_slice %32 {offsets = [0, 64], sizes = [8, 64], strides = [1, 1]} : vector<8x512xf32> to vector<8x64xf32>
    %56 = vector.extract_strided_slice %33 {offsets = [0, 64], sizes = [8, 64], strides = [1, 1]} : vector<8x512xf32> to vector<8x64xf32>
    %cst_28 = arith.constant dense<0.000000e+00> : vector<8x8xf32>
    %57 = tpu.matmul %54, %55, %cst_28 {dimension_numbers = #tpu.dot_dimension_numbers<[1], [1], [0], [0], [0, 0, 1, 0], [], []>} : vector<8x64xf32>, vector<8x64xf32>, vector<8x8xf32> -> vector<8x8xf32>
    %cst_29 = arith.constant dense<0xFF800000> : vector<8xf32>
    %58 = vector.multi_reduction <maximumf>, %57, %cst_29 [1] : vector<8x8xf32> to vector<8xf32>
    %59 = vector.shape_cast %58 : vector<8xf32> to vector<8x1xf32>
    %60 = vector.broadcast %59 : vector<8x1xf32> to vector<8x8xf32>
    %61 = arith.subf %57, %60 : vector<8x8xf32>
    %62 = math.exp %61 : vector<8x8xf32>
    %cst_30 = arith.constant dense<0.000000e+00> : vector<8xf32>
    %63 = vector.multi_reduction <add>, %62, %cst_30 [1] : vector<8x8xf32> to vector<8xf32>
    %64 = vector.shape_cast %63 : vector<8xf32> to vector<8x1xf32>
    %cst_31 = arith.constant dense<0.000000e+00> : vector<8x64xf32>
    %65 = tpu.matmul %62, %56, %cst_31 {dimension_numbers = #tpu.dot_dimension_numbers<[1], [0], [0], [1], [0, 0, 1, 1], [], []>} : vector<8x8xf32>, vector<8x64xf32>, vector<8x64xf32> -> vector<8x64xf32>
    %66 = tpu.reciprocal %64 {approx = true} : vector<8x1xf32> -> vector<8x1xf32>
    %67 = vector.broadcast %66 : vector<8x1xf32> to vector<8x64xf32>
    %68 = arith.mulf %65, %67 : vector<8x64xf32>
    %69 = vector.extract_strided_slice %34 {offsets = [64, 0], sizes = [64, 128], strides = [1, 1]} : vector<512x128xf32> to vector<64x128xf32>
    %cst_32 = arith.constant dense<0.000000e+00> : vector<8x128xf32>
    %70 = tpu.matmul %68, %69, %cst_32 {dimension_numbers = #tpu.dot_dimension_numbers<[1], [0], [0], [1], [0, 0, 1, 1], [], []>} : vector<8x64xf32>, vector<64x128xf32>, vector<8x128xf32> -> vector<8x128xf32>
    %71 = arith.addf %53, %70 : vector<8x128xf32>
    %72 = vector.extract_strided_slice %27 {offsets = [0, 128], sizes = [8, 64], strides = [1, 1]} : vector<8x512xf32> to vector<8x64xf32>
    %73 = vector.extract_strided_slice %32 {offsets = [0, 128], sizes = [8, 64], strides = [1, 1]} : vector<8x512xf32> to vector<8x64xf32>
    %74 = vector.extract_strided_slice %33 {offsets = [0, 128], sizes = [8, 64], strides = [1, 1]} : vector<8x512xf32> to vector<8x64xf32>
    %cst_33 = arith.constant dense<0.000000e+00> : vector<8x8xf32>
    %75 = tpu.matmul %72, %73, %cst_33 {dimension_numbers = #tpu.dot_dimension_numbers<[1], [1], [0], [0], [0, 0, 1, 0], [], []>} : vector<8x64xf32>, vector<8x64xf32>, vector<8x8xf32> -> vector<8x8xf32>
    %cst_34 = arith.constant dense<0xFF800000> : vector<8xf32>
    %76 = vector.multi_reduction <maximumf>, %75, %cst_34 [1] : vector<8x8xf32> to vector<8xf32>
    %77 = vector.shape_cast %76 : vector<8xf32> to vector<8x1xf32>
    %78 = vector.broadcast %77 : vector<8x1xf32> to vector<8x8xf32>
    %79 = arith.subf %75, %78 : vector<8x8xf32>
    %80 = math.exp %79 : vector<8x8xf32>
    %cst_35 = arith.constant dense<0.000000e+00> : vector<8xf32>
    %81 = vector.multi_reduction <add>, %80, %cst_35 [1] : vector<8x8xf32> to vector<8xf32>
    %82 = vector.shape_cast %81 : vector<8xf32> to vector<8x1xf32>
    %cst_36 = arith.constant dense<0.000000e+00> : vector<8x64xf32>
    %83 = tpu.matmul %80, %74, %cst_36 {dimension_numbers = #tpu.dot_dimension_numbers<[1], [0], [0], [1], [0, 0, 1, 1], [], []>} : vector<8x8xf32>, vector<8x64xf32>, vector<8x64xf32> -> vector<8x64xf32>
    %84 = tpu.reciprocal %82 {approx = true} : vector<8x1xf32> -> vector<8x1xf32>
    %85 = vector.broadcast %84 : vector<8x1xf32> to vector<8x64xf32>
    %86 = arith.mulf %83, %85 : vector<8x64xf32>
    %87 = vector.extract_strided_slice %34 {offsets = [128, 0], sizes = [64, 128], strides = [1, 1]} : vector<512x128xf32> to vector<64x128xf32>
    %cst_37 = arith.constant dense<0.000000e+00> : vector<8x128xf32>
    %88 = tpu.matmul %86, %87, %cst_37 {dimension_numbers = #tpu.dot_dimension_numbers<[1], [0], [0], [1], [0, 0, 1, 1], [], []>} : vector<8x64xf32>, vector<64x128xf32>, vector<8x128xf32> -> vector<8x128xf32>
    %89 = arith.addf %71, %88 : vector<8x128xf32>
    %90 = vector.extract_strided_slice %27 {offsets = [0, 192], sizes = [8, 64], strides = [1, 1]} : vector<8x512xf32> to vector<8x64xf32>
    %91 = vector.extract_strided_slice %32 {offsets = [0, 192], sizes = [8, 64], strides = [1, 1]} : vector<8x512xf32> to vector<8x64xf32>
    %92 = vector.extract_strided_slice %33 {offsets = [0, 192], sizes = [8, 64], strides = [1, 1]} : vector<8x512xf32> to vector<8x64xf32>
    %cst_38 = arith.constant dense<0.000000e+00> : vector<8x8xf32>
    %93 = tpu.matmul %90, %91, %cst_38 {dimension_numbers = #tpu.dot_dimension_numbers<[1], [1], [0], [0], [0, 0, 1, 0], [], []>} : vector<8x64xf32>, vector<8x64xf32>, vector<8x8xf32> -> vector<8x8xf32>
    %cst_39 = arith.constant dense<0xFF800000> : vector<8xf32>
    %94 = vector.multi_reduction <maximumf>, %93, %cst_39 [1] : vector<8x8xf32> to vector<8xf32>
    %95 = vector.shape_cast %94 : vector<8xf32> to vector<8x1xf32>
    %96 = vector.broadcast %95 : vector<8x1xf32> to vector<8x8xf32>
    %97 = arith.subf %93, %96 : vector<8x8xf32>
    %98 = math.exp %97 : vector<8x8xf32>
    %cst_40 = arith.constant dense<0.000000e+00> : vector<8xf32>
    %99 = vector.multi_reduction <add>, %98, %cst_40 [1] : vector<8x8xf32> to vector<8xf32>
    %100 = vector.shape_cast %99 : vector<8xf32> to vector<8x1xf32>
    %cst_41 = arith.constant dense<0.000000e+00> : vector<8x64xf32>
    %101 = tpu.matmul %98, %92, %cst_41 {dimension_numbers = #tpu.dot_dimension_numbers<[1], [0], [0], [1], [0, 0, 1, 1], [], []>} : vector<8x8xf32>, vector<8x64xf32>, vector<8x64xf32> -> vector<8x64xf32>
    %102 = tpu.reciprocal %100 {approx = true} : vector<8x1xf32> -> vector<8x1xf32>
    %103 = vector.broadcast %102 : vector<8x1xf32> to vector<8x64xf32>
    %104 = arith.mulf %101, %103 : vector<8x64xf32>
    %105 = vector.extract_strided_slice %34 {offsets = [192, 0], sizes = [64, 128], strides = [1, 1]} : vector<512x128xf32> to vector<64x128xf32>
    %cst_42 = arith.constant dense<0.000000e+00> : vector<8x128xf32>
    %106 = tpu.matmul %104, %105, %cst_42 {dimension_numbers = #tpu.dot_dimension_numbers<[1], [0], [0], [1], [0, 0, 1, 1], [], []>} : vector<8x64xf32>, vector<64x128xf32>, vector<8x128xf32> -> vector<8x128xf32>
    %107 = arith.addf %89, %106 : vector<8x128xf32>
    %108 = vector.extract_strided_slice %27 {offsets = [0, 256], sizes = [8, 64], strides = [1, 1]} : vector<8x512xf32> to vector<8x64xf32>
    %109 = vector.extract_strided_slice %32 {offsets = [0, 256], sizes = [8, 64], strides = [1, 1]} : vector<8x512xf32> to vector<8x64xf32>
    %110 = vector.extract_strided_slice %33 {offsets = [0, 256], sizes = [8, 64], strides = [1, 1]} : vector<8x512xf32> to vector<8x64xf32>
    %cst_43 = arith.constant dense<0.000000e+00> : vector<8x8xf32>
    %111 = tpu.matmul %108, %109, %cst_43 {dimension_numbers = #tpu.dot_dimension_numbers<[1], [1], [0], [0], [0, 0, 1, 0], [], []>} : vector<8x64xf32>, vector<8x64xf32>, vector<8x8xf32> -> vector<8x8xf32>
    %cst_44 = arith.constant dense<0xFF800000> : vector<8xf32>
    %112 = vector.multi_reduction <maximumf>, %111, %cst_44 [1] : vector<8x8xf32> to vector<8xf32>
    %113 = vector.shape_cast %112 : vector<8xf32> to vector<8x1xf32>
    %114 = vector.broadcast %113 : vector<8x1xf32> to vector<8x8xf32>
    %115 = arith.subf %111, %114 : vector<8x8xf32>
    %116 = math.exp %115 : vector<8x8xf32>
    %cst_45 = arith.constant dense<0.000000e+00> : vector<8xf32>
    %117 = vector.multi_reduction <add>, %116, %cst_45 [1] : vector<8x8xf32> to vector<8xf32>
    %118 = vector.shape_cast %117 : vector<8xf32> to vector<8x1xf32>
    %cst_46 = arith.constant dense<0.000000e+00> : vector<8x64xf32>
    %119 = tpu.matmul %116, %110, %cst_46 {dimension_numbers = #tpu.dot_dimension_numbers<[1], [0], [0], [1], [0, 0, 1, 1], [], []>} : vector<8x8xf32>, vector<8x64xf32>, vector<8x64xf32> -> vector<8x64xf32>
    %120 = tpu.reciprocal %118 {approx = true} : vector<8x1xf32> -> vector<8x1xf32>
    %121 = vector.broadcast %120 : vector<8x1xf32> to vector<8x64xf32>
    %122 = arith.mulf %119, %121 : vector<8x64xf32>
    %123 = vector.extract_strided_slice %34 {offsets = [256, 0], sizes = [64, 128], strides = [1, 1]} : vector<512x128xf32> to vector<64x128xf32>
    %cst_47 = arith.constant dense<0.000000e+00> : vector<8x128xf32>
    %124 = tpu.matmul %122, %123, %cst_47 {dimension_numbers = #tpu.dot_dimension_numbers<[1], [0], [0], [1], [0, 0, 1, 1], [], []>} : vector<8x64xf32>, vector<64x128xf32>, vector<8x128xf32> -> vector<8x128xf32>
    %125 = arith.addf %107, %124 : vector<8x128xf32>
    %126 = vector.extract_strided_slice %27 {offsets = [0, 320], sizes = [8, 64], strides = [1, 1]} : vector<8x512xf32> to vector<8x64xf32>
    %127 = vector.extract_strided_slice %32 {offsets = [0, 320], sizes = [8, 64], strides = [1, 1]} : vector<8x512xf32> to vector<8x64xf32>
    %128 = vector.extract_strided_slice %33 {offsets = [0, 320], sizes = [8, 64], strides = [1, 1]} : vector<8x512xf32> to vector<8x64xf32>
    %cst_48 = arith.constant dense<0.000000e+00> : vector<8x8xf32>
    %129 = tpu.matmul %126, %127, %cst_48 {dimension_numbers = #tpu.dot_dimension_numbers<[1], [1], [0], [0], [0, 0, 1, 0], [], []>} : vector<8x64xf32>, vector<8x64xf32>, vector<8x8xf32> -> vector<8x8xf32>
    %cst_49 = arith.constant dense<0xFF800000> : vector<8xf32>
    %130 = vector.multi_reduction <maximumf>, %129, %cst_49 [1] : vector<8x8xf32> to vector<8xf32>
    %131 = vector.shape_cast %130 : vector<8xf32> to vector<8x1xf32>
    %132 = vector.broadcast %131 : vector<8x1xf32> to vector<8x8xf32>
    %133 = arith.subf %129, %132 : vector<8x8xf32>
    %134 = math.exp %133 : vector<8x8xf32>
    %cst_50 = arith.constant dense<0.000000e+00> : vector<8xf32>
    %135 = vector.multi_reduction <add>, %134, %cst_50 [1] : vector<8x8xf32> to vector<8xf32>
    %136 = vector.shape_cast %135 : vector<8xf32> to vector<8x1xf32>
    %cst_51 = arith.constant dense<0.000000e+00> : vector<8x64xf32>
    %137 = tpu.matmul %134, %128, %cst_51 {dimension_numbers = #tpu.dot_dimension_numbers<[1], [0], [0], [1], [0, 0, 1, 1], [], []>} : vector<8x8xf32>, vector<8x64xf32>, vector<8x64xf32> -> vector<8x64xf32>
    %138 = tpu.reciprocal %136 {approx = true} : vector<8x1xf32> -> vector<8x1xf32>
    %139 = vector.broadcast %138 : vector<8x1xf32> to vector<8x64xf32>
    %140 = arith.mulf %137, %139 : vector<8x64xf32>
    %141 = vector.extract_strided_slice %34 {offsets = [320, 0], sizes = [64, 128], strides = [1, 1]} : vector<512x128xf32> to vector<64x128xf32>
    %cst_52 = arith.constant dense<0.000000e+00> : vector<8x128xf32>
    %142 = tpu.matmul %140, %141, %cst_52 {dimension_numbers = #tpu.dot_dimension_numbers<[1], [0], [0], [1], [0, 0, 1, 1], [], []>} : vector<8x64xf32>, vector<64x128xf32>, vector<8x128xf32> -> vector<8x128xf32>
    %143 = arith.addf %125, %142 : vector<8x128xf32>
    %144 = vector.extract_strided_slice %27 {offsets = [0, 384], sizes = [8, 64], strides = [1, 1]} : vector<8x512xf32> to vector<8x64xf32>
    %145 = vector.extract_strided_slice %32 {offsets = [0, 384], sizes = [8, 64], strides = [1, 1]} : vector<8x512xf32> to vector<8x64xf32>
    %146 = vector.extract_strided_slice %33 {offsets = [0, 384], sizes = [8, 64], strides = [1, 1]} : vector<8x512xf32> to vector<8x64xf32>
    %cst_53 = arith.constant dense<0.000000e+00> : vector<8x8xf32>
    %147 = tpu.matmul %144, %145, %cst_53 {dimension_numbers = #tpu.dot_dimension_numbers<[1], [1], [0], [0], [0, 0, 1, 0], [], []>} : vector<8x64xf32>, vector<8x64xf32>, vector<8x8xf32> -> vector<8x8xf32>
    %cst_54 = arith.constant dense<0xFF800000> : vector<8xf32>
    %148 = vector.multi_reduction <maximumf>, %147, %cst_54 [1] : vector<8x8xf32> to vector<8xf32>
    %149 = vector.shape_cast %148 : vector<8xf32> to vector<8x1xf32>
    %150 = vector.broadcast %149 : vector<8x1xf32> to vector<8x8xf32>
    %151 = arith.subf %147, %150 : vector<8x8xf32>
    %152 = math.exp %151 : vector<8x8xf32>
    %cst_55 = arith.constant dense<0.000000e+00> : vector<8xf32>
    %153 = vector.multi_reduction <add>, %152, %cst_55 [1] : vector<8x8xf32> to vector<8xf32>
    %154 = vector.shape_cast %153 : vector<8xf32> to vector<8x1xf32>
    %cst_56 = arith.constant dense<0.000000e+00> : vector<8x64xf32>
    %155 = tpu.matmul %152, %146, %cst_56 {dimension_numbers = #tpu.dot_dimension_numbers<[1], [0], [0], [1], [0, 0, 1, 1], [], []>} : vector<8x8xf32>, vector<8x64xf32>, vector<8x64xf32> -> vector<8x64xf32>
    %156 = tpu.reciprocal %154 {approx = true} : vector<8x1xf32> -> vector<8x1xf32>
    %157 = vector.broadcast %156 : vector<8x1xf32> to vector<8x64xf32>
    %158 = arith.mulf %155, %157 : vector<8x64xf32>
    %159 = vector.extract_strided_slice %34 {offsets = [384, 0], sizes = [64, 128], strides = [1, 1]} : vector<512x128xf32> to vector<64x128xf32>
    %cst_57 = arith.constant dense<0.000000e+00> : vector<8x128xf32>
    %160 = tpu.matmul %158, %159, %cst_57 {dimension_numbers = #tpu.dot_dimension_numbers<[1], [0], [0], [1], [0, 0, 1, 1], [], []>} : vector<8x64xf32>, vector<64x128xf32>, vector<8x128xf32> -> vector<8x128xf32>
    %161 = arith.addf %143, %160 : vector<8x128xf32>
    %162 = vector.extract_strided_slice %27 {offsets = [0, 448], sizes = [8, 64], strides = [1, 1]} : vector<8x512xf32> to vector<8x64xf32>
    %163 = vector.extract_strided_slice %32 {offsets = [0, 448], sizes = [8, 64], strides = [1, 1]} : vector<8x512xf32> to vector<8x64xf32>
    %164 = vector.extract_strided_slice %33 {offsets = [0, 448], sizes = [8, 64], strides = [1, 1]} : vector<8x512xf32> to vector<8x64xf32>
    %cst_58 = arith.constant dense<0.000000e+00> : vector<8x8xf32>
    %165 = tpu.matmul %162, %163, %cst_58 {dimension_numbers = #tpu.dot_dimension_numbers<[1], [1], [0], [0], [0, 0, 1, 0], [], []>} : vector<8x64xf32>, vector<8x64xf32>, vector<8x8xf32> -> vector<8x8xf32>
    %cst_59 = arith.constant dense<0xFF800000> : vector<8xf32>
    %166 = vector.multi_reduction <maximumf>, %165, %cst_59 [1] : vector<8x8xf32> to vector<8xf32>
    %167 = vector.shape_cast %166 : vector<8xf32> to vector<8x1xf32>
    %168 = vector.broadcast %167 : vector<8x1xf32> to vector<8x8xf32>
    %169 = arith.subf %165, %168 : vector<8x8xf32>
    %170 = math.exp %169 : vector<8x8xf32>
    %cst_60 = arith.constant dense<0.000000e+00> : vector<8xf32>
    %171 = vector.multi_reduction <add>, %170, %cst_60 [1] : vector<8x8xf32> to vector<8xf32>
    %172 = vector.shape_cast %171 : vector<8xf32> to vector<8x1xf32>
    %cst_61 = arith.constant dense<0.000000e+00> : vector<8x64xf32>
    %173 = tpu.matmul %170, %164, %cst_61 {dimension_numbers = #tpu.dot_dimension_numbers<[1], [0], [0], [1], [0, 0, 1, 1], [], []>} : vector<8x8xf32>, vector<8x64xf32>, vector<8x64xf32> -> vector<8x64xf32>
    %174 = tpu.reciprocal %172 {approx = true} : vector<8x1xf32> -> vector<8x1xf32>
    %175 = vector.broadcast %174 : vector<8x1xf32> to vector<8x64xf32>
    %176 = arith.mulf %173, %175 : vector<8x64xf32>
    %177 = vector.extract_strided_slice %34 {offsets = [448, 0], sizes = [64, 128], strides = [1, 1]} : vector<512x128xf32> to vector<64x128xf32>
    %cst_62 = arith.constant dense<0.000000e+00> : vector<8x128xf32>
    %178 = tpu.matmul %176, %177, %cst_62 {dimension_numbers = #tpu.dot_dimension_numbers<[1], [0], [0], [1], [0, 0, 1, 1], [], []>} : vector<8x64xf32>, vector<64x128xf32>, vector<8x128xf32> -> vector<8x128xf32>
    %179 = arith.addf %161, %178 : vector<8x128xf32>
    %c0_63 = arith.constant 0 : index
    %c0_64 = arith.constant 0 : index
    %c0_65 = arith.constant 0 : index
    %180 = vector.load %arg8[%c0_63, %c0_64, %c0_65] : memref<1x8x128xf32, #tpu.memory_space<vmem>>, vector<1x8x128xf32>
    %181 = vector.shape_cast %180 : vector<1x8x128xf32> to vector<8x128xf32>
    %182 = vector.shape_cast %179 : vector<8x128xf32> to vector<1x8x128xf32>
    tpu.vector_store %arg8[%c0_63, %c0_64, %c0_65], %182 {strides = array<i32>} : memref<1x8x128xf32, #tpu.memory_space<vmem>>, vector<1x8x128xf32>,
    return
  }
  func.func @transform_0(%arg0: i32) -> (i32, i32, i32) {
    %c0_i32 = arith.constant 0 : i32
    %c0_i32_0 = arith.constant 0 : i32
    %c0_i32_1 = arith.constant 0 : i32
    return %arg0, %c0_i32, %c0_i32_0 : i32, i32, i32
  }
  func.func @transform_1(%arg0: i32) -> (i32, i32, i32) {
    %c0_i32 = arith.constant 0 : i32
    %c0_i32_0 = arith.constant 0 : i32
    %c0_i32_1 = arith.constant 0 : i32
    return %arg0, %c0_i32, %c0_i32_0 : i32, i32, i32
  }
  func.func @transform_2(%arg0: i32) -> (i32, i32) {
    %c0_i32 = arith.constant 0 : i32
    %c0_i32_0 = arith.constant 0 : i32
    %c0_i32_1 = arith.constant 0 : i32
    return %c0_i32, %c0_i32_0 : i32, i32
  }
  func.func @transform_3(%arg0: i32) -> (i32, i32) {
    %c0_i32 = arith.constant 0 : i32
    %c0_i32_0 = arith.constant 0 : i32
    %c0_i32_1 = arith.constant 0 : i32
    return %c0_i32, %c0_i32_0 : i32, i32
  }
  func.func @transform_4(%arg0: i32) -> (i32, i32) {
    %c0_i32 = arith.constant 0 : i32
    %c0_i32_0 = arith.constant 0 : i32
    %c0_i32_1 = arith.constant 0 : i32
    return %c0_i32, %c0_i32_0 : i32, i32
  }
  func.func @transform_5(%arg0: i32) -> (i32, i32) {
    %c0_i32 = arith.constant 0 : i32
    %c0_i32_0 = arith.constant 0 : i32
    %c0_i32_1 = arith.constant 0 : i32
    return %c0_i32, %c0_i32_0 : i32, i32
  }
  func.func @transform_6(%arg0: i32) -> (i32, i32) {
    %c0_i32 = arith.constant 0 : i32
    %c0_i32_0 = arith.constant 0 : i32
    %c0_i32_1 = arith.constant 0 : i32
    return %c0_i32, %c0_i32_0 : i32, i32
  }
  func.func @transform_7(%arg0: i32) -> (i32, i32, i32) {
    %c0_i32 = arith.constant 0 : i32
    %c0_i32_0 = arith.constant 0 : i32
    %c0_i32_1 = arith.constant 0 : i32
    return %arg0, %c0_i32, %c0_i32_0 : i32, i32, i32
  }
}

</mosaic_0001>

<llo_original>
// kernel: tpu_custom_call.1
$region0: #{tpu_custom_call.1}
  #allocation0 [shape = 'u32[]', space=smem, size = 0x4, offset = 0x4, fixed_abs, tag = 'smem constant byte address 0x4 - core index']
  #allocation1 [shape = 'u32[144,128]{1,0:T(1,128)}', space=vmem, size = 0x12000, scoped, tag = 'internal scratch']
  %s0 = inlined_call_operand.hbm [shape: f32[2,8,128], index: 0, kind: input, shape index: {}]
  %s1 = inlined_call_operand.hbm [shape: f32[2,8,128], index: 1, kind: input, shape index: {}]
  %s2 = inlined_call_operand.vmem [shape: f32[1,128], index: 2, kind: input, shape index: {}]
  %s3 = inlined_call_operand.vmem [shape: f32[1,128], index: 3, kind: input, shape index: {}]
  %s4 = inlined_call_operand.hbm [shape: f32[128,512], index: 4, kind: input, shape index: {}]
  %s5 = inlined_call_operand.hbm [shape: f32[128,1024], index: 5, kind: input, shape index: {}]
  %s6 = inlined_call_operand.hbm [shape: f32[512,128], index: 6, kind: input, shape index: {}]
  %s7 = inlined_call_operand.hbm [shape: f32[2,8,128], index: 7, kind: output, shape index: {}]
  %s8 = sld [smem:[#allocation0]]
  $region81: #{tpu_custom_call.1} parent=0
    _
  %s10 = ssub.s32 1, %s8
  %s11 = scalar_select 0, %s10, %s8
  $region1: #{tpu_custom_call.1} parent=0
    #allocation2 [shape = 'u8[8192]{0}', space=vmem, size = 0x2000, scoped, tag = 'input window, operand 0']
    #allocation3 [shape = 's32[2]{0}', space=sflag, size = 0x8, scoped, tag = 'scoped memory for tpu_custom_call.1']
    #allocation4 [shape = 's32[2]{0}', space=sflag, size = 0x8, scoped, tag = 'scoped memory for tpu_custom_call.1']
    #allocation5 [shape = 'u8[8192]{0}', space=vmem, size = 0x2000, scoped, tag = 'input window, operand 1']
    #allocation6 [shape = 's32[2]{0}', space=sflag, size = 0x8, scoped, tag = 'scoped memory for tpu_custom_call.1']
    #allocation7 [shape = 'u8[262144]{0}', space=vmem, size = 0x40000, scoped, tag = 'input window, operand 4, single buffered']
    #allocation8 [shape = 'u8[524288]{0}', space=vmem, size = 0x80000, scoped, tag = 'input window, operand 5, single buffered']
    #allocation9 [shape = 's32[1]{0}', space=sflag, size = 0x4, scoped, tag = 'scoped memory for tpu_custom_call.1']
    #allocation10 [shape = 'u8[262144]{0}', space=vmem, size = 0x40000, scoped, tag = 'input window, operand 6, single buffered']
    #allocation11 [shape = 'u8[8192]{0}', space=vmem, size = 0x2000, scoped, tag = 'output window, operand 0']
    %12 = vsyncpa [#allocation3], 0
    %s13 = scalar_lea.sflag [#allocation3], 1
    %14 = vsyncpa %s13, 0
    %15 = vsyncpa [#allocation6], 0
    %s16 = scalar_lea.sflag [#allocation6], 1
    %17 = vsyncpa %s16, 0
    %18 = vsyncpa [#allocation9], 0
    %19 = vsyncpa [#allocation4], 0
    %s20 = scalar_lea.sflag [#allocation4], 1
    %21 = vsyncpa %s20, 0
    loop: start=0, step=1, limit=4
    $region2: #{tpu_custom_call.1} parent=1 // loop_pre_header
      _
    $region3: #{tpu_custom_call.1} parent=1 // loop_header
      %s23 = sphi 0, %s27
      %p24 = scmp.ge.s32.totalorder %s23, 4
      %s33 = sphi 0, %s35
      %s36 = sphi 0, %s33
      %s37 = sphi 0, %s36
      %s53 = sphi 0, %s37
      %s59 = sphi 0, %s61
      %s62 = sphi 0, %s59
      %s63 = sphi 0, %s62
      %s79 = sphi 0, %s63
      %s83 = sphi 0, %s83
      %s85 = sphi 0, %s83
      %s86 = sphi 0, %s85
      %s100 = sphi 0, %s86
      %s104 = sphi 0, %s104
      %s106 = sphi 0, %s104
      %s107 = sphi 0, %s106
      %s121 = sphi 0, %s107
      %s125 = sphi 0, %s125
      %s127 = sphi 0, %s125
      %s128 = sphi 0, %s127
      %s142 = sphi 0, %s128
      %s146 = sphi 0, %s146
      %s148 = sphi 0, %s146
      %s149 = sphi 0, %s148
      %s163 = sphi 0, %s149
      %s167 = sphi 0, %s167
      %s169 = sphi 0, %s167
      %s170 = sphi 0, %s169
      %s184 = sphi 0, %s170
      %s190 = sphi 0, %s192
      %s193 = sphi 0, %s190
      %s194 = sphi 0, %s193
      %s210 = sphi 0, %s194
    $region4: #{tpu_custom_call.1} parent=1 // loop_header_branch
      %26 = sbr.rel (%p24) target = $region8
    $region5: #{tpu_custom_call.1} parent=1 // loop_body
      %s28 = ssub.s32 %s23, 1
      %s29 = ssub.s32 %s23, 2
      %s30 = sadd.s32 %s23, 1
      %s31 = ssub.s32 %s23, %s30
      %p32 = scmp.eq.s32.totalorder %s31, 0
      %s34 = sadd.s32 %s33, 1
      %s35 = scalar_select %p32, %s33, %s34
      %p38 = pneg %p32
      %p39 = scmp.eq.s32.totalorder %s23, 1
      %p40 = por %p38, %p39
      %p41 = scmp.ne.s32.totalorder %s33, %s36
      %p42 = scmp.eq.s32.totalorder %s23, 0
      %p43 = por %p41, %p42
      %p44 = scmp.ne.s32.totalorder %s33, %s36
      %p45 = scmp.eq.s32.totalorder %s28, 1
      %p46 = por %p44, %p45
      %p47 = scmp.ne.s32.totalorder %s36, %s37
      %p48 = scmp.eq.s32.totalorder %s28, 0
      %p49 = por %p47, %p48
      %p50 = scmp.ne.s32.totalorder %s36, %s37
      %p51 = scmp.eq.s32.totalorder %s29, 1
      %p52 = por %p50, %p51
      %p54 = scmp.ne.s32.totalorder %s37, %s53
      %p55 = scmp.eq.s32.totalorder %s29, 0
      %p56 = por %p54, %p55
      %s57 = ssub.s32 %s23, %s30
      %p58 = scmp.eq.s32.totalorder %s57, 0
      %s60 = sadd.s32 %s59, 1
      %s61 = scalar_select %p58, %s59, %s60
      %p64 = pneg %p58
      %p65 = scmp.eq.s32.totalorder %s23, 1
      %p66 = por %p64, %p65
      %p67 = scmp.ne.s32.totalorder %s59, %s62
      %p68 = scmp.eq.s32.totalorder %s23, 0
      %p69 = por %p67, %p68
      %p70 = scmp.ne.s32.totalorder %s59, %s62
      %p71 = scmp.eq.s32.totalorder %s28, 1
      %p72 = por %p70, %p71
      %p73 = scmp.ne.s32.totalorder %s62, %s63
      %p74 = scmp.eq.s32.totalorder %s28, 0
      %p75 = por %p73, %p74
      %p76 = scmp.ne.s32.totalorder %s62, %s63
      %p77 = scmp.eq.s32.totalorder %s29, 1
      %p78 = por %p76, %p77
      %p80 = scmp.ne.s32.totalorder %s63, %s79
      %p81 = scmp.eq.s32.totalorder %s29, 0
      %p82 = por %p80, %p81
      %s84 = sadd.s32 %s83, 1
      %p87 = scmp.eq.s32.totalorder %s23, 1
      %p88 = scmp.ne.s32.totalorder %s83, %s85
      %p89 = scmp.eq.s32.totalorder %s23, 0
      %p90 = por %p88, %p89
      %p91 = scmp.ne.s32.totalorder %s83, %s85
      %p92 = scmp.eq.s32.totalorder %s28, 1
      %p93 = por %p91, %p92
      %p94 = scmp.ne.s32.totalorder %s85, %s86
      %p95 = scmp.eq.s32.totalorder %s28, 0
      %p96 = por %p94, %p95
      %p97 = scmp.ne.s32.totalorder %s85, %s86
      %p98 = scmp.eq.s32.totalorder %s29, 1
      %p99 = por %p97, %p98
      %p101 = scmp.ne.s32.totalorder %s86, %s100
      %p102 = scmp.eq.s32.totalorder %s29, 0
      %p103 = por %p101, %p102
      %s105 = sadd.s32 %s104, 1
      %p108 = scmp.eq.s32.totalorder %s23, 1
      %p109 = scmp.ne.s32.totalorder %s104, %s106
      %p110 = scmp.eq.s32.totalorder %s23, 0
      %p111 = por %p109, %p110
      %p112 = scmp.ne.s32.totalorder %s104, %s106
      %p113 = scmp.eq.s32.totalorder %s28, 1
      %p114 = por %p112, %p113
      %p115 = scmp.ne.s32.totalorder %s106, %s107
      %p116 = scmp.eq.s32.totalorder %s28, 0
      %p117 = por %p115, %p116
      %p118 = scmp.ne.s32.totalorder %s106, %s107
      %p119 = scmp.eq.s32.totalorder %s29, 1
      %p120 = por %p118, %p119
      %p122 = scmp.ne.s32.totalorder %s107, %s121
      %p123 = scmp.eq.s32.totalorder %s29, 0
      %p124 = por %p122, %p123
      %s126 = sadd.s32 %s125, 1
      %p129 = scmp.eq.s32.totalorder %s23, 1
      %p130 = scmp.ne.s32.totalorder %s125, %s127
      %p131 = scmp.eq.s32.totalorder %s23, 0
      %p132 = por %p130, %p131
      %p133 = scmp.ne.s32.totalorder %s125, %s127
      %p134 = scmp.eq.s32.totalorder %s28, 1
      %p135 = por %p133, %p134
      %p136 = scmp.ne.s32.totalorder %s127, %s128
      %p137 = scmp.eq.s32.totalorder %s28, 0
      %p138 = por %p136, %p137
      %p139 = scmp.ne.s32.totalorder %s127, %s128
      %p140 = scmp.eq.s32.totalorder %s29, 1
      %p141 = por %p139, %p140
      %p143 = scmp.ne.s32.totalorder %s128, %s142
      %p144 = scmp.eq.s32.totalorder %s29, 0
      %p145 = por %p143, %p144
      %s147 = sadd.s32 %s146, 1
      %p150 = scmp.eq.s32.totalorder %s23, 1
      %p151 = scmp.ne.s32.totalorder %s146, %s148
      %p152 = scmp.eq.s32.totalorder %s23, 0
      %p153 = por %p151, %p152
      %p154 = scmp.ne.s32.totalorder %s146, %s148
      %p155 = scmp.eq.s32.totalorder %s28, 1
      %p156 = por %p154, %p155
      %p157 = scmp.ne.s32.totalorder %s148, %s149
      %p158 = scmp.eq.s32.totalorder %s28, 0
      %p159 = por %p157, %p158
      %p160 = scmp.ne.s32.totalorder %s148, %s149
      %p161 = scmp.eq.s32.totalorder %s29, 1
      %p162 = por %p160, %p161
      %p164 = scmp.ne.s32.totalorder %s149, %s163
      %p165 = scmp.eq.s32.totalorder %s29, 0
      %p166 = por %p164, %p165
      %s168 = sadd.s32 %s167, 1
      %p171 = scmp.eq.s32.totalorder %s23, 1
      %p172 = scmp.ne.s32.totalorder %s167, %s169
      %p173 = scmp.eq.s32.totalorder %s23, 0
      %p174 = por %p172, %p173
      %p175 = scmp.ne.s32.totalorder %s167, %s169
      %p176 = scmp.eq.s32.totalorder %s28, 1
      %p177 = por %p175, %p176
      %p178 = scmp.ne.s32.totalorder %s169, %s170
      %p179 = scmp.eq.s32.totalorder %s28, 0
      %p180 = por %p178, %p179
      %p181 = scmp.ne.s32.totalorder %s169, %s170
      %p182 = scmp.eq.s32.totalorder %s29, 1
      %p183 = por %p181, %p182
      %p185 = scmp.ne.s32.totalorder %s170, %s184
      %p186 = scmp.eq.s32.totalorder %s29, 0
      %p187 = por %p185, %p186
      %s188 = ssub.s32 %s23, %s30
      %p189 = scmp.eq.s32.totalorder %s188, 0
      %s191 = sadd.s32 %s190, 1
      %s192 = scalar_select %p189, %s190, %s191
      %p195 = pneg %p189
      %p196 = scmp.eq.s32.totalorder %s23, 1
      %p197 = por %p195, %p196
      %p198 = scmp.ne.s32.totalorder %s190, %s193
      %p199 = scmp.eq.s32.totalorder %s23, 0
      %p200 = por %p198, %p199
      %p201 = scmp.ne.s32.totalorder %s190, %s193
      %p202 = scmp.eq.s32.totalorder %s28, 1
      %p203 = por %p201, %p202
      %p204 = scmp.ne.s32.totalorder %s193, %s194
      %p205 = scmp.eq.s32.totalorder %s28, 0
      %p206 = por %p204, %p205
      %p207 = scmp.ne.s32.totalorder %s193, %s194
      %p208 = scmp.eq.s32.totalorder %s29, 1
      %p209 = por %p207, %p208
      %p211 = scmp.ne.s32.totalorder %s194, %s210
      %p212 = scmp.eq.s32.totalorder %s29, 0
      %p213 = por %p211, %p212
      %p214 = scmp.le.s32.totalorder 1, %s23
      %p215 = scmp.lt.s32.totalorder %s23, 3
      %p216 = pnand %p214, %p215
      %p217 = pneg %p216
      // Predicated region
      $region9: #{tpu_custom_call.1} parent=5 // pred_check
        _
      $region10: #{tpu_custom_call.1} parent=5 // pred_check_branch
        %219 = sbr.rel (%p216) target = $region12
      $region11: #{tpu_custom_call.1} parent=5 // pred_region
        %s220 = ssub.s32 %s23, 1
        // Predicated region
        $region13: #{tpu_custom_call.1} parent=11 // pred_check
          %p221 = pneg %p96
        $region14: #{tpu_custom_call.1} parent=11 // pred_check_branch
          %223 = sbr.rel (%p221) target = $region16
        $region15: #{tpu_custom_call.1} parent=11 // pred_region
          _
        $region16: #{tpu_custom_call.1} parent=11 // pred_fallthru
          _
        // Predicated region
        $region17: #{tpu_custom_call.1} parent=11 // pred_check
          %p224 = pneg %p117
        $region18: #{tpu_custom_call.1} parent=11 // pred_check_branch
          %226 = sbr.rel (%p224) target = $region20
        $region19: #{tpu_custom_call.1} parent=11 // pred_region
          _
        $region20: #{tpu_custom_call.1} parent=11 // pred_fallthru
          _
        // Predicated region
        $region21: #{tpu_custom_call.1} parent=11 // pred_check
          %p227 = pneg %p138
        $region22: #{tpu_custom_call.1} parent=11 // pred_check_branch
          %229 = sbr.rel (%p227) target = $region24
        $region23: #{tpu_custom_call.1} parent=11 // pred_region
          %s231 = ssub.s32 8192, 8192
          %232 = vsyncadd [#allocation6], %s231
          %s233 = sshll.u32 [#allocation7], 4
          %s234 = int_to_ptr.vmem [resolvable:$true] %s233
          %239 = dma.hbm_to_vmem [thread:$0]  %s4, 8192, %s234, [#allocation6], 512, 512, 32
        $region24: #{tpu_custom_call.1} parent=11 // pred_fallthru
          _
        // Predicated region
        $region25: #{tpu_custom_call.1} parent=11 // pred_check
          %p240 = pneg %p159
        $region26: #{tpu_custom_call.1} parent=11 // pred_check_branch
          %242 = sbr.rel (%p240) target = $region28
        $region27: #{tpu_custom_call.1} parent=11 // pred_region
          %s244 = ssub.s32 16384, 16384
          %245 = vsyncadd [#allocation9], %s244
          %s246 = sshll.u32 [#allocation8], 4
          %s247 = int_to_ptr.vmem [resolvable:$true] %s246
          %252 = dma.hbm_to_vmem [thread:$0]  %s5, 16384, %s247, [#allocation9], 1024, 1024, 64
        $region28: #{tpu_custom_call.1} parent=11 // pred_fallthru
          _
        // Predicated region
        $region29: #{tpu_custom_call.1} parent=11 // pred_check
          %p253 = pneg %p180
        $region30: #{tpu_custom_call.1} parent=11 // pred_check_branch
          %255 = sbr.rel (%p253) target = $region32
        $region31: #{tpu_custom_call.1} parent=11 // pred_region
          %s257 = ssub.s32 8192, 8192
          %258 = vsyncadd [#allocation9], %s257
          %s259 = sshll.u32 [#allocation10], 4
          %s260 = int_to_ptr.vmem [resolvable:$true] %s259
          %265 = dma.hbm_to_vmem [thread:$0]  %s6, 8192, %s260, [#allocation9], 128, 128, 8
        $region32: #{tpu_custom_call.1} parent=11 // pred_fallthru
          _
      $region12: #{tpu_custom_call.1} parent=5 // pred_fallthru
        _
      %p266 = scmp.lt.s32.totalorder %s23, 2
      // Predicated region
      $region33: #{tpu_custom_call.1} parent=5 // pred_check
        %p267 = pneg %p266
      $region34: #{tpu_custom_call.1} parent=5 // pred_check_branch
        %269 = sbr.rel (%p267) target = $region36
      $region35: #{tpu_custom_call.1} parent=5 // pred_region
        // Predicated region
        $region37: #{tpu_custom_call.1} parent=35 // pred_check
          %p270 = pneg %p43
        $region38: #{tpu_custom_call.1} parent=35 // pred_check_branch
          %272 = sbr.rel (%p270) target = $region40
        $region39: #{tpu_custom_call.1} parent=35 // pred_region
          %s273 = sand.u32 %s33, 1
          %s274 = scalar_lea.sflag [#allocation3], %s273
          %s275 = sand.u32 %s33, 1
          %s276 = smul.addr %s275, 8
          %s277 = scalar_lea.vmem [#allocation2], %s276
          %s279 = ssub.s32 128, 128
          %280 = vsyncadd %s274, %s279
          %s281 = smul.addr %s23, 128
          %s282 = scalar_lea.hbm %s0, %s281
          %s284 = sshll.u32 %s277, 4
          %s285 = int_to_ptr.vmem [resolvable:$true] %s284
          %287 = dma.hbm_to_vmem [thread:$0]  %s282, 128, %s285, %s274
        $region40: #{tpu_custom_call.1} parent=35 // pred_fallthru
          _
        // Predicated region
        $region41: #{tpu_custom_call.1} parent=35 // pred_check
          %p288 = pneg %p69
        $region42: #{tpu_custom_call.1} parent=35 // pred_check_branch
          %290 = sbr.rel (%p288) target = $region44
        $region43: #{tpu_custom_call.1} parent=35 // pred_region
          %s291 = sand.u32 %s23, 1
          %s292 = scalar_lea.sflag [#allocation6], %s291
          %s293 = sand.u32 %s59, 1
          %s294 = smul.addr %s293, 8
          %s295 = scalar_lea.vmem [#allocation5], %s294
          %s297 = ssub.s32 128, 128
          %298 = vsyncadd %s292, %s297
          %s299 = smul.addr %s23, 128
          %s300 = scalar_lea.hbm %s1, %s299
          %s302 = sshll.u32 %s295, 4
          %s303 = int_to_ptr.vmem [resolvable:$true] %s302
          %305 = dma.hbm_to_vmem [thread:$0]  %s300, 128, %s303, %s292
        $region44: #{tpu_custom_call.1} parent=35 // pred_fallthru
          _
      $region36: #{tpu_custom_call.1} parent=5 // pred_fallthru
        _
      %p306 = scmp.le.s32.totalorder 1, %s23
      %p307 = scmp.lt.s32.totalorder %s23, 3
      %p308 = pnand %p306, %p307
      %p309 = pneg %p308
      // Predicated region
      $region45: #{tpu_custom_call.1} parent=5 // pred_check
        _
      $region46: #{tpu_custom_call.1} parent=5 // pred_check_branch
        %311 = sbr.rel (%p308) target = $region48
      $region47: #{tpu_custom_call.1} parent=5 // pred_region
        %s312 = ssub.s32 %s23, 1
        %s313 = sand.u32 %s36, 1
        %s314 = scalar_lea.sflag [#allocation3], %s313
        %s315 = sand.u32 %s36, 1
        %s316 = smul.addr %s315, 8
        %s317 = scalar_lea.vmem [#allocation2], %s316
        // Predicated region
        $region49: #{tpu_custom_call.1} parent=47 // pred_check
          %p318 = pneg %p49
        $region50: #{tpu_custom_call.1} parent=47 // pred_check_branch
          %320 = sbr.rel (%p318) target = $region52
        $region51: #{tpu_custom_call.1} parent=47 // pred_region
          %321 = dma.done %s314, 128
        $region52: #{tpu_custom_call.1} parent=47 // pred_fallthru
          _
        %s322 = sand.u32 %s28, 1
        %s323 = scalar_lea.sflag [#allocation6], %s322
        %s324 = sand.u32 %s62, 1
        %s325 = smul.addr %s324, 8
        %s326 = scalar_lea.vmem [#allocation5], %s325
        // Predicated region
        $region53: #{tpu_custom_call.1} parent=47 // pred_check
          %p327 = pneg %p75
        $region54: #{tpu_custom_call.1} parent=47 // pred_check_branch
          %329 = sbr.rel (%p327) target = $region56
        $region55: #{tpu_custom_call.1} parent=47 // pred_region
          %330 = dma.done %s323, 128
        $region56: #{tpu_custom_call.1} parent=47 // pred_fallthru
          _
        // Predicated region
        $region57: #{tpu_custom_call.1} parent=47 // pred_check
          %p331 = pneg %p138
        $region58: #{tpu_custom_call.1} parent=47 // pred_check_branch
          %333 = sbr.rel (%p331) target = $region60
        $region59: #{tpu_custom_call.1} parent=47 // pred_region
          %334 = dma.done [#allocation6], 8192
        $region60: #{tpu_custom_call.1} parent=47 // pred_fallthru
          _
        // Predicated region
        $region61: #{tpu_custom_call.1} parent=47 // pred_check
          %p335 = pneg %p159
        $region62: #{tpu_custom_call.1} parent=47 // pred_check_branch
          %337 = sbr.rel (%p335) target = $region64
        $region63: #{tpu_custom_call.1} parent=47 // pred_region
          %338 = dma.done [#allocation9], 16384
        $region64: #{tpu_custom_call.1} parent=47 // pred_fallthru
          _
        // Predicated region
        $region65: #{tpu_custom_call.1} parent=47 // pred_check
          %p339 = pneg %p180
        $region66: #{tpu_custom_call.1} parent=47 // pred_check_branch
          %341 = sbr.rel (%p339) target = $region68
        $region67: #{tpu_custom_call.1} parent=47 // pred_region
          %342 = dma.done [#allocation9], 8192
        $region68: #{tpu_custom_call.1} parent=47 // pred_fallthru
          _
        %s343 = sand.u32 %s36, 1
        %s344 = scalar_lea.sflag [#allocation3], %s343
        %s345 = sand.u32 %s36, 1
        %s346 = smul.addr %s345, 8
        %s347 = scalar_lea.vmem [#allocation2], %s346
        %p348 = pneg %p49
        %p349 = pneg %p46
        %s350 = sand.u32 %s28, 1
        %s351 = scalar_lea.sflag [#allocation6], %s350
        %s352 = sand.u32 %s62, 1
        %s353 = smul.addr %s352, 8
        %s354 = scalar_lea.vmem [#allocation5], %s353
        %p355 = pneg %p75
        %p356 = pneg %p72
        %p357 = pneg %p96
        %p358 = pneg %p93
        %p359 = pneg %p117
        %p360 = pneg %p114
        %p361 = pneg %p138
        %p362 = pneg %p135
        %p363 = pneg %p159
        %p364 = pneg %p156
        %p365 = pneg %p180
        %p366 = pneg %p177
        %p367 = pneg %p206
        %p368 = pneg %p203
        %s369 = sand.u32 %s193, 1
        %s370 = scalar_lea.sflag [#allocation4], %s369
        %s371 = sand.u32 %s193, 1
        %s372 = smul.addr %s371, 8
        %s373 = scalar_lea.vmem [#allocation11], %s372
        %v374 = vld [vmem:[%s317] sm:$0xff]
        %375 = vadd.xlane.f32.xlu0 %v374
        %v376 = vpop.xlane.xlu0 %375
        %v377 = vrcp.pop 128.0
        %v378 = vmul.f32 %v376, %v377
        %v379 = vsub.f32 %v374, %v378
        %v380 = vmul.f32 %v379, %v379
        %381 = vadd.xlane.f32.xlu0 %v380
        %v382 = vpop.xlane.xlu0 %381
        %v383 = vmul.f32 %v382, %v377
        %v384 = vadd.f32 %v383, 1e-05
        %v385 = vrsqrt.pop %v384
        %v386 = vmul.f32 %v379, %v385
        %v387 = vld [vmem:[%s2] sm:$0x1]
        %v389 = vlaneseq
        %v390 = vshrl.u32 %v389, 7
        %v391 = vsub.s32 0, %v390
        %v392 = vrot.slane %v387, %v391
        %v394 = vmul.f32 %v386, %v392
        %v395 = vld [vmem:[%s3] sm:$0x1]
        %v397 = vlaneseq
        %v398 = vshrl.u32 %v397, 7
        %v399 = vsub.s32 0, %v398
        %v400 = vrot.slane %v395, %v399
        %v402 = vadd.f32 %v394, %v400
        %v403 = vld [vmem:[#allocation7] sm:$0xff]
        %v404 = vld [vmem:[#allocation7 + $0x8] sm:$0xff]
        %v405 = vld [vmem:[#allocation7 + $0x10] sm:$0xff]
        %v406 = vld [vmem:[#allocation7 + $0x18] sm:$0xff]
        %v407 = vld [vmem:[#allocation7 + $0x20] sm:$0xff]
        %v408 = vld [vmem:[#allocation7 + $0x28] sm:$0xff]
        %v409 = vld [vmem:[#allocation7 + $0x30] sm:$0xff]
        %v410 = vld [vmem:[#allocation7 + $0x38] sm:$0xff]
        %v411 = vld [vmem:[#allocation7 + $0x40] sm:$0xff]
        %v412 = vld [vmem:[#allocation7 + $0x48] sm:$0xff]
        %v413 = vld [vmem:[#allocation7 + $0x50] sm:$0xff]
        %v414 = vld [vmem:[#allocation7 + $0x58] sm:$0xff]
        %v415 = vld [vmem:[#allocation7 + $0x60] sm:$0xff]
        %v416 = vld [vmem:[#allocation7 + $0x68] sm:$0xff]
        %v417 = vld [vmem:[#allocation7 + $0x70] sm:$0xff]
        %v418 = vld [vmem:[#allocation7 + $0x78] sm:$0xff]
        %v419 = vld [vmem:[#allocation7 + $0x80] sm:$0xff]
        %v420 = vld [vmem:[#allocation7 + $0x88] sm:$0xff]
        %v421 = vld [vmem:[#allocation7 + $0x90] sm:$0xff]
        %v422 = vld [vmem:[#allocation7 + $0x98] sm:$0xff]
        %v423 = vld [vmem:[#allocation7 + $0xa0] sm:$0xff]
        %v424 = vld [vmem:[#allocation7 + $0xa8] sm:$0xff]
        %v425 = vld [vmem:[#allocation7 + $0xb0] sm:$0xff]
        %v426 = vld [vmem:[#allocation7 + $0xb8] sm:$0xff]
        %v427 = vld [vmem:[#allocation7 + $0xc0] sm:$0xff]
        %v428 = vld [vmem:[#allocation7 + $0xc8] sm:$0xff]
        %v429 = vld [vmem:[#allocation7 + $0xd0] sm:$0xff]
        %v430 = vld [vmem:[#allocation7 + $0xd8] sm:$0xff]
        %v431 = vld [vmem:[#allocation7 + $0xe0] sm:$0xff]
        %v432 = vld [vmem:[#allocation7 + $0xe8] sm:$0xff]
        %v433 = vld [vmem:[#allocation7 + $0xf0] sm:$0xff]
        %v434 = vld [vmem:[#allocation7 + $0xf8] sm:$0xff]
        %v435 = vld [vmem:[#allocation7 + $0x100] sm:$0xff]
        %v436 = vld [vmem:[#allocation7 + $0x108] sm:$0xff]
        %v437 = vld [vmem:[#allocation7 + $0x110] sm:$0xff]
        %v438 = vld [vmem:[#allocation7 + $0x118] sm:$0xff]
        %v439 = vld [vmem:[#allocation7 + $0x120] sm:$0xff]
        %v440 = vld [vmem:[#allocation7 + $0x128] sm:$0xff]
        %v441 = vld [vmem:[#allocation7 + $0x130] sm:$0xff]
        %v442 = vld [vmem:[#allocation7 + $0x138] sm:$0xff]
        %v443 = vld [vmem:[#allocation7 + $0x140] sm:$0xff]
        %v444 = vld [vmem:[#allocation7 + $0x148] sm:$0xff]
        %v445 = vld [vmem:[#allocation7 + $0x150] sm:$0xff]
        %v446 = vld [vmem:[#allocation7 + $0x158] sm:$0xff]
        %v447 = vld [vmem:[#allocation7 + $0x160] sm:$0xff]
        %v448 = vld [vmem:[#allocation7 + $0x168] sm:$0xff]
        %v449 = vld [vmem:[#allocation7 + $0x170] sm:$0xff]
        %v450 = vld [vmem:[#allocation7 + $0x178] sm:$0xff]
        %v451 = vld [vmem:[#allocation7 + $0x180] sm:$0xff]
        %v452 = vld [vmem:[#allocation7 + $0x188] sm:$0xff]
        %v453 = vld [vmem:[#allocation7 + $0x190] sm:$0xff]
        %v454 = vld [vmem:[#allocation7 + $0x198] sm:$0xff]
        %v455 = vld [vmem:[#allocation7 + $0x1a0] sm:$0xff]
        %v456 = vld [vmem:[#allocation7 + $0x1a8] sm:$0xff]
        %v457 = vld [vmem:[#allocation7 + $0x1b0] sm:$0xff]
        %v458 = vld [vmem:[#allocation7 + $0x1b8] sm:$0xff]
        %v459 = vld [vmem:[#allocation7 + $0x1c0] sm:$0xff]
        %v460 = vld [vmem:[#allocation7 + $0x1c8] sm:$0xff]
        %v461 = vld [vmem:[#allocation7 + $0x1d0] sm:$0xff]
        %v462 = vld [vmem:[#allocation7 + $0x1d8] sm:$0xff]
        %v463 = vld [vmem:[#allocation7 + $0x1e0] sm:$0xff]
        %v464 = vld [vmem:[#allocation7 + $0x1e8] sm:$0xff]
        %v465 = vld [vmem:[#allocation7 + $0x1f0] sm:$0xff]
        %v466 = vld [vmem:[#allocation7 + $0x1f8] sm:$0xff]
        %467 = vmatprep.subr.mxu0 %v404
        %468 = vmatpush1.msra.mxu0 %v403
        %469 = vmatprep.subr.mxu0 %v408
        %470 = vmatpush1.msra.mxu0 %v407
        %471 = vmatprep.subr.mxu0 %v412
        %472 = vmatpush1.msra.mxu0 %v411
        %473 = vmatprep.subr.mxu0 %v416
        %474 = vmatpush1.msra.mxu0 %v415
        %475 = vmatprep.subr.mxu0 %v420
        %476 = vmatpush1.msra.mxu0 %v419
        %477 = vmatprep.subr.mxu0 %v424
        %478 = vmatpush1.msra.mxu0 %v423
        %479 = vmatprep.subr.mxu0 %v428
        %480 = vmatpush1.msra.mxu0 %v427
        %481 = vmatprep.subr.mxu0 %v432
        %482 = vmatpush1.msra.mxu0 %v431
        %483 = vmatprep.subr.mxu0 %v436
        %484 = vmatpush1.msra.mxu0 %v435
        %485 = vmatprep.subr.mxu0 %v440
        %486 = vmatpush1.msra.mxu0 %v439
        %487 = vmatprep.subr.mxu0 %v444
        %488 = vmatpush1.msra.mxu0 %v443
        %489 = vmatprep.subr.mxu0 %v448
        %490 = vmatpush1.msra.mxu0 %v447
        %491 = vmatprep.subr.mxu0 %v452
        %492 = vmatpush1.msra.mxu0 %v451
        %493 = vmatprep.subr.mxu0 %v456
        %494 = vmatpush1.msra.mxu0 %v455
        %495 = vmatprep.subr.mxu0 %v460
        %496 = vmatpush1.msra.mxu0 %v459
        %497 = vmatprep.subr.mxu0 %v464
        %498 = vmatpush1.msra.mxu0 %v463
        %499 = vmatprep.subr.mxu0 0.0
        %500 = vmatpush1.msra.mxu0 0.0
        %501 = vmatprep.subr.mxu0 0.0
        %502 = vmatpush1.msra.mxu0 0.0
        %503 = vmatprep.subr.mxu0 0.0
        %504 = vmatpush1.msra.mxu0 0.0
        %505 = vmatprep.subr.mxu0 0.0
        %506 = vmatpush1.msra.mxu0 0.0
        %507 = vmatprep.subr.mxu0 0.0
        %508 = vmatpush1.msra.mxu0 0.0
        %509 = vmatprep.subr.mxu0 0.0
        %510 = vmatpush1.msra.mxu0 0.0
        %511 = vmatprep.subr.mxu0 0.0
        %512 = vmatpush1.msra.mxu0 0.0
        %513 = vmatprep.subr.mxu0 0.0
        %514 = vmatpush1.msra.mxu0 0.0
        %515 = vmatprep.subr.mxu0 0.0
        %516 = vmatpush1.msra.mxu0 0.0
        %517 = vmatprep.subr.mxu0 0.0
        %518 = vmatpush1.msra.mxu0 0.0
        %519 = vmatprep.subr.mxu0 0.0
        %520 = vmatpush1.msra.mxu0 0.0
        %521 = vmatprep.subr.mxu0 0.0
        %522 = vmatpush1.msra.mxu0 0.0
        %523 = vmatprep.subr.mxu0 0.0
        %524 = vmatpush1.msra.mxu0 0.0
        %525 = vmatprep.subr.mxu0 0.0
        %526 = vmatpush1.msra.mxu0 0.0
        %527 = vmatprep.subr.mxu0 0.0
        %528 = vmatpush1.msra.mxu0 0.0
        %529 = vmatprep.subr.mxu0 0.0
        %530 = vmatpush1.msra.mxu0 0.0
        %531 = vmatprep.mubr.f32.mxu0 0.0
        %532 = vmatmul.mubr.f32.gmra.mrb[0].mxu0 %v402
        %v533 = vpop.f32.mrb[0].mxu0
        %v534 = vadd.f32 0.0, %v533
        %v535 = vpop.f32.mrb[0].mxu0
        %v536 = vadd.f32 0.0, %v535
        %537 = vdwg.mxu0
        %538 = vmatprep.subr.mxu0 %v406
        %539 = vmatpush1.msra.mxu0 %v405
        %540 = vmatprep.subr.mxu0 %v410
        %541 = vmatpush1.msra.mxu0 %v409
        %542 = vmatprep.subr.mxu0 %v414
        %543 = vmatpush1.msra.mxu0 %v413
        %544 = vmatprep.subr.mxu0 %v418
        %545 = vmatpush1.msra.mxu0 %v417
        %546 = vmatprep.subr.mxu0 %v422
        %547 = vmatpush1.msra.mxu0 %v421
        %548 = vmatprep.subr.mxu0 %v426
        %549 = vmatpush1.msra.mxu0 %v425
        %550 = vmatprep.subr.mxu0 %v430
        %551 = vmatpush1.msra.mxu0 %v429
        %552 = vmatprep.subr.mxu0 %v434
        %553 = vmatpush1.msra.mxu0 %v433
        %554 = vmatprep.subr.mxu0 %v438
        %555 = vmatpush1.msra.mxu0 %v437
        %556 = vmatprep.subr.mxu0 %v442
        %557 = vmatpush1.msra.mxu0 %v441
        %558 = vmatprep.subr.mxu0 %v446
        %559 = vmatpush1.msra.mxu0 %v445
        %560 = vmatprep.subr.mxu0 %v450
        %561 = vmatpush1.msra.mxu0 %v449
        %562 = vmatprep.subr.mxu0 %v454
        %563 = vmatpush1.msra.mxu0 %v453
        %564 = vmatprep.subr.mxu0 %v458
        %565 = vmatpush1.msra.mxu0 %v457
        %566 = vmatprep.subr.mxu0 %v462
        %567 = vmatpush1.msra.mxu0 %v461
        %568 = vmatprep.subr.mxu0 %v466
        %569 = vmatpush1.msra.mxu0 %v465
        %570 = vmatprep.subr.mxu0 0.0
        %571 = vmatpush1.msra.mxu0 0.0
        %572 = vmatprep.subr.mxu0 0.0
        %573 = vmatpush1.msra.mxu0 0.0
        %574 = vmatprep.subr.mxu0 0.0
        %575 = vmatpush1.msra.mxu0 0.0
        %576 = vmatprep.subr.mxu0 0.0
        %577 = vmatpush1.msra.mxu0 0.0
        %578 = vmatprep.subr.mxu0 0.0
        %579 = vmatpush1.msra.mxu0 0.0
        %580 = vmatprep.subr.mxu0 0.0
        %581 = vmatpush1.msra.mxu0 0.0
        %582 = vmatprep.subr.mxu0 0.0
        %583 = vmatpush1.msra.mxu0 0.0
        %584 = vmatprep.subr.mxu0 0.0
        %585 = vmatpush1.msra.mxu0 0.0
        %586 = vmatprep.subr.mxu0 0.0
        %587 = vmatpush1.msra.mxu0 0.0
        %588 = vmatprep.subr.mxu0 0.0
        %589 = vmatpush1.msra.mxu0 0.0
        %590 = vmatprep.subr.mxu0 0.0
        %591 = vmatpush1.msra.mxu0 0.0
        %592 = vmatprep.subr.mxu0 0.0
        %593 = vmatpush1.msra.mxu0 0.0
        %594 = vmatprep.subr.mxu0 0.0
        %595 = vmatpush1.msra.mxu0 0.0
        %596 = vmatprep.subr.mxu0 0.0
        %597 = vmatpush1.msra.mxu0 0.0
        %598 = vmatprep.subr.mxu0 0.0
        %599 = vmatpush1.msra.mxu0 0.0
        %600 = vmatprep.subr.mxu0 0.0
        %601 = vmatpush1.msra.mxu0 0.0
        %602 = vmatprep.mubr.f32.mxu0 0.0
        %603 = vmatmul.mubr.f32.gmra.mrb[0].mxu0 %v402
        %v604 = vpop.f32.mrb[0].mxu0
        %v605 = vadd.f32 0.0, %v604
        %v606 = vpop.f32.mrb[0].mxu0
        %v607 = vadd.f32 0.0, %v606
        %608 = vdwg.mxu0
        %v609 = vmul.f32 %v534, 0.125
        %v610 = vmul.f32 %v536, 0.125
        %v611 = vmul.f32 %v605, 0.125
        %v612 = vmul.f32 %v607, 0.125
        %v613 = vld [vmem:[%s326] sm:$0xff]
        %v614 = vld [vmem:[#allocation8] sm:$0xff]
        %v615 = vld [vmem:[#allocation8 + $0x8] sm:$0xff]
        %v616 = vld [vmem:[#allocation8 + $0x10] sm:$0xff]
        %v617 = vld [vmem:[#allocation8 + $0x18] sm:$0xff]
        %v618 = vld [vmem:[#allocation8 + $0x20] sm:$0xff]
        %v619 = vld [vmem:[#allocation8 + $0x28] sm:$0xff]
        %v620 = vld [vmem:[#allocation8 + $0x30] sm:$0xff]
        %v621 = vld [vmem:[#allocation8 + $0x38] sm:$0xff]
        %v622 = vld [vmem:[#allocation8 + $0x40] sm:$0xff]
        %v623 = vld [vmem:[#allocation8 + $0x48] sm:$0xff]
        %v624 = vld [vmem:[#allocation8 + $0x50] sm:$0xff]
        %v625 = vld [vmem:[#allocation8 + $0x58] sm:$0xff]
        %v626 = vld [vmem:[#allocation8 + $0x60] sm:$0xff]
        %v627 = vld [vmem:[#allocation8 + $0x68] sm:$0xff]
        %v628 = vld [vmem:[#allocation8 + $0x70] sm:$0xff]
        %v629 = vld [vmem:[#allocation8 + $0x78] sm:$0xff]
        %v630 = vld [vmem:[#allocation8 + $0x80] sm:$0xff]
        %v631 = vld [vmem:[#allocation8 + $0x88] sm:$0xff]
        %v632 = vld [vmem:[#allocation8 + $0x90] sm:$0xff]
        %v633 = vld [vmem:[#allocation8 + $0x98] sm:$0xff]
        %v634 = vld [vmem:[#allocation8 + $0xa0] sm:$0xff]
        %v635 = vld [vmem:[#allocation8 + $0xa8] sm:$0xff]
        %v636 = vld [vmem:[#allocation8 + $0xb0] sm:$0xff]
        %v637 = vld [vmem:[#allocation8 + $0xb8] sm:$0xff]
        %v638 = vld [vmem:[#allocation8 + $0xc0] sm:$0xff]
        %v639 = vld [vmem:[#allocation8 + $0xc8] sm:$0xff]
        %v640 = vld [vmem:[#allocation8 + $0xd0] sm:$0xff]
        %v641 = vld [vmem:[#allocation8 + $0xd8] sm:$0xff]
        %v642 = vld [vmem:[#allocation8 + $0xe0] sm:$0xff]
        %v643 = vld [vmem:[#allocation8 + $0xe8] sm:$0xff]
        %v644 = vld [vmem:[#allocation8 + $0xf0] sm:$0xff]
        %v645 = vld [vmem:[#allocation8 + $0xf8] sm:$0xff]
        %v646 = vld [vmem:[#allocation8 + $0x100] sm:$0xff]
        %v647 = vld [vmem:[#allocation8 + $0x108] sm:$0xff]
        %v648 = vld [vmem:[#allocation8 + $0x110] sm:$0xff]
        %v649 = vld [vmem:[#allocation8 + $0x118] sm:$0xff]
        %v650 = vld [vmem:[#allocation8 + $0x120] sm:$0xff]
        %v651 = vld [vmem:[#allocation8 + $0x128] sm:$0xff]
        %v652 = vld [vmem:[#allocation8 + $0x130] sm:$0xff]
        %v653 = vld [vmem:[#allocation8 + $0x138] sm:$0xff]
        %v654 = vld [vmem:[#allocation8 + $0x140] sm:$0xff]
        %v655 = vld [vmem:[#allocation8 + $0x148] sm:$0xff]
        %v656 = vld [vmem:[#allocation8 + $0x150] sm:$0xff]
        %v657 = vld [vmem:[#allocation8 + $0x158] sm:$0xff]
        %v658 = vld [vmem:[#allocation8 + $0x160] sm:$0xff]
        %v659 = vld [vmem:[#allocation8 + $0x168] sm:$0xff]
        %v660 = vld [vmem:[#allocation8 + $0x170] sm:$0xff]
        %v661 = vld [vmem:[#allocation8 + $0x178] sm:$0xff]
        %v662 = vld [vmem:[#allocation8 + $0x180] sm:$0xff]
        %v663 = vld [vmem:[#allocation8 + $0x188] sm:$0xff]
        %v664 = vld [vmem:[#allocation8 + $0x190] sm:$0xff]
        %v665 = vld [vmem:[#allocation8 + $0x198] sm:$0xff]
        %v666 = vld [vmem:[#allocation8 + $0x1a0] sm:$0xff]
        %v667 = vld [vmem:[#allocation8 + $0x1a8] sm:$0xff]
        %v668 = vld [vmem:[#allocation8 + $0x1b0] sm:$0xff]
        %v669 = vld [vmem:[#allocation8 + $0x1b8] sm:$0xff]
        %v670 = vld [vmem:[#allocation8 + $0x1c0] sm:$0xff]
        %v671 = vld [vmem:[#allocation8 + $0x1c8] sm:$0xff]
        %v672 = vld [vmem:[#allocation8 + $0x1d0] sm:$0xff]
        %v673 = vld [vmem:[#allocation8 + $0x1d8] sm:$0xff]
        %v674 = vld [vmem:[#allocation8 + $0x1e0] sm:$0xff]
        %v675 = vld [vmem:[#allocation8 + $0x1e8] sm:$0xff]
        %v676 = vld [vmem:[#allocation8 + $0x1f0] sm:$0xff]
        %v677 = vld [vmem:[#allocation8 + $0x1f8] sm:$0xff]
        %v678 = vld [vmem:[#allocation8 + $0x200] sm:$0xff]
        %v679 = vld [vmem:[#allocation8 + $0x208] sm:$0xff]
        %v680 = vld [vmem:[#allocation8 + $0x210] sm:$0xff]
        %v681 = vld [vmem:[#allocation8 + $0x218] sm:$0xff]
        %v682 = vld [vmem:[#allocation8 + $0x220] sm:$0xff]
        %v683 = vld [vmem:[#allocation8 + $0x228] sm:$0xff]
        %v684 = vld [vmem:[#allocation8 + $0x230] sm:$0xff]
        %v685 = vld [vmem:[#allocation8 + $0x238] sm:$0xff]
        %v686 = vld [vmem:[#allocation8 + $0x240] sm:$0xff]
        %v687 = vld [vmem:[#allocation8 + $0x248] sm:$0xff]
        %v688 = vld [vmem:[#allocation8 + $0x250] sm:$0xff]
        %v689 = vld [vmem:[#allocation8 + $0x258] sm:$0xff]
        %v690 = vld [vmem:[#allocation8 + $0x260] sm:$0xff]
        %v691 = vld [vmem:[#allocation8 + $0x268] sm:$0xff]
        %v692 = vld [vmem:[#allocation8 + $0x270] sm:$0xff]
        %v693 = vld [vmem:[#allocation8 + $0x278] sm:$0xff]
        %v694 = vld [vmem:[#allocation8 + $0x280] sm:$0xff]
        %v695 = vld [vmem:[#allocation8 + $0x288] sm:$0xff]
        %v696 = vld [vmem:[#allocation8 + $0x290] sm:$0xff]
        %v697 = vld [vmem:[#allocation8 + $0x298] sm:$0xff]
        %v698 = vld [vmem:[#allocation8 + $0x2a0] sm:$0xff]
        %v699 = vld [vmem:[#allocation8 + $0x2a8] sm:$0xff]
        %v700 = vld [vmem:[#allocation8 + $0x2b0] sm:$0xff]
        %v701 = vld [vmem:[#allocation8 + $0x2b8] sm:$0xff]
        %v702 = vld [vmem:[#allocation8 + $0x2c0] sm:$0xff]
        %v703 = vld [vmem:[#allocation8 + $0x2c8] sm:$0xff]
        %v704 = vld [vmem:[#allocation8 + $0x2d0] sm:$0xff]
        %v705 = vld [vmem:[#allocation8 + $0x2d8] sm:$0xff]
        %v706 = vld [vmem:[#allocation8 + $0x2e0] sm:$0xff]
        %v707 = vld [vmem:[#allocation8 + $0x2e8] sm:$0xff]
        %v708 = vld [vmem:[#allocation8 + $0x2f0] sm:$0xff]
        %v709 = vld [vmem:[#allocation8 + $0x2f8] sm:$0xff]
        %v710 = vld [vmem:[#allocation8 + $0x300] sm:$0xff]
        %v711 = vld [vmem:[#allocation8 + $0x308] sm:$0xff]
        %v712 = vld [vmem:[#allocation8 + $0x310] sm:$0xff]
        %v713 = vld [vmem:[#allocation8 + $0x318] sm:$0xff]
        %v714 = vld [vmem:[#allocation8 + $0x320] sm:$0xff]
        %v715 = vld [vmem:[#allocation8 + $0x328] sm:$0xff]
        %v716 = vld [vmem:[#allocation8 + $0x330] sm:$0xff]
        %v717 = vld [vmem:[#allocation8 + $0x338] sm:$0xff]
        %v718 = vld [vmem:[#allocation8 + $0x340] sm:$0xff]
        %v719 = vld [vmem:[#allocation8 + $0x348] sm:$0xff]
        %v720 = vld [vmem:[#allocation8 + $0x350] sm:$0xff]
        %v721 = vld [vmem:[#allocation8 + $0x358] sm:$0xff]
        %v722 = vld [vmem:[#allocation8 + $0x360] sm:$0xff]
        %v723 = vld [vmem:[#allocation8 + $0x368] sm:$0xff]
        %v724 = vld [vmem:[#allocation8 + $0x370] sm:$0xff]
        %v725 = vld [vmem:[#allocation8 + $0x378] sm:$0xff]
        %v726 = vld [vmem:[#allocation8 + $0x380] sm:$0xff]
        %v727 = vld [vmem:[#allocation8 + $0x388] sm:$0xff]
        %v728 = vld [vmem:[#allocation8 + $0x390] sm:$0xff]
        %v729 = vld [vmem:[#allocation8 + $0x398] sm:$0xff]
        %v730 = vld [vmem:[#allocation8 + $0x3a0] sm:$0xff]
        %v731 = vld [vmem:[#allocation8 + $0x3a8] sm:$0xff]
        %v732 = vld [vmem:[#allocation8 + $0x3b0] sm:$0xff]
        %v733 = vld [vmem:[#allocation8 + $0x3b8] sm:$0xff]
        %v734 = vld [vmem:[#allocation8 + $0x3c0] sm:$0xff]
        %v735 = vld [vmem:[#allocation8 + $0x3c8] sm:$0xff]
        %v736 = vld [vmem:[#allocation8 + $0x3d0] sm:$0xff]
        %v737 = vld [vmem:[#allocation8 + $0x3d8] sm:$0xff]
        %v738 = vld [vmem:[#allocation8 + $0x3e0] sm:$0xff]
        %v739 = vld [vmem:[#allocation8 + $0x3e8] sm:$0xff]
        %v740 = vld [vmem:[#allocation8 + $0x3f0] sm:$0xff]
        %v741 = vld [vmem:[#allocation8 + $0x3f8] sm:$0xff]
        %742 = vmatprep.subr.mxu0 %v615
        %743 = vmatpush1.msra.mxu0 %v614
        %744 = vmatprep.subr.mxu0 %v623
        %745 = vmatpush1.msra.mxu0 %v622
        %746 = vmatprep.subr.mxu0 %v631
        %747 = vmatpush1.msra.mxu0 %v630
        %748 = vmatprep.subr.mxu0 %v639
        %749 = vmatpush1.msra.mxu0 %v638
        %750 = vmatprep.subr.mxu0 %v647
        %751 = vmatpush1.msra.mxu0 %v646
        %752 = vmatprep.subr.mxu0 %v655
        %753 = vmatpush1.msra.mxu0 %v654
        %754 = vmatprep.subr.mxu0 %v663
        %755 = vmatpush1.msra.mxu0 %v662
        %756 = vmatprep.subr.mxu0 %v671
        %757 = vmatpush1.msra.mxu0 %v670
        %758 = vmatprep.subr.mxu0 %v679
        %759 = vmatpush1.msra.mxu0 %v678
        %760 = vmatprep.subr.mxu0 %v687
        %761 = vmatpush1.msra.mxu0 %v686
        %762 = vmatprep.subr.mxu0 %v695
        %763 = vmatpush1.msra.mxu0 %v694
        %764 = vmatprep.subr.mxu0 %v703
        %765 = vmatpush1.msra.mxu0 %v702
        %766 = vmatprep.subr.mxu0 %v711
        %767 = vmatpush1.msra.mxu0 %v710
        %768 = vmatprep.subr.mxu0 %v719
        %769 = vmatpush1.msra.mxu0 %v718
        %770 = vmatprep.subr.mxu0 %v727
        %771 = vmatpush1.msra.mxu0 %v726
        %772 = vmatprep.subr.mxu0 %v735
        %773 = vmatpush1.msra.mxu0 %v734
        %774 = vmatprep.subr.mxu0 0.0
        %775 = vmatpush1.msra.mxu0 0.0
        %776 = vmatprep.subr.mxu0 0.0
        %777 = vmatpush1.msra.mxu0 0.0
        %778 = vmatprep.subr.mxu0 0.0
        %779 = vmatpush1.msra.mxu0 0.0
        %780 = vmatprep.subr.mxu0 0.0
        %781 = vmatpush1.msra.mxu0 0.0
        %782 = vmatprep.subr.mxu0 0.0
        %783 = vmatpush1.msra.mxu0 0.0
        %784 = vmatprep.subr.mxu0 0.0
        %785 = vmatpush1.msra.mxu0 0.0
        %786 = vmatprep.subr.mxu0 0.0
        %787 = vmatpush1.msra.mxu0 0.0
        %788 = vmatprep.subr.mxu0 0.0
        %789 = vmatpush1.msra.mxu0 0.0
        %790 = vmatprep.subr.mxu0 0.0
        %791 = vmatpush1.msra.mxu0 0.0
        %792 = vmatprep.subr.mxu0 0.0
        %793 = vmatpush1.msra.mxu0 0.0
        %794 = vmatprep.subr.mxu0 0.0
        %795 = vmatpush1.msra.mxu0 0.0
        %796 = vmatprep.subr.mxu0 0.0
        %797 = vmatpush1.msra.mxu0 0.0
        %798 = vmatprep.subr.mxu0 0.0
        %799 = vmatpush1.msra.mxu0 0.0
        %800 = vmatprep.subr.mxu0 0.0
        %801 = vmatpush1.msra.mxu0 0.0
        %802 = vmatprep.subr.mxu0 0.0
        %803 = vmatpush1.msra.mxu0 0.0
        %804 = vmatprep.subr.mxu0 0.0
        %805 = vmatpush1.msra.mxu0 0.0
        %806 = vmatprep.mubr.f32.mxu0 0.0
        %807 = vmatmul.mubr.f32.gmra.mrb[0].mxu0 %v613
        %v808 = vpop.f32.mrb[0].mxu0
        %v809 = vadd.f32 0.0, %v808
        %v810 = vpop.f32.mrb[0].mxu0
        %v811 = vadd.f32 0.0, %v810
        %812 = vdwg.mxu0
        %813 = vmatprep.subr.mxu0 %v617
        %814 = vmatpush1.msra.mxu0 %v616
        %815 = vmatprep.subr.mxu0 %v625
        %816 = vmatpush1.msra.mxu0 %v624
        %817 = vmatprep.subr.mxu0 %v633
        %818 = vmatpush1.msra.mxu0 %v632
        %819 = vmatprep.subr.mxu0 %v641
        %820 = vmatpush1.msra.mxu0 %v640
        %821 = vmatprep.subr.mxu0 %v649
        %822 = vmatpush1.msra.mxu0 %v648
        %823 = vmatprep.subr.mxu0 %v657
        %824 = vmatpush1.msra.mxu0 %v656
        %825 = vmatprep.subr.mxu0 %v665
        %826 = vmatpush1.msra.mxu0 %v664
        %827 = vmatprep.subr.mxu0 %v673
        %828 = vmatpush1.msra.mxu0 %v672
        %829 = vmatprep.subr.mxu0 %v681
        %830 = vmatpush1.msra.mxu0 %v680
        %831 = vmatprep.subr.mxu0 %v689
        %832 = vmatpush1.msra.mxu0 %v688
        %833 = vmatprep.subr.mxu0 %v697
        %834 = vmatpush1.msra.mxu0 %v696
        %835 = vmatprep.subr.mxu0 %v705
        %836 = vmatpush1.msra.mxu0 %v704
        %837 = vmatprep.subr.mxu0 %v713
        %838 = vmatpush1.msra.mxu0 %v712
        %839 = vmatprep.subr.mxu0 %v721
        %840 = vmatpush1.msra.mxu0 %v720
        %841 = vmatprep.subr.mxu0 %v729
        %842 = vmatpush1.msra.mxu0 %v728
        %843 = vmatprep.subr.mxu0 %v737
        %844 = vmatpush1.msra.mxu0 %v736
        %845 = vmatprep.subr.mxu0 0.0
        %846 = vmatpush1.msra.mxu0 0.0
        %847 = vmatprep.subr.mxu0 0.0
        %848 = vmatpush1.msra.mxu0 0.0
        %849 = vmatprep.subr.mxu0 0.0
        %850 = vmatpush1.msra.mxu0 0.0
        %851 = vmatprep.subr.mxu0 0.0
        %852 = vmatpush1.msra.mxu0 0.0
        %853 = vmatprep.subr.mxu0 0.0
        %854 = vmatpush1.msra.mxu0 0.0
        %855 = vmatprep.subr.mxu0 0.0
        %856 = vmatpush1.msra.mxu0 0.0
        %857 = vmatprep.subr.mxu0 0.0
        %858 = vmatpush1.msra.mxu0 0.0
        %859 = vmatprep.subr.mxu0 0.0
        %860 = vmatpush1.msra.mxu0 0.0
        %861 = vmatprep.subr.mxu0 0.0
        %862 = vmatpush1.msra.mxu0 0.0
        %863 = vmatprep.subr.mxu0 0.0
        %864 = vmatpush1.msra.mxu0 0.0
        %865 = vmatprep.subr.mxu0 0.0
        %866 = vmatpush1.msra.mxu0 0.0
        %867 = vmatprep.subr.mxu0 0.0
        %868 = vmatpush1.msra.mxu0 0.0
        %869 = vmatprep.subr.mxu0 0.0
        %870 = vmatpush1.msra.mxu0 0.0
        %871 = vmatprep.subr.mxu0 0.0
        %872 = vmatpush1.msra.mxu0 0.0
        %873 = vmatprep.subr.mxu0 0.0
        %874 = vmatpush1.msra.mxu0 0.0
        %875 = vmatprep.subr.mxu0 0.0
        %876 = vmatpush1.msra.mxu0 0.0
        %877 = vmatprep.mubr.f32.mxu0 0.0
        %878 = vmatmul.mubr.f32.gmra.mrb[0].mxu0 %v613
        %v879 = vpop.f32.mrb[0].mxu0
        %v880 = vadd.f32 0.0, %v879
        %v881 = vpop.f32.mrb[0].mxu0
        %v882 = vadd.f32 0.0, %v881
        %883 = vdwg.mxu0
        %884 = vmatprep.subr.mxu0 %v619
        %885 = vmatpush1.msra.mxu0 %v618
        %886 = vmatprep.subr.mxu0 %v627
        %887 = vmatpush1.msra.mxu0 %v626
        %888 = vmatprep.subr.mxu0 %v635
        %889 = vmatpush1.msra.mxu0 %v634
        %890 = vmatprep.subr.mxu0 %v643
        %891 = vmatpush1.msra.mxu0 %v642
        %892 = vmatprep.subr.mxu0 %v651
        %893 = vmatpush1.msra.mxu0 %v650
        %894 = vmatprep.subr.mxu0 %v659
        %895 = vmatpush1.msra.mxu0 %v658
        %896 = vmatprep.subr.mxu0 %v667
        %897 = vmatpush1.msra.mxu0 %v666
        %898 = vmatprep.subr.mxu0 %v675
        %899 = vmatpush1.msra.mxu0 %v674
        %900 = vmatprep.subr.mxu0 %v683
        %901 = vmatpush1.msra.mxu0 %v682
        %902 = vmatprep.subr.mxu0 %v691
        %903 = vmatpush1.msra.mxu0 %v690
        %904 = vmatprep.subr.mxu0 %v699
        %905 = vmatpush1.msra.mxu0 %v698
        %906 = vmatprep.subr.mxu0 %v707
        %907 = vmatpush1.msra.mxu0 %v706
        %908 = vmatprep.subr.mxu0 %v715
        %909 = vmatpush1.msra.mxu0 %v714
        %910 = vmatprep.subr.mxu0 %v723
        %911 = vmatpush1.msra.mxu0 %v722
        %912 = vmatprep.subr.mxu0 %v731
        %913 = vmatpush1.msra.mxu0 %v730
        %914 = vmatprep.subr.mxu0 %v739
        %915 = vmatpush1.msra.mxu0 %v738
        %916 = vmatprep.subr.mxu0 0.0
        %917 = vmatpush1.msra.mxu0 0.0
        %918 = vmatprep.subr.mxu0 0.0
        %919 = vmatpush1.msra.mxu0 0.0
        %920 = vmatprep.subr.mxu0 0.0
        %921 = vmatpush1.msra.mxu0 0.0
        %922 = vmatprep.subr.mxu0 0.0
        %923 = vmatpush1.msra.mxu0 0.0
        %924 = vmatprep.subr.mxu0 0.0
        %925 = vmatpush1.msra.mxu0 0.0
        %926 = vmatprep.subr.mxu0 0.0
        %927 = vmatpush1.msra.mxu0 0.0
        %928 = vmatprep.subr.mxu0 0.0
        %929 = vmatpush1.msra.mxu0 0.0
        %930 = vmatprep.subr.mxu0 0.0
        %931 = vmatpush1.msra.mxu0 0.0
        %932 = vmatprep.subr.mxu0 0.0
        %933 = vmatpush1.msra.mxu0 0.0
        %934 = vmatprep.subr.mxu0 0.0
        %935 = vmatpush1.msra.mxu0 0.0
        %936 = vmatprep.subr.mxu0 0.0
        %937 = vmatpush1.msra.mxu0 0.0
        %938 = vmatprep.subr.mxu0 0.0
        %939 = vmatpush1.msra.mxu0 0.0
        %940 = vmatprep.subr.mxu0 0.0
        %941 = vmatpush1.msra.mxu0 0.0
        %942 = vmatprep.subr.mxu0 0.0
        %943 = vmatpush1.msra.mxu0 0.0
        %944 = vmatprep.subr.mxu0 0.0
        %945 = vmatpush1.msra.mxu0 0.0
        %946 = vmatprep.subr.mxu0 0.0
        %947 = vmatpush1.msra.mxu0 0.0
        %948 = vmatprep.mubr.f32.mxu0 0.0
        %949 = vmatmul.mubr.f32.gmra.mrb[0].mxu0 %v613
        %v950 = vpop.f32.mrb[0].mxu0
        %v951 = vadd.f32 0.0, %v950
        %v952 = vpop.f32.mrb[0].mxu0
        %v953 = vadd.f32 0.0, %v952
        %954 = vdwg.mxu0
        %955 = vmatprep.subr.mxu0 %v621
        %956 = vmatpush1.msra.mxu0 %v620
        %957 = vmatprep.subr.mxu0 %v629
        %958 = vmatpush1.msra.mxu0 %v628
        %959 = vmatprep.subr.mxu0 %v637
        %960 = vmatpush1.msra.mxu0 %v636
        %961 = vmatprep.subr.mxu0 %v645
        %962 = vmatpush1.msra.mxu0 %v644
        %963 = vmatprep.subr.mxu0 %v653
        %964 = vmatpush1.msra.mxu0 %v652
        %965 = vmatprep.subr.mxu0 %v661
        %966 = vmatpush1.msra.mxu0 %v660
        %967 = vmatprep.subr.mxu0 %v669
        %968 = vmatpush1.msra.mxu0 %v668
        %969 = vmatprep.subr.mxu0 %v677
        %970 = vmatpush1.msra.mxu0 %v676
        %971 = vmatprep.subr.mxu0 %v685
        %972 = vmatpush1.msra.mxu0 %v684
        %973 = vmatprep.subr.mxu0 %v693
        %974 = vmatpush1.msra.mxu0 %v692
        %975 = vmatprep.subr.mxu0 %v701
        %976 = vmatpush1.msra.mxu0 %v700
        %977 = vmatprep.subr.mxu0 %v709
        %978 = vmatpush1.msra.mxu0 %v708
        %979 = vmatprep.subr.mxu0 %v717
        %980 = vmatpush1.msra.mxu0 %v716
        %981 = vmatprep.subr.mxu0 %v725
        %982 = vmatpush1.msra.mxu0 %v724
        %983 = vmatprep.subr.mxu0 %v733
        %984 = vmatpush1.msra.mxu0 %v732
        %985 = vmatprep.subr.mxu0 %v741
        %986 = vmatpush1.msra.mxu0 %v740
        %987 = vmatprep.subr.mxu0 0.0
        %988 = vmatpush1.msra.mxu0 0.0
        %989 = vmatprep.subr.mxu0 0.0
        %990 = vmatpush1.msra.mxu0 0.0
        %991 = vmatprep.subr.mxu0 0.0
        %992 = vmatpush1.msra.mxu0 0.0
        %993 = vmatprep.subr.mxu0 0.0
        %994 = vmatpush1.msra.mxu0 0.0
        %995 = vmatprep.subr.mxu0 0.0
        %996 = vmatpush1.msra.mxu0 0.0
        %997 = vmatprep.subr.mxu0 0.0
        %998 = vmatpush1.msra.mxu0 0.0
        %999 = vmatprep.subr.mxu0 0.0
        %1000 = vmatpush1.msra.mxu0 0.0
        %1001 = vmatprep.subr.mxu0 0.0
        %1002 = vmatpush1.msra.mxu0 0.0
        %1003 = vmatprep.subr.mxu0 0.0
        %1004 = vmatpush1.msra.mxu0 0.0
        %1005 = vmatprep.subr.mxu0 0.0
        %1006 = vmatpush1.msra.mxu0 0.0
        %1007 = vmatprep.subr.mxu0 0.0
        %1008 = vmatpush1.msra.mxu0 0.0
        %1009 = vmatprep.subr.mxu0 0.0
        %1010 = vmatpush1.msra.mxu0 0.0
        %1011 = vmatprep.subr.mxu0 0.0
        %1012 = vmatpush1.msra.mxu0 0.0
        %1013 = vmatprep.subr.mxu0 0.0
        %1014 = vmatpush1.msra.mxu0 0.0
        %1015 = vmatprep.subr.mxu0 0.0
        %1016 = vmatpush1.msra.mxu0 0.0
        %1017 = vmatprep.subr.mxu0 0.0
        %1018 = vmatpush1.msra.mxu0 0.0
        %1019 = vmatprep.mubr.f32.mxu0 0.0
        %1020 = vmatmul.mubr.f32.gmra.mrb[0].mxu0 %v613
        %v1021 = vpop.f32.mrb[0].mxu0
        %v1022 = vadd.f32 0.0, %v1021
        %v1023 = vpop.f32.mrb[0].mxu0
        %v1024 = vadd.f32 0.0, %v1023
        %1025 = vdwg.mxu0
        %v1026 = vld [vmem:[#allocation10] sm:$0xff]
        %v1027 = vld [vmem:[#allocation10 + $0x8] sm:$0xff]
        %v1028 = vld [vmem:[#allocation10 + $0x10] sm:$0xff]
        %v1029 = vld [vmem:[#allocation10 + $0x18] sm:$0xff]
        %v1030 = vld [vmem:[#allocation10 + $0x20] sm:$0xff]
        %v1031 = vld [vmem:[#allocation10 + $0x28] sm:$0xff]
        %v1032 = vld [vmem:[#allocation10 + $0x30] sm:$0xff]
        %v1033 = vld [vmem:[#allocation10 + $0x38] sm:$0xff]
        %v1034 = vld [vmem:[#allocation10 + $0x40] sm:$0xff]
        %v1035 = vld [vmem:[#allocation10 + $0x48] sm:$0xff]
        %v1036 = vld [vmem:[#allocation10 + $0x50] sm:$0xff]
        %v1037 = vld [vmem:[#allocation10 + $0x58] sm:$0xff]
        %v1038 = vld [vmem:[#allocation10 + $0x60] sm:$0xff]
        %v1039 = vld [vmem:[#allocation10 + $0x68] sm:$0xff]
        %v1040 = vld [vmem:[#allocation10 + $0x70] sm:$0xff]
        %v1041 = vld [vmem:[#allocation10 + $0x78] sm:$0xff]
        %v1042 = vld [vmem:[#allocation10 + $0x80] sm:$0xff]
        %v1043 = vld [vmem:[#allocation10 + $0x88] sm:$0xff]
        %v1044 = vld [vmem:[#allocation10 + $0x90] sm:$0xff]
        %v1045 = vld [vmem:[#allocation10 + $0x98] sm:$0xff]
        %v1046 = vld [vmem:[#allocation10 + $0xa0] sm:$0xff]
        %v1047 = vld [vmem:[#allocation10 + $0xa8] sm:$0xff]
        %v1048 = vld [vmem:[#allocation10 + $0xb0] sm:$0xff]
        %v1049 = vld [vmem:[#allocation10 + $0xb8] sm:$0xff]
        %v1050 = vld [vmem:[#allocation10 + $0xc0] sm:$0xff]
        %v1051 = vld [vmem:[#allocation10 + $0xc8] sm:$0xff]
        %v1052 = vld [vmem:[#allocation10 + $0xd0] sm:$0xff]
        %v1053 = vld [vmem:[#allocation10 + $0xd8] sm:$0xff]
        %v1054 = vld [vmem:[#allocation10 + $0xe0] sm:$0xff]
        %v1055 = vld [vmem:[#allocation10 + $0xe8] sm:$0xff]
        %v1056 = vld [vmem:[#allocation10 + $0xf0] sm:$0xff]
        %v1057 = vld [vmem:[#allocation10 + $0xf8] sm:$0xff]
        %v1058 = vld [vmem:[#allocation10 + $0x100] sm:$0xff]
        %v1059 = vld [vmem:[#allocation10 + $0x108] sm:$0xff]
        %v1060 = vld [vmem:[#allocation10 + $0x110] sm:$0xff]
        %v1061 = vld [vmem:[#allocation10 + $0x118] sm:$0xff]
        %v1062 = vld [vmem:[#allocation10 + $0x120] sm:$0xff]
        %v1063 = vld [vmem:[#allocation10 + $0x128] sm:$0xff]
        %v1064 = vld [vmem:[#allocation10 + $0x130] sm:$0xff]
        %v1065 = vld [vmem:[#allocation10 + $0x138] sm:$0xff]
        %v1066 = vld [vmem:[#allocation10 + $0x140] sm:$0xff]
        %v1067 = vld [vmem:[#allocation10 + $0x148] sm:$0xff]
        %v1068 = vld [vmem:[#allocation10 + $0x150] sm:$0xff]
        %v1069 = vld [vmem:[#allocation10 + $0x158] sm:$0xff]
        %v1070 = vld [vmem:[#allocation10 + $0x160] sm:$0xff]
        %v1071 = vld [vmem:[#allocation10 + $0x168] sm:$0xff]
        %v1072 = vld [vmem:[#allocation10 + $0x170] sm:$0xff]
        %v1073 = vld [vmem:[#allocation10 + $0x178] sm:$0xff]
        %v1074 = vld [vmem:[#allocation10 + $0x180] sm:$0xff]
        %v1075 = vld [vmem:[#allocation10 + $0x188] sm:$0xff]
        %v1076 = vld [vmem:[#allocation10 + $0x190] sm:$0xff]
        %v1077 = vld [vmem:[#allocation10 + $0x198] sm:$0xff]
        %v1078 = vld [vmem:[#allocation10 + $0x1a0] sm:$0xff]
        %v1079 = vld [vmem:[#allocation10 + $0x1a8] sm:$0xff]
        %v1080 = vld [vmem:[#allocation10 + $0x1b0] sm:$0xff]
        %v1081 = vld [vmem:[#allocation10 + $0x1b8] sm:$0xff]
        %v1082 = vld [vmem:[#allocation10 + $0x1c0] sm:$0xff]
        %v1083 = vld [vmem:[#allocation10 + $0x1c8] sm:$0xff]
        %v1084 = vld [vmem:[#allocation10 + $0x1d0] sm:$0xff]
        %v1085 = vld [vmem:[#allocation10 + $0x1d8] sm:$0xff]
        %v1086 = vld [vmem:[#allocation10 + $0x1e0] sm:$0xff]
        %v1087 = vld [vmem:[#allocation10 + $0x1e8] sm:$0xff]
        %v1088 = vld [vmem:[#allocation10 + $0x1f0] sm:$0xff]
        %v1089 = vld [vmem:[#allocation10 + $0x1f8] sm:$0xff]
        %vm1090 = vcmask 523264
        %v1092 = vsel %vm1090, %v609, 0
        %v1095 = vsel %vm1090, %v809, 0
        %1097 = vmatprep.subr.mxu0 0.0
        %1098 = vmatpush1.xpose.msra.mxu0 %v1095
        %1099 = vmatprep.subr.mxu0 0.0
        %1100 = vmatpush1.xpose.msra.mxu0 0.0
        %1101 = vmatprep.subr.mxu0 0.0
        %1102 = vmatpush1.xpose.msra.mxu0 0.0
        %1103 = vmatprep.subr.mxu0 0.0
        %1104 = vmatpush1.xpose.msra.mxu0 0.0
        %1105 = vmatprep.subr.mxu0 0.0
        %1106 = vmatpush1.xpose.msra.mxu0 0.0
        %1107 = vmatprep.subr.mxu0 0.0
        %1108 = vmatpush1.xpose.msra.mxu0 0.0
        %1109 = vmatprep.subr.mxu0 0.0
        %1110 = vmatpush1.xpose.msra.mxu0 0.0
        %1111 = vmatprep.subr.mxu0 0.0
        %1112 = vmatpush1.xpose.msra.mxu0 0.0
        %1113 = vmatprep.subr.mxu0 0.0
        %1114 = vmatpush1.xpose.msra.mxu0 0.0
        %1115 = vmatprep.subr.mxu0 0.0
        %1116 = vmatpush1.xpose.msra.mxu0 0.0
        %1117 = vmatprep.subr.mxu0 0.0
        %1118 = vmatpush1.xpose.msra.mxu0 0.0
        %1119 = vmatprep.subr.mxu0 0.0
        %1120 = vmatpush1.xpose.msra.mxu0 0.0
        %1121 = vmatprep.subr.mxu0 0.0
        %1122 = vmatpush1.xpose.msra.mxu0 0.0
        %1123 = vmatprep.subr.mxu0 0.0
        %1124 = vmatpush1.xpose.msra.mxu0 0.0
        %1125 = vmatprep.subr.mxu0 0.0
        %1126 = vmatpush1.xpose.msra.mxu0 0.0
        %1127 = vmatprep.subr.mxu0 0.0
        %1128 = vmatpush1.xpose.msra.mxu0 0.0
        %1129 = vmatprep.subr.mxu0 0.0
        %1130 = vmatpush1.xpose.msra.mxu0 0.0
        %1131 = vmatprep.subr.mxu0 0.0
        %1132 = vmatpush1.xpose.msra.mxu0 0.0
        %1133 = vmatprep.subr.mxu0 0.0
        %1134 = vmatpush1.xpose.msra.mxu0 0.0
        %1135 = vmatprep.subr.mxu0 0.0
        %1136 = vmatpush1.xpose.msra.mxu0 0.0
        %1137 = vmatprep.subr.mxu0 0.0
        %1138 = vmatpush1.xpose.msra.mxu0 0.0
        %1139 = vmatprep.subr.mxu0 0.0
        %1140 = vmatpush1.xpose.msra.mxu0 0.0
        %1141 = vmatprep.subr.mxu0 0.0
        %1142 = vmatpush1.xpose.msra.mxu0 0.0
        %1143 = vmatprep.subr.mxu0 0.0
        %1144 = vmatpush1.xpose.msra.mxu0 0.0
        %1145 = vmatprep.subr.mxu0 0.0
        %1146 = vmatpush1.xpose.msra.mxu0 0.0
        %1147 = vmatprep.subr.mxu0 0.0
        %1148 = vmatpush1.xpose.msra.mxu0 0.0
        %1149 = vmatprep.subr.mxu0 0.0
        %1150 = vmatpush1.xpose.msra.mxu0 0.0
        %1151 = vmatprep.subr.mxu0 0.0
        %1152 = vmatpush1.xpose.msra.mxu0 0.0
        %1153 = vmatprep.subr.mxu0 0.0
        %1154 = vmatpush1.xpose.msra.mxu0 0.0
        %1155 = vmatprep.subr.mxu0 0.0
        %1156 = vmatpush1.xpose.msra.mxu0 0.0
        %1157 = vmatprep.subr.mxu0 0.0
        %1158 = vmatpush1.xpose.msra.mxu0 0.0
        %1159 = vmatprep.subr.mxu0 0.0
        %1160 = vmatpush1.xpose.msra.mxu0 0.0
        %1161 = vmatprep.mubr.f32.mxu0 0.0
        %1162 = vmatmul.mubr.f32.gmra.mrb[0].mxu0 %v1092
        %v1163 = vpop.f32.mrb[0].mxu0
        %v1164 = vadd.f32 0.0, %v1163
        %v1165 = vpop.f32.mrb[0].mxu0
        %1166 = vdwg.mxu0
        %vm1167 = vcmask 64512
        %v1168 = vsel %vm1167, %v1164, -inf
        %1169 = vmax.xlane.f32.xlu0 %v1168
        %v1170 = vpop.xlane.xlu0 %1169
        %v1171 = vsub.f32 %v1164, %v1170
        %v1172 = vmul.f32 %v1171, 1.442695
        %v1173 = vpow.pop %v1172
        %v1174 = vsel %vm1167, %v1173, 0.0
        %1175 = vadd.xlane.f32.xlu0 %v1174
        %v1176 = vpop.xlane.xlu0 %1175
        %v1178 = vsel %vm1167, %v1173, 0
        %1180 = vmatprep.subr.mxu0 0.0
        %1181 = vmatpush1.msra.mxu0 %v951
        %1182 = vmatprep.subr.mxu0 0.0
        %1183 = vmatpush1.msra.mxu0 0.0
        %1184 = vmatprep.subr.mxu0 0.0
        %1185 = vmatpush1.msra.mxu0 0.0
        %1186 = vmatprep.subr.mxu0 0.0
        %1187 = vmatpush1.msra.mxu0 0.0
        %1188 = vmatprep.subr.mxu0 0.0
        %1189 = vmatpush1.msra.mxu0 0.0
        %1190 = vmatprep.subr.mxu0 0.0
        %1191 = vmatpush1.msra.mxu0 0.0
        %1192 = vmatprep.subr.mxu0 0.0
        %1193 = vmatpush1.msra.mxu0 0.0
        %1194 = vmatprep.subr.mxu0 0.0
        %1195 = vmatpush1.msra.mxu0 0.0
        %1196 = vmatprep.subr.mxu0 0.0
        %1197 = vmatpush1.msra.mxu0 0.0
        %1198 = vmatprep.subr.mxu0 0.0
        %1199 = vmatpush1.msra.mxu0 0.0
        %1200 = vmatprep.subr.mxu0 0.0
        %1201 = vmatpush1.msra.mxu0 0.0
        %1202 = vmatprep.subr.mxu0 0.0
        %1203 = vmatpush1.msra.mxu0 0.0
        %1204 = vmatprep.subr.mxu0 0.0
        %1205 = vmatpush1.msra.mxu0 0.0
        %1206 = vmatprep.subr.mxu0 0.0
        %1207 = vmatpush1.msra.mxu0 0.0
        %1208 = vmatprep.subr.mxu0 0.0
        %1209 = vmatpush1.msra.mxu0 0.0
        %1210 = vmatprep.subr.mxu0 0.0
        %1211 = vmatpush1.msra.mxu0 0.0
        %1212 = vmatprep.subr.mxu0 0.0
        %1213 = vmatpush1.msra.mxu0 0.0
        %1214 = vmatprep.subr.mxu0 0.0
        %1215 = vmatpush1.msra.mxu0 0.0
        %1216 = vmatprep.subr.mxu0 0.0
        %1217 = vmatpush1.msra.mxu0 0.0
        %1218 = vmatprep.subr.mxu0 0.0
        %1219 = vmatpush1.msra.mxu0 0.0
        %1220 = vmatprep.subr.mxu0 0.0
        %1221 = vmatpush1.msra.mxu0 0.0
        %1222 = vmatprep.subr.mxu0 0.0
        %1223 = vmatpush1.msra.mxu0 0.0
        %1224 = vmatprep.subr.mxu0 0.0
        %1225 = vmatpush1.msra.mxu0 0.0
        %1226 = vmatprep.subr.mxu0 0.0
        %1227 = vmatpush1.msra.mxu0 0.0
        %1228 = vmatprep.subr.mxu0 0.0
        %1229 = vmatpush1.msra.mxu0 0.0
        %1230 = vmatprep.subr.mxu0 0.0
        %1231 = vmatpush1.msra.mxu0 0.0
        %1232 = vmatprep.subr.mxu0 0.0
        %1233 = vmatpush1.msra.mxu0 0.0
        %1234 = vmatprep.subr.mxu0 0.0
        %1235 = vmatpush1.msra.mxu0 0.0
        %1236 = vmatprep.subr.mxu0 0.0
        %1237 = vmatpush1.msra.mxu0 0.0
        %1238 = vmatprep.subr.mxu0 0.0
        %1239 = vmatpush1.msra.mxu0 0.0
        %1240 = vmatprep.subr.mxu0 0.0
        %1241 = vmatpush1.msra.mxu0 0.0
        %1242 = vmatprep.subr.mxu0 0.0
        %1243 = vmatpush1.msra.mxu0 0.0
        %1244 = vmatprep.mubr.f32.mxu0 0.0
        %1245 = vmatmul.mubr.f32.gmra.mrb[0].mxu0 %v1178
        %v1246 = vpop.f32.mrb[0].mxu0
        %v1247 = vadd.f32 0.0, %v1246
        %v1248 = vpop.f32.mrb[0].mxu0
        %1249 = vdwg.mxu0
        %v1250 = vrcp.pop %v1176
        %v1251 = vmul.f32 %v1247, %v1250
        %1252 = vrot.lane.b32.xlu0 %v609, 64
        %v1253 = vpop.permute.xlu0 %1252
        %1254 = vrot.lane.b32.xlu0 %v809, 64
        %v1255 = vpop.permute.xlu0 %1254
        %v1256 = vsel %vm1090, %v1253, 0
        %v1258 = vsel %vm1090, %v1255, 0
        %1260 = vmatprep.subr.mxu0 0.0
        %1261 = vmatpush1.xpose.msra.mxu0 %v1258
        %1262 = vmatprep.subr.mxu0 0.0
        %1263 = vmatpush1.xpose.msra.mxu0 0.0
        %1264 = vmatprep.subr.mxu0 0.0
        %1265 = vmatpush1.xpose.msra.mxu0 0.0
        %1266 = vmatprep.subr.mxu0 0.0
        %1267 = vmatpush1.xpose.msra.mxu0 0.0
        %1268 = vmatprep.subr.mxu0 0.0
        %1269 = vmatpush1.xpose.msra.mxu0 0.0
        %1270 = vmatprep.subr.mxu0 0.0
        %1271 = vmatpush1.xpose.msra.mxu0 0.0
        %1272 = vmatprep.subr.mxu0 0.0
        %1273 = vmatpush1.xpose.msra.mxu0 0.0
        %1274 = vmatprep.subr.mxu0 0.0
        %1275 = vmatpush1.xpose.msra.mxu0 0.0
        %1276 = vmatprep.subr.mxu0 0.0
        %1277 = vmatpush1.xpose.msra.mxu0 0.0
        %1278 = vmatprep.subr.mxu0 0.0
        %1279 = vmatpush1.xpose.msra.mxu0 0.0
        %1280 = vmatprep.subr.mxu0 0.0
        %1281 = vmatpush1.xpose.msra.mxu0 0.0
        %1282 = vmatprep.subr.mxu0 0.0
        %1283 = vmatpush1.xpose.msra.mxu0 0.0
        %1284 = vmatprep.subr.mxu0 0.0
        %1285 = vmatpush1.xpose.msra.mxu0 0.0
        %1286 = vmatprep.subr.mxu0 0.0
        %1287 = vmatpush1.xpose.msra.mxu0 0.0
        %1288 = vmatprep.subr.mxu0 0.0
        %1289 = vmatpush1.xpose.msra.mxu0 0.0
        %1290 = vmatprep.subr.mxu0 0.0
        %1291 = vmatpush1.xpose.msra.mxu0 0.0
        %1292 = vmatprep.subr.mxu0 0.0
        %1293 = vmatpush1.xpose.msra.mxu0 0.0
        %1294 = vmatprep.subr.mxu0 0.0
        %1295 = vmatpush1.xpose.msra.mxu0 0.0
        %1296 = vmatprep.subr.mxu0 0.0
        %1297 = vmatpush1.xpose.msra.mxu0 0.0
        %1298 = vmatprep.subr.mxu0 0.0
        %1299 = vmatpush1.xpose.msra.mxu0 0.0
        %1300 = vmatprep.subr.mxu0 0.0
        %1301 = vmatpush1.xpose.msra.mxu0 0.0
        %1302 = vmatprep.subr.mxu0 0.0
        %1303 = vmatpush1.xpose.msra.mxu0 0.0
        %1304 = vmatprep.subr.mxu0 0.0
        %1305 = vmatpush1.xpose.msra.mxu0 0.0
        %1306 = vmatprep.subr.mxu0 0.0
        %1307 = vmatpush1.xpose.msra.mxu0 0.0
        %1308 = vmatprep.subr.mxu0 0.0
        %1309 = vmatpush1.xpose.msra.mxu0 0.0
        %1310 = vmatprep.subr.mxu0 0.0
        %1311 = vmatpush1.xpose.msra.mxu0 0.0
        %1312 = vmatprep.subr.mxu0 0.0
        %1313 = vmatpush1.xpose.msra.mxu0 0.0
        %1314 = vmatprep.subr.mxu0 0.0
        %1315 = vmatpush1.xpose.msra.mxu0 0.0
        %1316 = vmatprep.subr.mxu0 0.0
        %1317 = vmatpush1.xpose.msra.mxu0 0.0
        %1318 = vmatprep.subr.mxu0 0.0
        %1319 = vmatpush1.xpose.msra.mxu0 0.0
        %1320 = vmatprep.subr.mxu0 0.0
        %1321 = vmatpush1.xpose.msra.mxu0 0.0
        %1322 = vmatprep.subr.mxu0 0.0
        %1323 = vmatpush1.xpose.msra.mxu0 0.0
        %1324 = vmatprep.mubr.f32.mxu0 0.0
        %1325 = vmatmul.mubr.f32.gmra.mrb[0].mxu0 %v1256
        %v1326 = vpop.f32.mrb[0].mxu0
        %v1327 = vadd.f32 0.0, %v1326
        %v1328 = vpop.f32.mrb[0].mxu0
        %1329 = vdwg.mxu0
        %v1330 = vsel %vm1167, %v1327, -inf
        %1331 = vmax.xlane.f32.xlu0 %v1330
        %v1332 = vpop.xlane.xlu0 %1331
        %v1333 = vsub.f32 %v1327, %v1332
        %v1334 = vmul.f32 %v1333, 1.442695
        %v1335 = vpow.pop %v1334
        %v1336 = vsel %vm1167, %v1335, 0.0
        %1337 = vadd.xlane.f32.xlu0 %v1336
        %v1338 = vpop.xlane.xlu0 %1337
        %1340 = vrot.lane.b32.xlu0 %v951, 64
        %v1341 = vpop.permute.xlu0 %1340
        %v1344 = vsel %vm1167, %v1335, 0
        %1346 = vmatprep.subr.mxu0 0.0
        %1347 = vmatpush1.msra.mxu0 %v1341
        %1348 = vmatprep.subr.mxu0 0.0
        %1349 = vmatpush1.msra.mxu0 0.0
        %1350 = vmatprep.subr.mxu0 0.0
        %1351 = vmatpush1.msra.mxu0 0.0
        %1352 = vmatprep.subr.mxu0 0.0
        %1353 = vmatpush1.msra.mxu0 0.0
        %1354 = vmatprep.subr.mxu0 0.0
        %1355 = vmatpush1.msra.mxu0 0.0
        %1356 = vmatprep.subr.mxu0 0.0
        %1357 = vmatpush1.msra.mxu0 0.0
        %1358 = vmatprep.subr.mxu0 0.0
        %1359 = vmatpush1.msra.mxu0 0.0
        %1360 = vmatprep.subr.mxu0 0.0
        %1361 = vmatpush1.msra.mxu0 0.0
        %1362 = vmatprep.subr.mxu0 0.0
        %1363 = vmatpush1.msra.mxu0 0.0
        %1364 = vmatprep.subr.mxu0 0.0
        %1365 = vmatpush1.msra.mxu0 0.0
        %1366 = vmatprep.subr.mxu0 0.0
        %1367 = vmatpush1.msra.mxu0 0.0
        %1368 = vmatprep.subr.mxu0 0.0
        %1369 = vmatpush1.msra.mxu0 0.0
        %1370 = vmatprep.subr.mxu0 0.0
        %1371 = vmatpush1.msra.mxu0 0.0
        %1372 = vmatprep.subr.mxu0 0.0
        %1373 = vmatpush1.msra.mxu0 0.0
        %1374 = vmatprep.subr.mxu0 0.0
        %1375 = vmatpush1.msra.mxu0 0.0
        %1376 = vmatprep.subr.mxu0 0.0
        %1377 = vmatpush1.msra.mxu0 0.0
        %1378 = vmatprep.subr.mxu0 0.0
        %1379 = vmatpush1.msra.mxu0 0.0
        %1380 = vmatprep.subr.mxu0 0.0
        %1381 = vmatpush1.msra.mxu0 0.0
        %1382 = vmatprep.subr.mxu0 0.0
        %1383 = vmatpush1.msra.mxu0 0.0
        %1384 = vmatprep.subr.mxu0 0.0
        %1385 = vmatpush1.msra.mxu0 0.0
        %1386 = vmatprep.subr.mxu0 0.0
        %1387 = vmatpush1.msra.mxu0 0.0
        %1388 = vmatprep.subr.mxu0 0.0
        %1389 = vmatpush1.msra.mxu0 0.0
        %1390 = vmatprep.subr.mxu0 0.0
        %1391 = vmatpush1.msra.mxu0 0.0
        %1392 = vmatprep.subr.mxu0 0.0
        %1393 = vmatpush1.msra.mxu0 0.0
        %1394 = vmatprep.subr.mxu0 0.0
        %1395 = vmatpush1.msra.mxu0 0.0
        %1396 = vmatprep.subr.mxu0 0.0
        %1397 = vmatpush1.msra.mxu0 0.0
        %1398 = vmatprep.subr.mxu0 0.0
        %1399 = vmatpush1.msra.mxu0 0.0
        %1400 = vmatprep.subr.mxu0 0.0
        %1401 = vmatpush1.msra.mxu0 0.0
        %1402 = vmatprep.subr.mxu0 0.0
        %1403 = vmatpush1.msra.mxu0 0.0
        %1404 = vmatprep.subr.mxu0 0.0
        %1405 = vmatpush1.msra.mxu0 0.0
        %1406 = vmatprep.subr.mxu0 0.0
        %1407 = vmatpush1.msra.mxu0 0.0
        %1408 = vmatprep.subr.mxu0 0.0
        %1409 = vmatpush1.msra.mxu0 0.0
        %1410 = vmatprep.mubr.f32.mxu0 0.0
        %1411 = vmatmul.mubr.f32.gmra.mrb[0].mxu0 %v1344
        %v1412 = vpop.f32.mrb[0].mxu0
        %v1413 = vadd.f32 0.0, %v1412
        %v1414 = vpop.f32.mrb[0].mxu0
        %1415 = vdwg.mxu0
        %v1416 = vrcp.pop %v1338
        %v1417 = vmul.f32 %v1413, %v1416
        %v1419 = vsel %vm1090, %v1417, 0
        %1421 = vmatprep.subr.mxu0 0.0
        %1422 = vmatpush1.msra.mxu0 %v1034
        %1423 = vmatprep.subr.mxu0 0.0
        %1424 = vmatpush1.msra.mxu0 %v1035
        %1425 = vmatprep.subr.mxu0 0.0
        %1426 = vmatpush1.msra.mxu0 %v1036
        %1427 = vmatprep.subr.mxu0 0.0
        %1428 = vmatpush1.msra.mxu0 %v1037
        %1429 = vmatprep.subr.mxu0 0.0
        %1430 = vmatpush1.msra.mxu0 %v1038
        %1431 = vmatprep.subr.mxu0 0.0
        %1432 = vmatpush1.msra.mxu0 %v1039
        %1433 = vmatprep.subr.mxu0 0.0
        %1434 = vmatpush1.msra.mxu0 %v1040
        %1435 = vmatprep.subr.mxu0 0.0
        %1436 = vmatpush1.msra.mxu0 %v1041
        %1437 = vmatprep.subr.mxu0 0.0
        %1438 = vmatpush1.msra.mxu0 0.0
        %1439 = vmatprep.subr.mxu0 0.0
        %1440 = vmatpush1.msra.mxu0 0.0
        %1441 = vmatprep.subr.mxu0 0.0
        %1442 = vmatpush1.msra.mxu0 0.0
        %1443 = vmatprep.subr.mxu0 0.0
        %1444 = vmatpush1.msra.mxu0 0.0
        %1445 = vmatprep.subr.mxu0 0.0
        %1446 = vmatpush1.msra.mxu0 0.0
        %1447 = vmatprep.subr.mxu0 0.0
        %1448 = vmatpush1.msra.mxu0 0.0
        %1449 = vmatprep.subr.mxu0 0.0
        %1450 = vmatpush1.msra.mxu0 0.0
        %1451 = vmatprep.subr.mxu0 0.0
        %1452 = vmatpush1.msra.mxu0 0.0
        %1453 = vmatprep.subr.mxu0 0.0
        %1454 = vmatpush1.msra.mxu0 0.0
        %1455 = vmatprep.subr.mxu0 0.0
        %1456 = vmatpush1.msra.mxu0 0.0
        %1457 = vmatprep.subr.mxu0 0.0
        %1458 = vmatpush1.msra.mxu0 0.0
        %1459 = vmatprep.subr.mxu0 0.0
        %1460 = vmatpush1.msra.mxu0 0.0
        %1461 = vmatprep.subr.mxu0 0.0
        %1462 = vmatpush1.msra.mxu0 0.0
        %1463 = vmatprep.subr.mxu0 0.0
        %1464 = vmatpush1.msra.mxu0 0.0
        %1465 = vmatprep.subr.mxu0 0.0
        %1466 = vmatpush1.msra.mxu0 0.0
        %1467 = vmatprep.subr.mxu0 0.0
        %1468 = vmatpush1.msra.mxu0 0.0
        %1469 = vmatprep.subr.mxu0 0.0
        %1470 = vmatpush1.msra.mxu0 0.0
        %1471 = vmatprep.subr.mxu0 0.0
        %1472 = vmatpush1.msra.mxu0 0.0
        %1473 = vmatprep.subr.mxu0 0.0
        %1474 = vmatpush1.msra.mxu0 0.0
        %1475 = vmatprep.subr.mxu0 0.0
        %1476 = vmatpush1.msra.mxu0 0.0
        %1477 = vmatprep.subr.mxu0 0.0
        %1478 = vmatpush1.msra.mxu0 0.0
        %1479 = vmatprep.subr.mxu0 0.0
        %1480 = vmatpush1.msra.mxu0 0.0
        %1481 = vmatprep.subr.mxu0 0.0
        %1482 = vmatpush1.msra.mxu0 0.0
        %1483 = vmatprep.subr.mxu0 0.0
        %1484 = vmatpush1.msra.mxu0 0.0
        %1485 = vmatprep.mubr.f32.mxu0 0.0
        %1486 = vmatmul.mubr.f32.gmra.mrb[0].mxu0 %v1419
        %v1487 = vpop.f32.mrb[0].mxu0
        %v1488 = vadd.f32 0.0, %v1487
        %v1489 = vpop.f32.mrb[0].mxu0
        %1490 = vdwg.mxu0
        %v1492 = vsel %vm1090, %v1251, 0
        %1494 = vmatprep.subr.mxu0 0.0
        %1495 = vmatpush1.msra.mxu0 %v1026
        %1496 = vmatprep.subr.mxu0 0.0
        %1497 = vmatpush1.msra.mxu0 %v1027
        %1498 = vmatprep.subr.mxu0 0.0
        %1499 = vmatpush1.msra.mxu0 %v1028
        %1500 = vmatprep.subr.mxu0 0.0
        %1501 = vmatpush1.msra.mxu0 %v1029
        %1502 = vmatprep.subr.mxu0 0.0
        %1503 = vmatpush1.msra.mxu0 %v1030
        %1504 = vmatprep.subr.mxu0 0.0
        %1505 = vmatpush1.msra.mxu0 %v1031
        %1506 = vmatprep.subr.mxu0 0.0
        %1507 = vmatpush1.msra.mxu0 %v1032
        %1508 = vmatprep.subr.mxu0 0.0
        %1509 = vmatpush1.msra.mxu0 %v1033
        %1510 = vmatprep.subr.mxu0 0.0
        %1511 = vmatpush1.msra.mxu0 0.0
        %1512 = vmatprep.subr.mxu0 0.0
        %1513 = vmatpush1.msra.mxu0 0.0
        %1514 = vmatprep.subr.mxu0 0.0
        %1515 = vmatpush1.msra.mxu0 0.0
        %1516 = vmatprep.subr.mxu0 0.0
        %1517 = vmatpush1.msra.mxu0 0.0
        %1518 = vmatprep.subr.mxu0 0.0
        %1519 = vmatpush1.msra.mxu0 0.0
        %1520 = vmatprep.subr.mxu0 0.0
        %1521 = vmatpush1.msra.mxu0 0.0
        %1522 = vmatprep.subr.mxu0 0.0
        %1523 = vmatpush1.msra.mxu0 0.0
        %1524 = vmatprep.subr.mxu0 0.0
        %1525 = vmatpush1.msra.mxu0 0.0
        %1526 = vmatprep.subr.mxu0 0.0
        %1527 = vmatpush1.msra.mxu0 0.0
        %1528 = vmatprep.subr.mxu0 0.0
        %1529 = vmatpush1.msra.mxu0 0.0
        %1530 = vmatprep.subr.mxu0 0.0
        %1531 = vmatpush1.msra.mxu0 0.0
        %1532 = vmatprep.subr.mxu0 0.0
        %1533 = vmatpush1.msra.mxu0 0.0
        %1534 = vmatprep.subr.mxu0 0.0
        %1535 = vmatpush1.msra.mxu0 0.0
        %1536 = vmatprep.subr.mxu0 0.0
        %1537 = vmatpush1.msra.mxu0 0.0
        %1538 = vmatprep.subr.mxu0 0.0
        %1539 = vmatpush1.msra.mxu0 0.0
        %1540 = vmatprep.subr.mxu0 0.0
        %1541 = vmatpush1.msra.mxu0 0.0
        %1542 = vmatprep.subr.mxu0 0.0
        %1543 = vmatpush1.msra.mxu0 0.0
        %1544 = vmatprep.subr.mxu0 0.0
        %1545 = vmatpush1.msra.mxu0 0.0
        %1546 = vmatprep.subr.mxu0 0.0
        %1547 = vmatpush1.msra.mxu0 0.0
        %1548 = vmatprep.subr.mxu0 0.0
        %1549 = vmatpush1.msra.mxu0 0.0
        %1550 = vmatprep.subr.mxu0 0.0
        %1551 = vmatpush1.msra.mxu0 0.0
        %1552 = vmatprep.subr.mxu0 0.0
        %1553 = vmatpush1.msra.mxu0 0.0
        %1554 = vmatprep.subr.mxu0 0.0
        %1555 = vmatpush1.msra.mxu0 0.0
        %1556 = vmatprep.subr.mxu0 0.0
        %1557 = vmatpush1.msra.mxu0 0.0
        %1558 = vmatprep.mubr.f32.mxu0 0.0
        %1559 = vmatmul.mubr.f32.gmra.mrb[0].mxu0 %v1492
        %v1560 = vpop.f32.mrb[0].mxu0
        %v1561 = vadd.f32 %v1488, %v1560
        %v1562 = vpop.f32.mrb[0].mxu0
        %1563 = vdwg.mxu0
        %v1565 = vsel %vm1090, %v610, 0
        %v1568 = vsel %vm1090, %v811, 0
        %1570 = vmatprep.subr.mxu0 0.0
        %1571 = vmatpush1.xpose.msra.mxu0 %v1568
        %1572 = vmatprep.subr.mxu0 0.0
        %1573 = vmatpush1.xpose.msra.mxu0 0.0
        %1574 = vmatprep.subr.mxu0 0.0
        %1575 = vmatpush1.xpose.msra.mxu0 0.0
        %1576 = vmatprep.subr.mxu0 0.0
        %1577 = vmatpush1.xpose.msra.mxu0 0.0
        %1578 = vmatprep.subr.mxu0 0.0
        %1579 = vmatpush1.xpose.msra.mxu0 0.0
        %1580 = vmatprep.subr.mxu0 0.0
        %1581 = vmatpush1.xpose.msra.mxu0 0.0
        %1582 = vmatprep.subr.mxu0 0.0
        %1583 = vmatpush1.xpose.msra.mxu0 0.0
        %1584 = vmatprep.subr.mxu0 0.0
        %1585 = vmatpush1.xpose.msra.mxu0 0.0
        %1586 = vmatprep.subr.mxu0 0.0
        %1587 = vmatpush1.xpose.msra.mxu0 0.0
        %1588 = vmatprep.subr.mxu0 0.0
        %1589 = vmatpush1.xpose.msra.mxu0 0.0
        %1590 = vmatprep.subr.mxu0 0.0
        %1591 = vmatpush1.xpose.msra.mxu0 0.0
        %1592 = vmatprep.subr.mxu0 0.0
        %1593 = vmatpush1.xpose.msra.mxu0 0.0
        %1594 = vmatprep.subr.mxu0 0.0
        %1595 = vmatpush1.xpose.msra.mxu0 0.0
        %1596 = vmatprep.subr.mxu0 0.0
        %1597 = vmatpush1.xpose.msra.mxu0 0.0
        %1598 = vmatprep.subr.mxu0 0.0
        %1599 = vmatpush1.xpose.msra.mxu0 0.0
        %1600 = vmatprep.subr.mxu0 0.0
        %1601 = vmatpush1.xpose.msra.mxu0 0.0
        %1602 = vmatprep.subr.mxu0 0.0
        %1603 = vmatpush1.xpose.msra.mxu0 0.0
        %1604 = vmatprep.subr.mxu0 0.0
        %1605 = vmatpush1.xpose.msra.mxu0 0.0
        %1606 = vmatprep.subr.mxu0 0.0
        %1607 = vmatpush1.xpose.msra.mxu0 0.0
        %1608 = vmatprep.subr.mxu0 0.0
        %1609 = vmatpush1.xpose.msra.mxu0 0.0
        %1610 = vmatprep.subr.mxu0 0.0
        %1611 = vmatpush1.xpose.msra.mxu0 0.0
        %1612 = vmatprep.subr.mxu0 0.0
        %1613 = vmatpush1.xpose.msra.mxu0 0.0
        %1614 = vmatprep.subr.mxu0 0.0
        %1615 = vmatpush1.xpose.msra.mxu0 0.0
        %1616 = vmatprep.subr.mxu0 0.0
        %1617 = vmatpush1.xpose.msra.mxu0 0.0
        %1618 = vmatprep.subr.mxu0 0.0
        %1619 = vmatpush1.xpose.msra.mxu0 0.0
        %1620 = vmatprep.subr.mxu0 0.0
        %1621 = vmatpush1.xpose.msra.mxu0 0.0
        %1622 = vmatprep.subr.mxu0 0.0
        %1623 = vmatpush1.xpose.msra.mxu0 0.0
        %1624 = vmatprep.subr.mxu0 0.0
        %1625 = vmatpush1.xpose.msra.mxu0 0.0
        %1626 = vmatprep.subr.mxu0 0.0
        %1627 = vmatpush1.xpose.msra.mxu0 0.0
        %1628 = vmatprep.subr.mxu0 0.0
        %1629 = vmatpush1.xpose.msra.mxu0 0.0
        %1630 = vmatprep.subr.mxu0 0.0
        %1631 = vmatpush1.xpose.msra.mxu0 0.0
        %1632 = vmatprep.subr.mxu0 0.0
        %1633 = vmatpush1.xpose.msra.mxu0 0.0
        %1634 = vmatprep.mubr.f32.mxu0 0.0
        %1635 = vmatmul.mubr.f32.gmra.mrb[0].mxu0 %v1565
        %v1636 = vpop.f32.mrb[0].mxu0
        %v1637 = vadd.f32 0.0, %v1636
        %v1638 = vpop.f32.mrb[0].mxu0
        %1639 = vdwg.mxu0
        %v1640 = vsel %vm1167, %v1637, -inf
        %1641 = vmax.xlane.f32.xlu0 %v1640
        %v1642 = vpop.xlane.xlu0 %1641
        %v1643 = vsub.f32 %v1637, %v1642
        %v1644 = vmul.f32 %v1643, 1.442695
        %v1645 = vpow.pop %v1644
        %v1646 = vsel %vm1167, %v1645, 0.0
        %1647 = vadd.xlane.f32.xlu0 %v1646
        %v1648 = vpop.xlane.xlu0 %1647
        %v1650 = vsel %vm1167, %v1645, 0
        %1652 = vmatprep.subr.mxu0 0.0
        %1653 = vmatpush1.msra.mxu0 %v953
        %1654 = vmatprep.subr.mxu0 0.0
        %1655 = vmatpush1.msra.mxu0 0.0
        %1656 = vmatprep.subr.mxu0 0.0
        %1657 = vmatpush1.msra.mxu0 0.0
        %1658 = vmatprep.subr.mxu0 0.0
        %1659 = vmatpush1.msra.mxu0 0.0
        %1660 = vmatprep.subr.mxu0 0.0
        %1661 = vmatpush1.msra.mxu0 0.0
        %1662 = vmatprep.subr.mxu0 0.0
        %1663 = vmatpush1.msra.mxu0 0.0
        %1664 = vmatprep.subr.mxu0 0.0
        %1665 = vmatpush1.msra.mxu0 0.0
        %1666 = vmatprep.subr.mxu0 0.0
        %1667 = vmatpush1.msra.mxu0 0.0
        %1668 = vmatprep.subr.mxu0 0.0
        %1669 = vmatpush1.msra.mxu0 0.0
        %1670 = vmatprep.subr.mxu0 0.0
        %1671 = vmatpush1.msra.mxu0 0.0
        %1672 = vmatprep.subr.mxu0 0.0
        %1673 = vmatpush1.msra.mxu0 0.0
        %1674 = vmatprep.subr.mxu0 0.0
        %1675 = vmatpush1.msra.mxu0 0.0
        %1676 = vmatprep.subr.mxu0 0.0
        %1677 = vmatpush1.msra.mxu0 0.0
        %1678 = vmatprep.subr.mxu0 0.0
        %1679 = vmatpush1.msra.mxu0 0.0
        %1680 = vmatprep.subr.mxu0 0.0
        %1681 = vmatpush1.msra.mxu0 0.0
        %1682 = vmatprep.subr.mxu0 0.0
        %1683 = vmatpush1.msra.mxu0 0.0
        %1684 = vmatprep.subr.mxu0 0.0
        %1685 = vmatpush1.msra.mxu0 0.0
        %1686 = vmatprep.subr.mxu0 0.0
        %1687 = vmatpush1.msra.mxu0 0.0
        %1688 = vmatprep.subr.mxu0 0.0
        %1689 = vmatpush1.msra.mxu0 0.0
        %1690 = vmatprep.subr.mxu0 0.0
        %1691 = vmatpush1.msra.mxu0 0.0
        %1692 = vmatprep.subr.mxu0 0.0
        %1693 = vmatpush1.msra.mxu0 0.0
        %1694 = vmatprep.subr.mxu0 0.0
        %1695 = vmatpush1.msra.mxu0 0.0
        %1696 = vmatprep.subr.mxu0 0.0
        %1697 = vmatpush1.msra.mxu0 0.0
        %1698 = vmatprep.subr.mxu0 0.0
        %1699 = vmatpush1.msra.mxu0 0.0
        %1700 = vmatprep.subr.mxu0 0.0
        %1701 = vmatpush1.msra.mxu0 0.0
        %1702 = vmatprep.subr.mxu0 0.0
        %1703 = vmatpush1.msra.mxu0 0.0
        %1704 = vmatprep.subr.mxu0 0.0
        %1705 = vmatpush1.msra.mxu0 0.0
        %1706 = vmatprep.subr.mxu0 0.0
        %1707 = vmatpush1.msra.mxu0 0.0
        %1708 = vmatprep.subr.mxu0 0.0
        %1709 = vmatpush1.msra.mxu0 0.0
        %1710 = vmatprep.subr.mxu0 0.0
        %1711 = vmatpush1.msra.mxu0 0.0
        %1712 = vmatprep.subr.mxu0 0.0
        %1713 = vmatpush1.msra.mxu0 0.0
        %1714 = vmatprep.subr.mxu0 0.0
        %1715 = vmatpush1.msra.mxu0 0.0
        %1716 = vmatprep.mubr.f32.mxu0 0.0
        %1717 = vmatmul.mubr.f32.gmra.mrb[0].mxu0 %v1650
        %v1718 = vpop.f32.mrb[0].mxu0
        %v1719 = vadd.f32 0.0, %v1718
        %v1720 = vpop.f32.mrb[0].mxu0
        %1721 = vdwg.mxu0
        %v1722 = vrcp.pop %v1648
        %v1723 = vmul.f32 %v1719, %v1722
        %v1725 = vsel %vm1090, %v1723, 0
        %1727 = vmatprep.subr.mxu0 0.0
        %1728 = vmatpush1.msra.mxu0 %v1042
        %1729 = vmatprep.subr.mxu0 0.0
        %1730 = vmatpush1.msra.mxu0 %v1043
        %1731 = vmatprep.subr.mxu0 0.0
        %1732 = vmatpush1.msra.mxu0 %v1044
        %1733 = vmatprep.subr.mxu0 0.0
        %1734 = vmatpush1.msra.mxu0 %v1045
        %1735 = vmatprep.subr.mxu0 0.0
        %1736 = vmatpush1.msra.mxu0 %v1046
        %1737 = vmatprep.subr.mxu0 0.0
        %1738 = vmatpush1.msra.mxu0 %v1047
        %1739 = vmatprep.subr.mxu0 0.0
        %1740 = vmatpush1.msra.mxu0 %v1048
        %1741 = vmatprep.subr.mxu0 0.0
        %1742 = vmatpush1.msra.mxu0 %v1049
        %1743 = vmatprep.subr.mxu0 0.0
        %1744 = vmatpush1.msra.mxu0 0.0
        %1745 = vmatprep.subr.mxu0 0.0
        %1746 = vmatpush1.msra.mxu0 0.0
        %1747 = vmatprep.subr.mxu0 0.0
        %1748 = vmatpush1.msra.mxu0 0.0
        %1749 = vmatprep.subr.mxu0 0.0
        %1750 = vmatpush1.msra.mxu0 0.0
        %1751 = vmatprep.subr.mxu0 0.0
        %1752 = vmatpush1.msra.mxu0 0.0
        %1753 = vmatprep.subr.mxu0 0.0
        %1754 = vmatpush1.msra.mxu0 0.0
        %1755 = vmatprep.subr.mxu0 0.0
        %1756 = vmatpush1.msra.mxu0 0.0
        %1757 = vmatprep.subr.mxu0 0.0
        %1758 = vmatpush1.msra.mxu0 0.0
        %1759 = vmatprep.subr.mxu0 0.0
        %1760 = vmatpush1.msra.mxu0 0.0
        %1761 = vmatprep.subr.mxu0 0.0
        %1762 = vmatpush1.msra.mxu0 0.0
        %1763 = vmatprep.subr.mxu0 0.0
        %1764 = vmatpush1.msra.mxu0 0.0
        %1765 = vmatprep.subr.mxu0 0.0
        %1766 = vmatpush1.msra.mxu0 0.0
        %1767 = vmatprep.subr.mxu0 0.0
        %1768 = vmatpush1.msra.mxu0 0.0
        %1769 = vmatprep.subr.mxu0 0.0
        %1770 = vmatpush1.msra.mxu0 0.0
        %1771 = vmatprep.subr.mxu0 0.0
        %1772 = vmatpush1.msra.mxu0 0.0
        %1773 = vmatprep.subr.mxu0 0.0
        %1774 = vmatpush1.msra.mxu0 0.0
        %1775 = vmatprep.subr.mxu0 0.0
        %1776 = vmatpush1.msra.mxu0 0.0
        %1777 = vmatprep.subr.mxu0 0.0
        %1778 = vmatpush1.msra.mxu0 0.0
        %1779 = vmatprep.subr.mxu0 0.0
        %1780 = vmatpush1.msra.mxu0 0.0
        %1781 = vmatprep.subr.mxu0 0.0
        %1782 = vmatpush1.msra.mxu0 0.0
        %1783 = vmatprep.subr.mxu0 0.0
        %1784 = vmatpush1.msra.mxu0 0.0
        %1785 = vmatprep.subr.mxu0 0.0
        %1786 = vmatpush1.msra.mxu0 0.0
        %1787 = vmatprep.subr.mxu0 0.0
        %1788 = vmatpush1.msra.mxu0 0.0
        %1789 = vmatprep.subr.mxu0 0.0
        %1790 = vmatpush1.msra.mxu0 0.0
        %1791 = vmatprep.mubr.f32.mxu0 0.0
        %1792 = vmatmul.mubr.f32.gmra.mrb[0].mxu0 %v1725
        %v1793 = vpop.f32.mrb[0].mxu0
        %v1794 = vadd.f32 0.0, %v1793
        %v1795 = vpop.f32.mrb[0].mxu0
        %1796 = vdwg.mxu0
        %v1797 = vadd.f32 %v1561, %v1794
        %1798 = vrot.lane.b32.xlu0 %v610, 64
        %v1799 = vpop.permute.xlu0 %1798
        %1800 = vrot.lane.b32.xlu0 %v811, 64
        %v1801 = vpop.permute.xlu0 %1800
        %v1802 = vsel %vm1090, %v1799, 0
        %v1804 = vsel %vm1090, %v1801, 0
        %1806 = vmatprep.subr.mxu0 0.0
        %1807 = vmatpush1.xpose.msra.mxu0 %v1804
        %1808 = vmatprep.subr.mxu0 0.0
        %1809 = vmatpush1.xpose.msra.mxu0 0.0
        %1810 = vmatprep.subr.mxu0 0.0
        %1811 = vmatpush1.xpose.msra.mxu0 0.0
        %1812 = vmatprep.subr.mxu0 0.0
        %1813 = vmatpush1.xpose.msra.mxu0 0.0
        %1814 = vmatprep.subr.mxu0 0.0
        %1815 = vmatpush1.xpose.msra.mxu0 0.0
        %1816 = vmatprep.subr.mxu0 0.0
        %1817 = vmatpush1.xpose.msra.mxu0 0.0
        %1818 = vmatprep.subr.mxu0 0.0
        %1819 = vmatpush1.xpose.msra.mxu0 0.0
        %1820 = vmatprep.subr.mxu0 0.0
        %1821 = vmatpush1.xpose.msra.mxu0 0.0
        %1822 = vmatprep.subr.mxu0 0.0
        %1823 = vmatpush1.xpose.msra.mxu0 0.0
        %1824 = vmatprep.subr.mxu0 0.0
        %1825 = vmatpush1.xpose.msra.mxu0 0.0
        %1826 = vmatprep.subr.mxu0 0.0
        %1827 = vmatpush1.xpose.msra.mxu0 0.0
        %1828 = vmatprep.subr.mxu0 0.0
        %1829 = vmatpush1.xpose.msra.mxu0 0.0
        %1830 = vmatprep.subr.mxu0 0.0
        %1831 = vmatpush1.xpose.msra.mxu0 0.0
        %1832 = vmatprep.subr.mxu0 0.0
        %1833 = vmatpush1.xpose.msra.mxu0 0.0
        %1834 = vmatprep.subr.mxu0 0.0
        %1835 = vmatpush1.xpose.msra.mxu0 0.0
        %1836 = vmatprep.subr.mxu0 0.0
        %1837 = vmatpush1.xpose.msra.mxu0 0.0
        %1838 = vmatprep.subr.mxu0 0.0
        %1839 = vmatpush1.xpose.msra.mxu0 0.0
        %1840 = vmatprep.subr.mxu0 0.0
        %1841 = vmatpush1.xpose.msra.mxu0 0.0
        %1842 = vmatprep.subr.mxu0 0.0
        %1843 = vmatpush1.xpose.msra.mxu0 0.0
        %1844 = vmatprep.subr.mxu0 0.0
        %1845 = vmatpush1.xpose.msra.mxu0 0.0
        %1846 = vmatprep.subr.mxu0 0.0
        %1847 = vmatpush1.xpose.msra.mxu0 0.0
        %1848 = vmatprep.subr.mxu0 0.0
        %1849 = vmatpush1.xpose.msra.mxu0 0.0
        %1850 = vmatprep.subr.mxu0 0.0
        %1851 = vmatpush1.xpose.msra.mxu0 0.0
        %1852 = vmatprep.subr.mxu0 0.0
        %1853 = vmatpush1.xpose.msra.mxu0 0.0
        %1854 = vmatprep.subr.mxu0 0.0
        %1855 = vmatpush1.xpose.msra.mxu0 0.0
        %1856 = vmatprep.subr.mxu0 0.0
        %1857 = vmatpush1.xpose.msra.mxu0 0.0
        %1858 = vmatprep.subr.mxu0 0.0
        %1859 = vmatpush1.xpose.msra.mxu0 0.0
        %1860 = vmatprep.subr.mxu0 0.0
        %1861 = vmatpush1.xpose.msra.mxu0 0.0
        %1862 = vmatprep.subr.mxu0 0.0
        %1863 = vmatpush1.xpose.msra.mxu0 0.0
        %1864 = vmatprep.subr.mxu0 0.0
        %1865 = vmatpush1.xpose.msra.mxu0 0.0
        %1866 = vmatprep.subr.mxu0 0.0
        %1867 = vmatpush1.xpose.msra.mxu0 0.0
        %1868 = vmatprep.subr.mxu0 0.0
        %1869 = vmatpush1.xpose.msra.mxu0 0.0
        %1870 = vmatprep.mubr.f32.mxu0 0.0
        %1871 = vmatmul.mubr.f32.gmra.mrb[0].mxu0 %v1802
        %v1872 = vpop.f32.mrb[0].mxu0
        %v1873 = vadd.f32 0.0, %v1872
        %v1874 = vpop.f32.mrb[0].mxu0
        %1875 = vdwg.mxu0
        %v1876 = vsel %vm1167, %v1873, -inf
        %1877 = vmax.xlane.f32.xlu0 %v1876
        %v1878 = vpop.xlane.xlu0 %1877
        %v1879 = vsub.f32 %v1873, %v1878
        %v1880 = vmul.f32 %v1879, 1.442695
        %v1881 = vpow.pop %v1880
        %v1882 = vsel %vm1167, %v1881, 0.0
        %1883 = vadd.xlane.f32.xlu0 %v1882
        %v1884 = vpop.xlane.xlu0 %1883
        %1886 = vrot.lane.b32.xlu0 %v953, 64
        %v1887 = vpop.permute.xlu0 %1886
        %v1890 = vsel %vm1167, %v1881, 0
        %1892 = vmatprep.subr.mxu0 0.0
        %1893 = vmatpush1.msra.mxu0 %v1887
        %1894 = vmatprep.subr.mxu0 0.0
        %1895 = vmatpush1.msra.mxu0 0.0
        %1896 = vmatprep.subr.mxu0 0.0
        %1897 = vmatpush1.msra.mxu0 0.0
        %1898 = vmatprep.subr.mxu0 0.0
        %1899 = vmatpush1.msra.mxu0 0.0
        %1900 = vmatprep.subr.mxu0 0.0
        %1901 = vmatpush1.msra.mxu0 0.0
        %1902 = vmatprep.subr.mxu0 0.0
        %1903 = vmatpush1.msra.mxu0 0.0
        %1904 = vmatprep.subr.mxu0 0.0
        %1905 = vmatpush1.msra.mxu0 0.0
        %1906 = vmatprep.subr.mxu0 0.0
        %1907 = vmatpush1.msra.mxu0 0.0
        %1908 = vmatprep.subr.mxu0 0.0
        %1909 = vmatpush1.msra.mxu0 0.0
        %1910 = vmatprep.subr.mxu0 0.0
        %1911 = vmatpush1.msra.mxu0 0.0
        %1912 = vmatprep.subr.mxu0 0.0
        %1913 = vmatpush1.msra.mxu0 0.0
        %1914 = vmatprep.subr.mxu0 0.0
        %1915 = vmatpush1.msra.mxu0 0.0
        %1916 = vmatprep.subr.mxu0 0.0
        %1917 = vmatpush1.msra.mxu0 0.0
        %1918 = vmatprep.subr.mxu0 0.0
        %1919 = vmatpush1.msra.mxu0 0.0
        %1920 = vmatprep.subr.mxu0 0.0
        %1921 = vmatpush1.msra.mxu0 0.0
        %1922 = vmatprep.subr.mxu0 0.0
        %1923 = vmatpush1.msra.mxu0 0.0
        %1924 = vmatprep.subr.mxu0 0.0
        %1925 = vmatpush1.msra.mxu0 0.0
        %1926 = vmatprep.subr.mxu0 0.0
        %1927 = vmatpush1.msra.mxu0 0.0
        %1928 = vmatprep.subr.mxu0 0.0
        %1929 = vmatpush1.msra.mxu0 0.0
        %1930 = vmatprep.subr.mxu0 0.0
        %1931 = vmatpush1.msra.mxu0 0.0
        %1932 = vmatprep.subr.mxu0 0.0
        %1933 = vmatpush1.msra.mxu0 0.0
        %1934 = vmatprep.subr.mxu0 0.0
        %1935 = vmatpush1.msra.mxu0 0.0
        %1936 = vmatprep.subr.mxu0 0.0
        %1937 = vmatpush1.msra.mxu0 0.0
        %1938 = vmatprep.subr.mxu0 0.0
        %1939 = vmatpush1.msra.mxu0 0.0
        %1940 = vmatprep.subr.mxu0 0.0
        %1941 = vmatpush1.msra.mxu0 0.0
        %1942 = vmatprep.subr.mxu0 0.0
        %1943 = vmatpush1.msra.mxu0 0.0
        %1944 = vmatprep.subr.mxu0 0.0
        %1945 = vmatpush1.msra.mxu0 0.0
        %1946 = vmatprep.subr.mxu0 0.0
        %1947 = vmatpush1.msra.mxu0 0.0
        %1948 = vmatprep.subr.mxu0 0.0
        %1949 = vmatpush1.msra.mxu0 0.0
        %1950 = vmatprep.subr.mxu0 0.0
        %1951 = vmatpush1.msra.mxu0 0.0
        %1952 = vmatprep.subr.mxu0 0.0
        %1953 = vmatpush1.msra.mxu0 0.0
        %1954 = vmatprep.subr.mxu0 0.0
        %1955 = vmatpush1.msra.mxu0 0.0
        %1956 = vmatprep.mubr.f32.mxu0 0.0
        %1957 = vmatmul.mubr.f32.gmra.mrb[0].mxu0 %v1890
        %v1958 = vpop.f32.mrb[0].mxu0
        %v1959 = vadd.f32 0.0, %v1958
        %v1960 = vpop.f32.mrb[0].mxu0
        %1961 = vdwg.mxu0
        %v1962 = vrcp.pop %v1884
        %v1963 = vmul.f32 %v1959, %v1962
        %v1965 = vsel %vm1090, %v1963, 0
        %1967 = vmatprep.subr.mxu0 0.0
        %1968 = vmatpush1.msra.mxu0 %v1050
        %1969 = vmatprep.subr.mxu0 0.0
        %1970 = vmatpush1.msra.mxu0 %v1051
        %1971 = vmatprep.subr.mxu0 0.0
        %1972 = vmatpush1.msra.mxu0 %v1052
        %1973 = vmatprep.subr.mxu0 0.0
        %1974 = vmatpush1.msra.mxu0 %v1053
        %1975 = vmatprep.subr.mxu0 0.0
        %1976 = vmatpush1.msra.mxu0 %v1054
        %1977 = vmatprep.subr.mxu0 0.0
        %1978 = vmatpush1.msra.mxu0 %v1055
        %1979 = vmatprep.subr.mxu0 0.0
        %1980 = vmatpush1.msra.mxu0 %v1056
        %1981 = vmatprep.subr.mxu0 0.0
        %1982 = vmatpush1.msra.mxu0 %v1057
        %1983 = vmatprep.subr.mxu0 0.0
        %1984 = vmatpush1.msra.mxu0 0.0
        %1985 = vmatprep.subr.mxu0 0.0
        %1986 = vmatpush1.msra.mxu0 0.0
        %1987 = vmatprep.subr.mxu0 0.0
        %1988 = vmatpush1.msra.mxu0 0.0
        %1989 = vmatprep.subr.mxu0 0.0
        %1990 = vmatpush1.msra.mxu0 0.0
        %1991 = vmatprep.subr.mxu0 0.0
        %1992 = vmatpush1.msra.mxu0 0.0
        %1993 = vmatprep.subr.mxu0 0.0
        %1994 = vmatpush1.msra.mxu0 0.0
        %1995 = vmatprep.subr.mxu0 0.0
        %1996 = vmatpush1.msra.mxu0 0.0
        %1997 = vmatprep.subr.mxu0 0.0
        %1998 = vmatpush1.msra.mxu0 0.0
        %1999 = vmatprep.subr.mxu0 0.0
        %2000 = vmatpush1.msra.mxu0 0.0
        %2001 = vmatprep.subr.mxu0 0.0
        %2002 = vmatpush1.msra.mxu0 0.0
        %2003 = vmatprep.subr.mxu0 0.0
        %2004 = vmatpush1.msra.mxu0 0.0
        %2005 = vmatprep.subr.mxu0 0.0
        %2006 = vmatpush1.msra.mxu0 0.0
        %2007 = vmatprep.subr.mxu0 0.0
        %2008 = vmatpush1.msra.mxu0 0.0
        %2009 = vmatprep.subr.mxu0 0.0
        %2010 = vmatpush1.msra.mxu0 0.0
        %2011 = vmatprep.subr.mxu0 0.0
        %2012 = vmatpush1.msra.mxu0 0.0
        %2013 = vmatprep.subr.mxu0 0.0
        %2014 = vmatpush1.msra.mxu0 0.0
        %2015 = vmatprep.subr.mxu0 0.0
        %2016 = vmatpush1.msra.mxu0 0.0
        %2017 = vmatprep.subr.mxu0 0.0
        %2018 = vmatpush1.msra.mxu0 0.0
        %2019 = vmatprep.subr.mxu0 0.0
        %2020 = vmatpush1.msra.mxu0 0.0
        %2021 = vmatprep.subr.mxu0 0.0
        %2022 = vmatpush1.msra.mxu0 0.0
        %2023 = vmatprep.subr.mxu0 0.0
        %2024 = vmatpush1.msra.mxu0 0.0
        %2025 = vmatprep.subr.mxu0 0.0
        %2026 = vmatpush1.msra.mxu0 0.0
        %2027 = vmatprep.subr.mxu0 0.0
        %2028 = vmatpush1.msra.mxu0 0.0
        %2029 = vmatprep.subr.mxu0 0.0
        %2030 = vmatpush1.msra.mxu0 0.0
        %2031 = vmatprep.mubr.f32.mxu0 0.0
        %2032 = vmatmul.mubr.f32.gmra.mrb[0].mxu0 %v1965
        %v2033 = vpop.f32.mrb[0].mxu0
        %v2034 = vadd.f32 0.0, %v2033
        %v2035 = vpop.f32.mrb[0].mxu0
        %2036 = vdwg.mxu0
        %v2037 = vadd.f32 %v1797, %v2034
        %v2039 = vsel %vm1090, %v611, 0
        %v2042 = vsel %vm1090, %v880, 0
        %2044 = vmatprep.subr.mxu0 0.0
        %2045 = vmatpush1.xpose.msra.mxu0 %v2042
        %2046 = vmatprep.subr.mxu0 0.0
        %2047 = vmatpush1.xpose.msra.mxu0 0.0
        %2048 = vmatprep.subr.mxu0 0.0
        %2049 = vmatpush1.xpose.msra.mxu0 0.0
        %2050 = vmatprep.subr.mxu0 0.0
        %2051 = vmatpush1.xpose.msra.mxu0 0.0
        %2052 = vmatprep.subr.mxu0 0.0
        %2053 = vmatpush1.xpose.msra.mxu0 0.0
        %2054 = vmatprep.subr.mxu0 0.0
        %2055 = vmatpush1.xpose.msra.mxu0 0.0
        %2056 = vmatprep.subr.mxu0 0.0
        %2057 = vmatpush1.xpose.msra.mxu0 0.0
        %2058 = vmatprep.subr.mxu0 0.0
        %2059 = vmatpush1.xpose.msra.mxu0 0.0
        %2060 = vmatprep.subr.mxu0 0.0
        %2061 = vmatpush1.xpose.msra.mxu0 0.0
        %2062 = vmatprep.subr.mxu0 0.0
        %2063 = vmatpush1.xpose.msra.mxu0 0.0
        %2064 = vmatprep.subr.mxu0 0.0
        %2065 = vmatpush1.xpose.msra.mxu0 0.0
        %2066 = vmatprep.subr.mxu0 0.0
        %2067 = vmatpush1.xpose.msra.mxu0 0.0
        %2068 = vmatprep.subr.mxu0 0.0
        %2069 = vmatpush1.xpose.msra.mxu0 0.0
        %2070 = vmatprep.subr.mxu0 0.0
        %2071 = vmatpush1.xpose.msra.mxu0 0.0
        %2072 = vmatprep.subr.mxu0 0.0
        %2073 = vmatpush1.xpose.msra.mxu0 0.0
        %2074 = vmatprep.subr.mxu0 0.0
        %2075 = vmatpush1.xpose.msra.mxu0 0.0
        %2076 = vmatprep.subr.mxu0 0.0
        %2077 = vmatpush1.xpose.msra.mxu0 0.0
        %2078 = vmatprep.subr.mxu0 0.0
        %2079 = vmatpush1.xpose.msra.mxu0 0.0
        %2080 = vmatprep.subr.mxu0 0.0
        %2081 = vmatpush1.xpose.msra.mxu0 0.0
        %2082 = vmatprep.subr.mxu0 0.0
        %2083 = vmatpush1.xpose.msra.mxu0 0.0
        %2084 = vmatprep.subr.mxu0 0.0
        %2085 = vmatpush1.xpose.msra.mxu0 0.0
        %2086 = vmatprep.subr.mxu0 0.0
        %2087 = vmatpush1.xpose.msra.mxu0 0.0
        %2088 = vmatprep.subr.mxu0 0.0
        %2089 = vmatpush1.xpose.msra.mxu0 0.0
        %2090 = vmatprep.subr.mxu0 0.0
        %2091 = vmatpush1.xpose.msra.mxu0 0.0
        %2092 = vmatprep.subr.mxu0 0.0
        %2093 = vmatpush1.xpose.msra.mxu0 0.0
        %2094 = vmatprep.subr.mxu0 0.0
        %2095 = vmatpush1.xpose.msra.mxu0 0.0
        %2096 = vmatprep.subr.mxu0 0.0
        %2097 = vmatpush1.xpose.msra.mxu0 0.0
        %2098 = vmatprep.subr.mxu0 0.0
        %2099 = vmatpush1.xpose.msra.mxu0 0.0
        %2100 = vmatprep.subr.mxu0 0.0
        %2101 = vmatpush1.xpose.msra.mxu0 0.0
        %2102 = vmatprep.subr.mxu0 0.0
        %2103 = vmatpush1.xpose.msra.mxu0 0.0
        %2104 = vmatprep.subr.mxu0 0.0
        %2105 = vmatpush1.xpose.msra.mxu0 0.0
        %2106 = vmatprep.subr.mxu0 0.0
        %2107 = vmatpush1.xpose.msra.mxu0 0.0
        %2108 = vmatprep.mubr.f32.mxu0 0.0
        %2109 = vmatmul.mubr.f32.gmra.mrb[0].mxu0 %v2039
        %v2110 = vpop.f32.mrb[0].mxu0
        %v2111 = vadd.f32 0.0, %v2110
        %v2112 = vpop.f32.mrb[0].mxu0
        %2113 = vdwg.mxu0
        %v2114 = vsel %vm1167, %v2111, -inf
        %2115 = vmax.xlane.f32.xlu0 %v2114
        %v2116 = vpop.xlane.xlu0 %2115
        %v2117 = vsub.f32 %v2111, %v2116
        %v2118 = vmul.f32 %v2117, 1.442695
        %v2119 = vpow.pop %v2118
        %v2120 = vsel %vm1167, %v2119, 0.0
        %2121 = vadd.xlane.f32.xlu0 %v2120
        %v2122 = vpop.xlane.xlu0 %2121
        %v2124 = vsel %vm1167, %v2119, 0
        %2126 = vmatprep.subr.mxu0 0.0
        %2127 = vmatpush1.msra.mxu0 %v1022
        %2128 = vmatprep.subr.mxu0 0.0
        %2129 = vmatpush1.msra.mxu0 0.0
        %2130 = vmatprep.subr.mxu0 0.0
        %2131 = vmatpush1.msra.mxu0 0.0
        %2132 = vmatprep.subr.mxu0 0.0
        %2133 = vmatpush1.msra.mxu0 0.0
        %2134 = vmatprep.subr.mxu0 0.0
        %2135 = vmatpush1.msra.mxu0 0.0
        %2136 = vmatprep.subr.mxu0 0.0
        %2137 = vmatpush1.msra.mxu0 0.0
        %2138 = vmatprep.subr.mxu0 0.0
        %2139 = vmatpush1.msra.mxu0 0.0
        %2140 = vmatprep.subr.mxu0 0.0
        %2141 = vmatpush1.msra.mxu0 0.0
        %2142 = vmatprep.subr.mxu0 0.0
        %2143 = vmatpush1.msra.mxu0 0.0
        %2144 = vmatprep.subr.mxu0 0.0
        %2145 = vmatpush1.msra.mxu0 0.0
        %2146 = vmatprep.subr.mxu0 0.0
        %2147 = vmatpush1.msra.mxu0 0.0
        %2148 = vmatprep.subr.mxu0 0.0
        %2149 = vmatpush1.msra.mxu0 0.0
        %2150 = vmatprep.subr.mxu0 0.0
        %2151 = vmatpush1.msra.mxu0 0.0
        %2152 = vmatprep.subr.mxu0 0.0
        %2153 = vmatpush1.msra.mxu0 0.0
        %2154 = vmatprep.subr.mxu0 0.0
        %2155 = vmatpush1.msra.mxu0 0.0
        %2156 = vmatprep.subr.mxu0 0.0
        %2157 = vmatpush1.msra.mxu0 0.0
        %2158 = vmatprep.subr.mxu0 0.0
        %2159 = vmatpush1.msra.mxu0 0.0
        %2160 = vmatprep.subr.mxu0 0.0
        %2161 = vmatpush1.msra.mxu0 0.0
        %2162 = vmatprep.subr.mxu0 0.0
        %2163 = vmatpush1.msra.mxu0 0.0
        %2164 = vmatprep.subr.mxu0 0.0
        %2165 = vmatpush1.msra.mxu0 0.0
        %2166 = vmatprep.subr.mxu0 0.0
        %2167 = vmatpush1.msra.mxu0 0.0
        %2168 = vmatprep.subr.mxu0 0.0
        %2169 = vmatpush1.msra.mxu0 0.0
        %2170 = vmatprep.subr.mxu0 0.0
        %2171 = vmatpush1.msra.mxu0 0.0
        %2172 = vmatprep.subr.mxu0 0.0
        %2173 = vmatpush1.msra.mxu0 0.0
        %2174 = vmatprep.subr.mxu0 0.0
        %2175 = vmatpush1.msra.mxu0 0.0
        %2176 = vmatprep.subr.mxu0 0.0
        %2177 = vmatpush1.msra.mxu0 0.0
        %2178 = vmatprep.subr.mxu0 0.0
        %2179 = vmatpush1.msra.mxu0 0.0
        %2180 = vmatprep.subr.mxu0 0.0
        %2181 = vmatpush1.msra.mxu0 0.0
        %2182 = vmatprep.subr.mxu0 0.0
        %2183 = vmatpush1.msra.mxu0 0.0
        %2184 = vmatprep.subr.mxu0 0.0
        %2185 = vmatpush1.msra.mxu0 0.0
        %2186 = vmatprep.subr.mxu0 0.0
        %2187 = vmatpush1.msra.mxu0 0.0
        %2188 = vmatprep.subr.mxu0 0.0
        %2189 = vmatpush1.msra.mxu0 0.0
        %2190 = vmatprep.mubr.f32.mxu0 0.0
        %2191 = vmatmul.mubr.f32.gmra.mrb[0].mxu0 %v2124
        %v2192 = vpop.f32.mrb[0].mxu0
        %v2193 = vadd.f32 0.0, %v2192
        %v2194 = vpop.f32.mrb[0].mxu0
        %2195 = vdwg.mxu0
        %v2196 = vrcp.pop %v2122
        %v2197 = vmul.f32 %v2193, %v2196
        %v2199 = vsel %vm1090, %v2197, 0
        %2201 = vmatprep.subr.mxu0 0.0
        %2202 = vmatpush1.msra.mxu0 %v1058
        %2203 = vmatprep.subr.mxu0 0.0
        %2204 = vmatpush1.msra.mxu0 %v1059
        %2205 = vmatprep.subr.mxu0 0.0
        %2206 = vmatpush1.msra.mxu0 %v1060
        %2207 = vmatprep.subr.mxu0 0.0
        %2208 = vmatpush1.msra.mxu0 %v1061
        %2209 = vmatprep.subr.mxu0 0.0
        %2210 = vmatpush1.msra.mxu0 %v1062
        %2211 = vmatprep.subr.mxu0 0.0
        %2212 = vmatpush1.msra.mxu0 %v1063
        %2213 = vmatprep.subr.mxu0 0.0
        %2214 = vmatpush1.msra.mxu0 %v1064
        %2215 = vmatprep.subr.mxu0 0.0
        %2216 = vmatpush1.msra.mxu0 %v1065
        %2217 = vmatprep.subr.mxu0 0.0
        %2218 = vmatpush1.msra.mxu0 0.0
        %2219 = vmatprep.subr.mxu0 0.0
        %2220 = vmatpush1.msra.mxu0 0.0
        %2221 = vmatprep.subr.mxu0 0.0
        %2222 = vmatpush1.msra.mxu0 0.0
        %2223 = vmatprep.subr.mxu0 0.0
        %2224 = vmatpush1.msra.mxu0 0.0
        %2225 = vmatprep.subr.mxu0 0.0
        %2226 = vmatpush1.msra.mxu0 0.0
        %2227 = vmatprep.subr.mxu0 0.0
        %2228 = vmatpush1.msra.mxu0 0.0
        %2229 = vmatprep.subr.mxu0 0.0
        %2230 = vmatpush1.msra.mxu0 0.0
        %2231 = vmatprep.subr.mxu0 0.0
        %2232 = vmatpush1.msra.mxu0 0.0
        %2233 = vmatprep.subr.mxu0 0.0
        %2234 = vmatpush1.msra.mxu0 0.0
        %2235 = vmatprep.subr.mxu0 0.0
        %2236 = vmatpush1.msra.mxu0 0.0
        %2237 = vmatprep.subr.mxu0 0.0
        %2238 = vmatpush1.msra.mxu0 0.0
        %2239 = vmatprep.subr.mxu0 0.0
        %2240 = vmatpush1.msra.mxu0 0.0
        %2241 = vmatprep.subr.mxu0 0.0
        %2242 = vmatpush1.msra.mxu0 0.0
        %2243 = vmatprep.subr.mxu0 0.0
        %2244 = vmatpush1.msra.mxu0 0.0
        %2245 = vmatprep.subr.mxu0 0.0
        %2246 = vmatpush1.msra.mxu0 0.0
        %2247 = vmatprep.subr.mxu0 0.0
        %2248 = vmatpush1.msra.mxu0 0.0
        %2249 = vmatprep.subr.mxu0 0.0
        %2250 = vmatpush1.msra.mxu0 0.0
        %2251 = vmatprep.subr.mxu0 0.0
        %2252 = vmatpush1.msra.mxu0 0.0
        %2253 = vmatprep.subr.mxu0 0.0
        %2254 = vmatpush1.msra.mxu0 0.0
        %2255 = vmatprep.subr.mxu0 0.0
        %2256 = vmatpush1.msra.mxu0 0.0
        %2257 = vmatprep.subr.mxu0 0.0
        %2258 = vmatpush1.msra.mxu0 0.0
        %2259 = vmatprep.subr.mxu0 0.0
        %2260 = vmatpush1.msra.mxu0 0.0
        %2261 = vmatprep.subr.mxu0 0.0
        %2262 = vmatpush1.msra.mxu0 0.0
        %2263 = vmatprep.subr.mxu0 0.0
        %2264 = vmatpush1.msra.mxu0 0.0
        %2265 = vmatprep.mubr.f32.mxu0 0.0
        %2266 = vmatmul.mubr.f32.gmra.mrb[0].mxu0 %v2199
        %v2267 = vpop.f32.mrb[0].mxu0
        %v2268 = vadd.f32 0.0, %v2267
        %v2269 = vpop.f32.mrb[0].mxu0
        %2270 = vdwg.mxu0
        %v2271 = vadd.f32 %v2037, %v2268
        %2272 = vrot.lane.b32.xlu0 %v611, 64
        %v2273 = vpop.permute.xlu0 %2272
        %2274 = vrot.lane.b32.xlu0 %v880, 64
        %v2275 = vpop.permute.xlu0 %2274
        %v2276 = vsel %vm1090, %v2273, 0
        %v2278 = vsel %vm1090, %v2275, 0
        %2280 = vmatprep.subr.mxu0 0.0
        %2281 = vmatpush1.xpose.msra.mxu0 %v2278
        %2282 = vmatprep.subr.mxu0 0.0
        %2283 = vmatpush1.xpose.msra.mxu0 0.0
        %2284 = vmatprep.subr.mxu0 0.0
        %2285 = vmatpush1.xpose.msra.mxu0 0.0
        %2286 = vmatprep.subr.mxu0 0.0
        %2287 = vmatpush1.xpose.msra.mxu0 0.0
        %2288 = vmatprep.subr.mxu0 0.0
        %2289 = vmatpush1.xpose.msra.mxu0 0.0
        %2290 = vmatprep.subr.mxu0 0.0
        %2291 = vmatpush1.xpose.msra.mxu0 0.0
        %2292 = vmatprep.subr.mxu0 0.0
        %2293 = vmatpush1.xpose.msra.mxu0 0.0
        %2294 = vmatprep.subr.mxu0 0.0
        %2295 = vmatpush1.xpose.msra.mxu0 0.0
        %2296 = vmatprep.subr.mxu0 0.0
        %2297 = vmatpush1.xpose.msra.mxu0 0.0
        %2298 = vmatprep.subr.mxu0 0.0
        %2299 = vmatpush1.xpose.msra.mxu0 0.0
        %2300 = vmatprep.subr.mxu0 0.0
        %2301 = vmatpush1.xpose.msra.mxu0 0.0
        %2302 = vmatprep.subr.mxu0 0.0
        %2303 = vmatpush1.xpose.msra.mxu0 0.0
        %2304 = vmatprep.subr.mxu0 0.0
        %2305 = vmatpush1.xpose.msra.mxu0 0.0
        %2306 = vmatprep.subr.mxu0 0.0
        %2307 = vmatpush1.xpose.msra.mxu0 0.0
        %2308 = vmatprep.subr.mxu0 0.0
        %2309 = vmatpush1.xpose.msra.mxu0 0.0
        %2310 = vmatprep.subr.mxu0 0.0
        %2311 = vmatpush1.xpose.msra.mxu0 0.0
        %2312 = vmatprep.subr.mxu0 0.0
        %2313 = vmatpush1.xpose.msra.mxu0 0.0
        %2314 = vmatprep.subr.mxu0 0.0
        %2315 = vmatpush1.xpose.msra.mxu0 0.0
        %2316 = vmatprep.subr.mxu0 0.0
        %2317 = vmatpush1.xpose.msra.mxu0 0.0
        %2318 = vmatprep.subr.mxu0 0.0
        %2319 = vmatpush1.xpose.msra.mxu0 0.0
        %2320 = vmatprep.subr.mxu0 0.0
        %2321 = vmatpush1.xpose.msra.mxu0 0.0
        %2322 = vmatprep.subr.mxu0 0.0
        %2323 = vmatpush1.xpose.msra.mxu0 0.0
        %2324 = vmatprep.subr.mxu0 0.0
        %2325 = vmatpush1.xpose.msra.mxu0 0.0
        %2326 = vmatprep.subr.mxu0 0.0
        %2327 = vmatpush1.xpose.msra.mxu0 0.0
        %2328 = vmatprep.subr.mxu0 0.0
        %2329 = vmatpush1.xpose.msra.mxu0 0.0
        %2330 = vmatprep.subr.mxu0 0.0
        %2331 = vmatpush1.xpose.msra.mxu0 0.0
        %2332 = vmatprep.subr.mxu0 0.0
        %2333 = vmatpush1.xpose.msra.mxu0 0.0
        %2334 = vmatprep.subr.mxu0 0.0
        %2335 = vmatpush1.xpose.msra.mxu0 0.0
        %2336 = vmatprep.subr.mxu0 0.0
        %2337 = vmatpush1.xpose.msra.mxu0 0.0
        %2338 = vmatprep.subr.mxu0 0.0
        %2339 = vmatpush1.xpose.msra.mxu0 0.0
        %2340 = vmatprep.subr.mxu0 0.0
        %2341 = vmatpush1.xpose.msra.mxu0 0.0
        %2342 = vmatprep.subr.mxu0 0.0
        %2343 = vmatpush1.xpose.msra.mxu0 0.0
        %2344 = vmatprep.mubr.f32.mxu0 0.0
        %2345 = vmatmul.mubr.f32.gmra.mrb[0].mxu0 %v2276
        %v2346 = vpop.f32.mrb[0].mxu0
        %v2347 = vadd.f32 0.0, %v2346
        %v2348 = vpop.f32.mrb[0].mxu0
        %2349 = vdwg.mxu0
        %v2350 = vsel %vm1167, %v2347, -inf
        %2351 = vmax.xlane.f32.xlu0 %v2350
        %v2352 = vpop.xlane.xlu0 %2351
        %v2353 = vsub.f32 %v2347, %v2352
        %v2354 = vmul.f32 %v2353, 1.442695
        %v2355 = vpow.pop %v2354
        %v2356 = vsel %vm1167, %v2355, 0.0
        %2357 = vadd.xlane.f32.xlu0 %v2356
        %v2358 = vpop.xlane.xlu0 %2357
        %2360 = vrot.lane.b32.xlu0 %v1022, 64
        %v2361 = vpop.permute.xlu0 %2360
        %v2364 = vsel %vm1167, %v2355, 0
        %2366 = vmatprep.subr.mxu0 0.0
        %2367 = vmatpush1.msra.mxu0 %v2361
        %2368 = vmatprep.subr.mxu0 0.0
        %2369 = vmatpush1.msra.mxu0 0.0
        %2370 = vmatprep.subr.mxu0 0.0
        %2371 = vmatpush1.msra.mxu0 0.0
        %2372 = vmatprep.subr.mxu0 0.0
        %2373 = vmatpush1.msra.mxu0 0.0
        %2374 = vmatprep.subr.mxu0 0.0
        %2375 = vmatpush1.msra.mxu0 0.0
        %2376 = vmatprep.subr.mxu0 0.0
        %2377 = vmatpush1.msra.mxu0 0.0
        %2378 = vmatprep.subr.mxu0 0.0
        %2379 = vmatpush1.msra.mxu0 0.0
        %2380 = vmatprep.subr.mxu0 0.0
        %2381 = vmatpush1.msra.mxu0 0.0
        %2382 = vmatprep.subr.mxu0 0.0
        %2383 = vmatpush1.msra.mxu0 0.0
        %2384 = vmatprep.subr.mxu0 0.0
        %2385 = vmatpush1.msra.mxu0 0.0
        %2386 = vmatprep.subr.mxu0 0.0
        %2387 = vmatpush1.msra.mxu0 0.0
        %2388 = vmatprep.subr.mxu0 0.0
        %2389 = vmatpush1.msra.mxu0 0.0
        %2390 = vmatprep.subr.mxu0 0.0
        %2391 = vmatpush1.msra.mxu0 0.0
        %2392 = vmatprep.subr.mxu0 0.0
        %2393 = vmatpush1.msra.mxu0 0.0
        %2394 = vmatprep.subr.mxu0 0.0
        %2395 = vmatpush1.msra.mxu0 0.0
        %2396 = vmatprep.subr.mxu0 0.0
        %2397 = vmatpush1.msra.mxu0 0.0
        %2398 = vmatprep.subr.mxu0 0.0
        %2399 = vmatpush1.msra.mxu0 0.0
        %2400 = vmatprep.subr.mxu0 0.0
        %2401 = vmatpush1.msra.mxu0 0.0
        %2402 = vmatprep.subr.mxu0 0.0
        %2403 = vmatpush1.msra.mxu0 0.0
        %2404 = vmatprep.subr.mxu0 0.0
        %2405 = vmatpush1.msra.mxu0 0.0
        %2406 = vmatprep.subr.mxu0 0.0
        %2407 = vmatpush1.msra.mxu0 0.0
        %2408 = vmatprep.subr.mxu0 0.0
        %2409 = vmatpush1.msra.mxu0 0.0
        %2410 = vmatprep.subr.mxu0 0.0
        %2411 = vmatpush1.msra.mxu0 0.0
        %2412 = vmatprep.subr.mxu0 0.0
        %2413 = vmatpush1.msra.mxu0 0.0
        %2414 = vmatprep.subr.mxu0 0.0
        %2415 = vmatpush1.msra.mxu0 0.0
        %2416 = vmatprep.subr.mxu0 0.0
        %2417 = vmatpush1.msra.mxu0 0.0
        %2418 = vmatprep.subr.mxu0 0.0
        %2419 = vmatpush1.msra.mxu0 0.0
        %2420 = vmatprep.subr.mxu0 0.0
        %2421 = vmatpush1.msra.mxu0 0.0
        %2422 = vmatprep.subr.mxu0 0.0
        %2423 = vmatpush1.msra.mxu0 0.0
        %2424 = vmatprep.subr.mxu0 0.0
        %2425 = vmatpush1.msra.mxu0 0.0
        %2426 = vmatprep.subr.mxu0 0.0
        %2427 = vmatpush1.msra.mxu0 0.0
        %2428 = vmatprep.subr.mxu0 0.0
        %2429 = vmatpush1.msra.mxu0 0.0
        %2430 = vmatprep.mubr.f32.mxu0 0.0
        %2431 = vmatmul.mubr.f32.gmra.mrb[0].mxu0 %v2364
        %v2432 = vpop.f32.mrb[0].mxu0
        %v2433 = vadd.f32 0.0, %v2432
        %v2434 = vpop.f32.mrb[0].mxu0
        %2435 = vdwg.mxu0
        %v2436 = vrcp.pop %v2358
        %v2437 = vmul.f32 %v2433, %v2436
        %v2439 = vsel %vm1090, %v2437, 0
        %2441 = vmatprep.subr.mxu0 0.0
        %2442 = vmatpush1.msra.mxu0 %v1066
        %2443 = vmatprep.subr.mxu0 0.0
        %2444 = vmatpush1.msra.mxu0 %v1067
        %2445 = vmatprep.subr.mxu0 0.0
        %2446 = vmatpush1.msra.mxu0 %v1068
        %2447 = vmatprep.subr.mxu0 0.0
        %2448 = vmatpush1.msra.mxu0 %v1069
        %2449 = vmatprep.subr.mxu0 0.0
        %2450 = vmatpush1.msra.mxu0 %v1070
        %2451 = vmatprep.subr.mxu0 0.0
        %2452 = vmatpush1.msra.mxu0 %v1071
        %2453 = vmatprep.subr.mxu0 0.0
        %2454 = vmatpush1.msra.mxu0 %v1072
        %2455 = vmatprep.subr.mxu0 0.0
        %2456 = vmatpush1.msra.mxu0 %v1073
        %2457 = vmatprep.subr.mxu0 0.0
        %2458 = vmatpush1.msra.mxu0 0.0
        %2459 = vmatprep.subr.mxu0 0.0
        %2460 = vmatpush1.msra.mxu0 0.0
        %2461 = vmatprep.subr.mxu0 0.0
        %2462 = vmatpush1.msra.mxu0 0.0
        %2463 = vmatprep.subr.mxu0 0.0
        %2464 = vmatpush1.msra.mxu0 0.0
        %2465 = vmatprep.subr.mxu0 0.0
        %2466 = vmatpush1.msra.mxu0 0.0
        %2467 = vmatprep.subr.mxu0 0.0
        %2468 = vmatpush1.msra.mxu0 0.0
        %2469 = vmatprep.subr.mxu0 0.0
        %2470 = vmatpush1.msra.mxu0 0.0
        %2471 = vmatprep.subr.mxu0 0.0
        %2472 = vmatpush1.msra.mxu0 0.0
        %2473 = vmatprep.subr.mxu0 0.0
        %2474 = vmatpush1.msra.mxu0 0.0
        %2475 = vmatprep.subr.mxu0 0.0
        %2476 = vmatpush1.msra.mxu0 0.0
        %2477 = vmatprep.subr.mxu0 0.0
        %2478 = vmatpush1.msra.mxu0 0.0
        %2479 = vmatprep.subr.mxu0 0.0
        %2480 = vmatpush1.msra.mxu0 0.0
        %2481 = vmatprep.subr.mxu0 0.0
        %2482 = vmatpush1.msra.mxu0 0.0
        %2483 = vmatprep.subr.mxu0 0.0
        %2484 = vmatpush1.msra.mxu0 0.0
        %2485 = vmatprep.subr.mxu0 0.0
        %2486 = vmatpush1.msra.mxu0 0.0
        %2487 = vmatprep.subr.mxu0 0.0
        %2488 = vmatpush1.msra.mxu0 0.0
        %2489 = vmatprep.subr.mxu0 0.0
        %2490 = vmatpush1.msra.mxu0 0.0
        %2491 = vmatprep.subr.mxu0 0.0
        %2492 = vmatpush1.msra.mxu0 0.0
        %2493 = vmatprep.subr.mxu0 0.0
        %2494 = vmatpush1.msra.mxu0 0.0
        %2495 = vmatprep.subr.mxu0 0.0
        %2496 = vmatpush1.msra.mxu0 0.0
        %2497 = vmatprep.subr.mxu0 0.0
        %2498 = vmatpush1.msra.mxu0 0.0
        %2499 = vmatprep.subr.mxu0 0.0
        %2500 = vmatpush1.msra.mxu0 0.0
        %2501 = vmatprep.subr.mxu0 0.0
        %2502 = vmatpush1.msra.mxu0 0.0
        %2503 = vmatprep.subr.mxu0 0.0
        %2504 = vmatpush1.msra.mxu0 0.0
        %2505 = vmatprep.mubr.f32.mxu0 0.0
        %2506 = vmatmul.mubr.f32.gmra.mrb[0].mxu0 %v2439
        %v2507 = vpop.f32.mrb[0].mxu0
        %v2508 = vadd.f32 0.0, %v2507
        %v2509 = vpop.f32.mrb[0].mxu0
        %2510 = vdwg.mxu0
        %v2511 = vadd.f32 %v2271, %v2508
        %v2513 = vsel %vm1090, %v612, 0
        %v2516 = vsel %vm1090, %v882, 0
        %2518 = vmatprep.subr.mxu0 0.0
        %2519 = vmatpush1.xpose.msra.mxu0 %v2516
        %2520 = vmatprep.subr.mxu0 0.0
        %2521 = vmatpush1.xpose.msra.mxu0 0.0
        %2522 = vmatprep.subr.mxu0 0.0
        %2523 = vmatpush1.xpose.msra.mxu0 0.0
        %2524 = vmatprep.subr.mxu0 0.0
        %2525 = vmatpush1.xpose.msra.mxu0 0.0
        %2526 = vmatprep.subr.mxu0 0.0
        %2527 = vmatpush1.xpose.msra.mxu0 0.0
        %2528 = vmatprep.subr.mxu0 0.0
        %2529 = vmatpush1.xpose.msra.mxu0 0.0
        %2530 = vmatprep.subr.mxu0 0.0
        %2531 = vmatpush1.xpose.msra.mxu0 0.0
        %2532 = vmatprep.subr.mxu0 0.0
        %2533 = vmatpush1.xpose.msra.mxu0 0.0
        %2534 = vmatprep.subr.mxu0 0.0
        %2535 = vmatpush1.xpose.msra.mxu0 0.0
        %2536 = vmatprep.subr.mxu0 0.0
        %2537 = vmatpush1.xpose.msra.mxu0 0.0
        %2538 = vmatprep.subr.mxu0 0.0
        %2539 = vmatpush1.xpose.msra.mxu0 0.0
        %2540 = vmatprep.subr.mxu0 0.0
        %2541 = vmatpush1.xpose.msra.mxu0 0.0
        %2542 = vmatprep.subr.mxu0 0.0
        %2543 = vmatpush1.xpose.msra.mxu0 0.0
        %2544 = vmatprep.subr.mxu0 0.0
        %2545 = vmatpush1.xpose.msra.mxu0 0.0
        %2546 = vmatprep.subr.mxu0 0.0
        %2547 = vmatpush1.xpose.msra.mxu0 0.0
        %2548 = vmatprep.subr.mxu0 0.0
        %2549 = vmatpush1.xpose.msra.mxu0 0.0
        %2550 = vmatprep.subr.mxu0 0.0
        %2551 = vmatpush1.xpose.msra.mxu0 0.0
        %2552 = vmatprep.subr.mxu0 0.0
        %2553 = vmatpush1.xpose.msra.mxu0 0.0
        %2554 = vmatprep.subr.mxu0 0.0
        %2555 = vmatpush1.xpose.msra.mxu0 0.0
        %2556 = vmatprep.subr.mxu0 0.0
        %2557 = vmatpush1.xpose.msra.mxu0 0.0
        %2558 = vmatprep.subr.mxu0 0.0
        %2559 = vmatpush1.xpose.msra.mxu0 0.0
        %2560 = vmatprep.subr.mxu0 0.0
        %2561 = vmatpush1.xpose.msra.mxu0 0.0
        %2562 = vmatprep.subr.mxu0 0.0
        %2563 = vmatpush1.xpose.msra.mxu0 0.0
        %2564 = vmatprep.subr.mxu0 0.0
        %2565 = vmatpush1.xpose.msra.mxu0 0.0
        %2566 = vmatprep.subr.mxu0 0.0
        %2567 = vmatpush1.xpose.msra.mxu0 0.0
        %2568 = vmatprep.subr.mxu0 0.0
        %2569 = vmatpush1.xpose.msra.mxu0 0.0
        %2570 = vmatprep.subr.mxu0 0.0
        %2571 = vmatpush1.xpose.msra.mxu0 0.0
        %2572 = vmatprep.subr.mxu0 0.0
        %2573 = vmatpush1.xpose.msra.mxu0 0.0
        %2574 = vmatprep.subr.mxu0 0.0
        %2575 = vmatpush1.xpose.msra.mxu0 0.0
        %2576 = vmatprep.subr.mxu0 0.0
        %2577 = vmatpush1.xpose.msra.mxu0 0.0
        %2578 = vmatprep.subr.mxu0 0.0
        %2579 = vmatpush1.xpose.msra.mxu0 0.0
        %2580 = vmatprep.subr.mxu0 0.0
        %2581 = vmatpush1.xpose.msra.mxu0 0.0
        %2582 = vmatprep.mubr.f32.mxu0 0.0
        %2583 = vmatmul.mubr.f32.gmra.mrb[0].mxu0 %v2513
        %v2584 = vpop.f32.mrb[0].mxu0
        %v2585 = vadd.f32 0.0, %v2584
        %v2586 = vpop.f32.mrb[0].mxu0
        %2587 = vdwg.mxu0
        %v2588 = vsel %vm1167, %v2585, -inf
        %2589 = vmax.xlane.f32.xlu0 %v2588
        %v2590 = vpop.xlane.xlu0 %2589
        %v2591 = vsub.f32 %v2585, %v2590
        %v2592 = vmul.f32 %v2591, 1.442695
        %v2593 = vpow.pop %v2592
        %v2594 = vsel %vm1167, %v2593, 0.0
        %2595 = vadd.xlane.f32.xlu0 %v2594
        %v2596 = vpop.xlane.xlu0 %2595
        %v2598 = vsel %vm1167, %v2593, 0
        %2600 = vmatprep.subr.mxu0 0.0
        %2601 = vmatpush1.msra.mxu0 %v1024
        %2602 = vmatprep.subr.mxu0 0.0
        %2603 = vmatpush1.msra.mxu0 0.0
        %2604 = vmatprep.subr.mxu0 0.0
        %2605 = vmatpush1.msra.mxu0 0.0
        %2606 = vmatprep.subr.mxu0 0.0
        %2607 = vmatpush1.msra.mxu0 0.0
        %2608 = vmatprep.subr.mxu0 0.0
        %2609 = vmatpush1.msra.mxu0 0.0
        %2610 = vmatprep.subr.mxu0 0.0
        %2611 = vmatpush1.msra.mxu0 0.0
        %2612 = vmatprep.subr.mxu0 0.0
        %2613 = vmatpush1.msra.mxu0 0.0
        %2614 = vmatprep.subr.mxu0 0.0
        %2615 = vmatpush1.msra.mxu0 0.0
        %2616 = vmatprep.subr.mxu0 0.0
        %2617 = vmatpush1.msra.mxu0 0.0
        %2618 = vmatprep.subr.mxu0 0.0
        %2619 = vmatpush1.msra.mxu0 0.0
        %2620 = vmatprep.subr.mxu0 0.0
        %2621 = vmatpush1.msra.mxu0 0.0
        %2622 = vmatprep.subr.mxu0 0.0
        %2623 = vmatpush1.msra.mxu0 0.0
        %2624 = vmatprep.subr.mxu0 0.0
        %2625 = vmatpush1.msra.mxu0 0.0
        %2626 = vmatprep.subr.mxu0 0.0
        %2627 = vmatpush1.msra.mxu0 0.0
        %2628 = vmatprep.subr.mxu0 0.0
        %2629 = vmatpush1.msra.mxu0 0.0
        %2630 = vmatprep.subr.mxu0 0.0
        %2631 = vmatpush1.msra.mxu0 0.0
        %2632 = vmatprep.subr.mxu0 0.0
        %2633 = vmatpush1.msra.mxu0 0.0
        %2634 = vmatprep.subr.mxu0 0.0
        %2635 = vmatpush1.msra.mxu0 0.0
        %2636 = vmatprep.subr.mxu0 0.0
        %2637 = vmatpush1.msra.mxu0 0.0
        %2638 = vmatprep.subr.mxu0 0.0
        %2639 = vmatpush1.msra.mxu0 0.0
        %2640 = vmatprep.subr.mxu0 0.0
        %2641 = vmatpush1.msra.mxu0 0.0
        %2642 = vmatprep.subr.mxu0 0.0
        %2643 = vmatpush1.msra.mxu0 0.0
        %2644 = vmatprep.subr.mxu0 0.0
        %2645 = vmatpush1.msra.mxu0 0.0
        %2646 = vmatprep.subr.mxu0 0.0
        %2647 = vmatpush1.msra.mxu0 0.0
        %2648 = vmatprep.subr.mxu0 0.0
        %2649 = vmatpush1.msra.mxu0 0.0
        %2650 = vmatprep.subr.mxu0 0.0
        %2651 = vmatpush1.msra.mxu0 0.0
        %2652 = vmatprep.subr.mxu0 0.0
        %2653 = vmatpush1.msra.mxu0 0.0
        %2654 = vmatprep.subr.mxu0 0.0
        %2655 = vmatpush1.msra.mxu0 0.0
        %2656 = vmatprep.subr.mxu0 0.0
        %2657 = vmatpush1.msra.mxu0 0.0
        %2658 = vmatprep.subr.mxu0 0.0
        %2659 = vmatpush1.msra.mxu0 0.0
        %2660 = vmatprep.subr.mxu0 0.0
        %2661 = vmatpush1.msra.mxu0 0.0
        %2662 = vmatprep.subr.mxu0 0.0
        %2663 = vmatpush1.msra.mxu0 0.0
        %2664 = vmatprep.mubr.f32.mxu0 0.0
        %2665 = vmatmul.mubr.f32.gmra.mrb[0].mxu0 %v2598
        %v2666 = vpop.f32.mrb[0].mxu0
        %v2667 = vadd.f32 0.0, %v2666
        %v2668 = vpop.f32.mrb[0].mxu0
        %2669 = vdwg.mxu0
        %v2670 = vrcp.pop %v2596
        %v2671 = vmul.f32 %v2667, %v2670
        %v2673 = vsel %vm1090, %v2671, 0
        %2675 = vmatprep.subr.mxu0 0.0
        %2676 = vmatpush1.msra.mxu0 %v1074
        %2677 = vmatprep.subr.mxu0 0.0
        %2678 = vmatpush1.msra.mxu0 %v1075
        %2679 = vmatprep.subr.mxu0 0.0
        %2680 = vmatpush1.msra.mxu0 %v1076
        %2681 = vmatprep.subr.mxu0 0.0
        %2682 = vmatpush1.msra.mxu0 %v1077
        %2683 = vmatprep.subr.mxu0 0.0
        %2684 = vmatpush1.msra.mxu0 %v1078
        %2685 = vmatprep.subr.mxu0 0.0
        %2686 = vmatpush1.msra.mxu0 %v1079
        %2687 = vmatprep.subr.mxu0 0.0
        %2688 = vmatpush1.msra.mxu0 %v1080
        %2689 = vmatprep.subr.mxu0 0.0
        %2690 = vmatpush1.msra.mxu0 %v1081
        %2691 = vmatprep.subr.mxu0 0.0
        %2692 = vmatpush1.msra.mxu0 0.0
        %2693 = vmatprep.subr.mxu0 0.0
        %2694 = vmatpush1.msra.mxu0 0.0
        %2695 = vmatprep.subr.mxu0 0.0
        %2696 = vmatpush1.msra.mxu0 0.0
        %2697 = vmatprep.subr.mxu0 0.0
        %2698 = vmatpush1.msra.mxu0 0.0
        %2699 = vmatprep.subr.mxu0 0.0
        %2700 = vmatpush1.msra.mxu0 0.0
        %2701 = vmatprep.subr.mxu0 0.0
        %2702 = vmatpush1.msra.mxu0 0.0
        %2703 = vmatprep.subr.mxu0 0.0
        %2704 = vmatpush1.msra.mxu0 0.0
        %2705 = vmatprep.subr.mxu0 0.0
        %2706 = vmatpush1.msra.mxu0 0.0
        %2707 = vmatprep.subr.mxu0 0.0
        %2708 = vmatpush1.msra.mxu0 0.0
        %2709 = vmatprep.subr.mxu0 0.0
        %2710 = vmatpush1.msra.mxu0 0.0
        %2711 = vmatprep.subr.mxu0 0.0
        %2712 = vmatpush1.msra.mxu0 0.0
        %2713 = vmatprep.subr.mxu0 0.0
        %2714 = vmatpush1.msra.mxu0 0.0
        %2715 = vmatprep.subr.mxu0 0.0
        %2716 = vmatpush1.msra.mxu0 0.0
        %2717 = vmatprep.subr.mxu0 0.0
        %2718 = vmatpush1.msra.mxu0 0.0
        %2719 = vmatprep.subr.mxu0 0.0
        %2720 = vmatpush1.msra.mxu0 0.0
        %2721 = vmatprep.subr.mxu0 0.0
        %2722 = vmatpush1.msra.mxu0 0.0
        %2723 = vmatprep.subr.mxu0 0.0
        %2724 = vmatpush1.msra.mxu0 0.0
        %2725 = vmatprep.subr.mxu0 0.0
        %2726 = vmatpush1.msra.mxu0 0.0
        %2727 = vmatprep.subr.mxu0 0.0
        %2728 = vmatpush1.msra.mxu0 0.0
        %2729 = vmatprep.subr.mxu0 0.0
        %2730 = vmatpush1.msra.mxu0 0.0
        %2731 = vmatprep.subr.mxu0 0.0
        %2732 = vmatpush1.msra.mxu0 0.0
        %2733 = vmatprep.subr.mxu0 0.0
        %2734 = vmatpush1.msra.mxu0 0.0
        %2735 = vmatprep.subr.mxu0 0.0
        %2736 = vmatpush1.msra.mxu0 0.0
        %2737 = vmatprep.subr.mxu0 0.0
        %2738 = vmatpush1.msra.mxu0 0.0
        %2739 = vmatprep.mubr.f32.mxu0 0.0
        %2740 = vmatmul.mubr.f32.gmra.mrb[0].mxu0 %v2673
        %v2741 = vpop.f32.mrb[0].mxu0
        %v2742 = vadd.f32 0.0, %v2741
        %v2743 = vpop.f32.mrb[0].mxu0
        %2744 = vdwg.mxu0
        %v2745 = vadd.f32 %v2511, %v2742
        %2746 = vrot.lane.b32.xlu0 %v612, 64
        %v2747 = vpop.permute.xlu0 %2746
        %2748 = vrot.lane.b32.xlu0 %v882, 64
        %v2749 = vpop.permute.xlu0 %2748
        %v2750 = vsel %vm1090, %v2747, 0
        %v2752 = vsel %vm1090, %v2749, 0
        %2754 = vmatprep.subr.mxu0 0.0
        %2755 = vmatpush1.xpose.msra.mxu0 %v2752
        %2756 = vmatprep.subr.mxu0 0.0
        %2757 = vmatpush1.xpose.msra.mxu0 0.0
        %2758 = vmatprep.subr.mxu0 0.0
        %2759 = vmatpush1.xpose.msra.mxu0 0.0
        %2760 = vmatprep.subr.mxu0 0.0
        %2761 = vmatpush1.xpose.msra.mxu0 0.0
        %2762 = vmatprep.subr.mxu0 0.0
        %2763 = vmatpush1.xpose.msra.mxu0 0.0
        %2764 = vmatprep.subr.mxu0 0.0
        %2765 = vmatpush1.xpose.msra.mxu0 0.0
        %2766 = vmatprep.subr.mxu0 0.0
        %2767 = vmatpush1.xpose.msra.mxu0 0.0
        %2768 = vmatprep.subr.mxu0 0.0
        %2769 = vmatpush1.xpose.msra.mxu0 0.0
        %2770 = vmatprep.subr.mxu0 0.0
        %2771 = vmatpush1.xpose.msra.mxu0 0.0
        %2772 = vmatprep.subr.mxu0 0.0
        %2773 = vmatpush1.xpose.msra.mxu0 0.0
        %2774 = vmatprep.subr.mxu0 0.0
        %2775 = vmatpush1.xpose.msra.mxu0 0.0
        %2776 = vmatprep.subr.mxu0 0.0
        %2777 = vmatpush1.xpose.msra.mxu0 0.0
        %2778 = vmatprep.subr.mxu0 0.0
        %2779 = vmatpush1.xpose.msra.mxu0 0.0
        %2780 = vmatprep.subr.mxu0 0.0
        %2781 = vmatpush1.xpose.msra.mxu0 0.0
        %2782 = vmatprep.subr.mxu0 0.0
        %2783 = vmatpush1.xpose.msra.mxu0 0.0
        %2784 = vmatprep.subr.mxu0 0.0
        %2785 = vmatpush1.xpose.msra.mxu0 0.0
        %2786 = vmatprep.subr.mxu0 0.0
        %2787 = vmatpush1.xpose.msra.mxu0 0.0
        %2788 = vmatprep.subr.mxu0 0.0
        %2789 = vmatpush1.xpose.msra.mxu0 0.0
        %2790 = vmatprep.subr.mxu0 0.0
        %2791 = vmatpush1.xpose.msra.mxu0 0.0
        %2792 = vmatprep.subr.mxu0 0.0
        %2793 = vmatpush1.xpose.msra.mxu0 0.0
        %2794 = vmatprep.subr.mxu0 0.0
        %2795 = vmatpush1.xpose.msra.mxu0 0.0
        %2796 = vmatprep.subr.mxu0 0.0
        %2797 = vmatpush1.xpose.msra.mxu0 0.0
        %2798 = vmatprep.subr.mxu0 0.0
        %2799 = vmatpush1.xpose.msra.mxu0 0.0
        %2800 = vmatprep.subr.mxu0 0.0
        %2801 = vmatpush1.xpose.msra.mxu0 0.0
        %2802 = vmatprep.subr.mxu0 0.0
        %2803 = vmatpush1.xpose.msra.mxu0 0.0
        %2804 = vmatprep.subr.mxu0 0.0
        %2805 = vmatpush1.xpose.msra.mxu0 0.0
        %2806 = vmatprep.subr.mxu0 0.0
        %2807 = vmatpush1.xpose.msra.mxu0 0.0
        %2808 = vmatprep.subr.mxu0 0.0
        %2809 = vmatpush1.xpose.msra.mxu0 0.0
        %2810 = vmatprep.subr.mxu0 0.0
        %2811 = vmatpush1.xpose.msra.mxu0 0.0
        %2812 = vmatprep.subr.mxu0 0.0
        %2813 = vmatpush1.xpose.msra.mxu0 0.0
        %2814 = vmatprep.subr.mxu0 0.0
        %2815 = vmatpush1.xpose.msra.mxu0 0.0
        %2816 = vmatprep.subr.mxu0 0.0
        %2817 = vmatpush1.xpose.msra.mxu0 0.0
        %2818 = vmatprep.mubr.f32.mxu0 0.0
        %2819 = vmatmul.mubr.f32.gmra.mrb[0].mxu0 %v2750
        %v2820 = vpop.f32.mrb[0].mxu0
        %v2821 = vadd.f32 0.0, %v2820
        %v2822 = vpop.f32.mrb[0].mxu0
        %2823 = vdwg.mxu0
        %v2824 = vsel %vm1167, %v2821, -inf
        %2825 = vmax.xlane.f32.xlu0 %v2824
        %v2826 = vpop.xlane.xlu0 %2825
        %v2827 = vsub.f32 %v2821, %v2826
        %v2828 = vmul.f32 %v2827, 1.442695
        %v2829 = vpow.pop %v2828
        %v2830 = vsel %vm1167, %v2829, 0.0
        %2831 = vadd.xlane.f32.xlu0 %v2830
        %v2832 = vpop.xlane.xlu0 %2831
        %2834 = vrot.lane.b32.xlu0 %v1024, 64
        %v2835 = vpop.permute.xlu0 %2834
        %v2838 = vsel %vm1167, %v2829, 0
        %2840 = vmatprep.subr.mxu0 0.0
        %2841 = vmatpush1.msra.mxu0 %v2835
        %2842 = vmatprep.subr.mxu0 0.0
        %2843 = vmatpush1.msra.mxu0 0.0
        %2844 = vmatprep.subr.mxu0 0.0
        %2845 = vmatpush1.msra.mxu0 0.0
        %2846 = vmatprep.subr.mxu0 0.0
        %2847 = vmatpush1.msra.mxu0 0.0
        %2848 = vmatprep.subr.mxu0 0.0
        %2849 = vmatpush1.msra.mxu0 0.0
        %2850 = vmatprep.subr.mxu0 0.0
        %2851 = vmatpush1.msra.mxu0 0.0
        %2852 = vmatprep.subr.mxu0 0.0
        %2853 = vmatpush1.msra.mxu0 0.0
        %2854 = vmatprep.subr.mxu0 0.0
        %2855 = vmatpush1.msra.mxu0 0.0
        %2856 = vmatprep.subr.mxu0 0.0
        %2857 = vmatpush1.msra.mxu0 0.0
        %2858 = vmatprep.subr.mxu0 0.0
        %2859 = vmatpush1.msra.mxu0 0.0
        %2860 = vmatprep.subr.mxu0 0.0
        %2861 = vmatpush1.msra.mxu0 0.0
        %2862 = vmatprep.subr.mxu0 0.0
        %2863 = vmatpush1.msra.mxu0 0.0
        %2864 = vmatprep.subr.mxu0 0.0
        %2865 = vmatpush1.msra.mxu0 0.0
        %2866 = vmatprep.subr.mxu0 0.0
        %2867 = vmatpush1.msra.mxu0 0.0
        %2868 = vmatprep.subr.mxu0 0.0
        %2869 = vmatpush1.msra.mxu0 0.0
        %2870 = vmatprep.subr.mxu0 0.0
        %2871 = vmatpush1.msra.mxu0 0.0
        %2872 = vmatprep.subr.mxu0 0.0
        %2873 = vmatpush1.msra.mxu0 0.0
        %2874 = vmatprep.subr.mxu0 0.0
        %2875 = vmatpush1.msra.mxu0 0.0
        %2876 = vmatprep.subr.mxu0 0.0
        %2877 = vmatpush1.msra.mxu0 0.0
        %2878 = vmatprep.subr.mxu0 0.0
        %2879 = vmatpush1.msra.mxu0 0.0
        %2880 = vmatprep.subr.mxu0 0.0
        %2881 = vmatpush1.msra.mxu0 0.0
        %2882 = vmatprep.subr.mxu0 0.0
        %2883 = vmatpush1.msra.mxu0 0.0
        %2884 = vmatprep.subr.mxu0 0.0
        %2885 = vmatpush1.msra.mxu0 0.0
        %2886 = vmatprep.subr.mxu0 0.0
        %2887 = vmatpush1.msra.mxu0 0.0
        %2888 = vmatprep.subr.mxu0 0.0
        %2889 = vmatpush1.msra.mxu0 0.0
        %2890 = vmatprep.subr.mxu0 0.0
        %2891 = vmatpush1.msra.mxu0 0.0
        %2892 = vmatprep.subr.mxu0 0.0
        %2893 = vmatpush1.msra.mxu0 0.0
        %2894 = vmatprep.subr.mxu0 0.0
        %2895 = vmatpush1.msra.mxu0 0.0
        %2896 = vmatprep.subr.mxu0 0.0
        %2897 = vmatpush1.msra.mxu0 0.0
        %2898 = vmatprep.subr.mxu0 0.0
        %2899 = vmatpush1.msra.mxu0 0.0
        %2900 = vmatprep.subr.mxu0 0.0
        %2901 = vmatpush1.msra.mxu0 0.0
        %2902 = vmatprep.subr.mxu0 0.0
        %2903 = vmatpush1.msra.mxu0 0.0
        %2904 = vmatprep.mubr.f32.mxu0 0.0
        %2905 = vmatmul.mubr.f32.gmra.mrb[0].mxu0 %v2838
        %v2906 = vpop.f32.mrb[0].mxu0
        %v2907 = vadd.f32 0.0, %v2906
        %v2908 = vpop.f32.mrb[0].mxu0
        %2909 = vdwg.mxu0
        %v2910 = vrcp.pop %v2832
        %v2911 = vmul.f32 %v2907, %v2910
        %v2913 = vsel %vm1090, %v2911, 0
        %2915 = vmatprep.subr.mxu0 0.0
        %2916 = vmatpush1.msra.mxu0 %v1082
        %2917 = vmatprep.subr.mxu0 0.0
        %2918 = vmatpush1.msra.mxu0 %v1083
        %2919 = vmatprep.subr.mxu0 0.0
        %2920 = vmatpush1.msra.mxu0 %v1084
        %2921 = vmatprep.subr.mxu0 0.0
        %2922 = vmatpush1.msra.mxu0 %v1085
        %2923 = vmatprep.subr.mxu0 0.0
        %2924 = vmatpush1.msra.mxu0 %v1086
        %2925 = vmatprep.subr.mxu0 0.0
        %2926 = vmatpush1.msra.mxu0 %v1087
        %2927 = vmatprep.subr.mxu0 0.0
        %2928 = vmatpush1.msra.mxu0 %v1088
        %2929 = vmatprep.subr.mxu0 0.0
        %2930 = vmatpush1.msra.mxu0 %v1089
        %2931 = vmatprep.subr.mxu0 0.0
        %2932 = vmatpush1.msra.mxu0 0.0
        %2933 = vmatprep.subr.mxu0 0.0
        %2934 = vmatpush1.msra.mxu0 0.0
        %2935 = vmatprep.subr.mxu0 0.0
        %2936 = vmatpush1.msra.mxu0 0.0
        %2937 = vmatprep.subr.mxu0 0.0
        %2938 = vmatpush1.msra.mxu0 0.0
        %2939 = vmatprep.subr.mxu0 0.0
        %2940 = vmatpush1.msra.mxu0 0.0
        %2941 = vmatprep.subr.mxu0 0.0
        %2942 = vmatpush1.msra.mxu0 0.0
        %2943 = vmatprep.subr.mxu0 0.0
        %2944 = vmatpush1.msra.mxu0 0.0
        %2945 = vmatprep.subr.mxu0 0.0
        %2946 = vmatpush1.msra.mxu0 0.0
        %2947 = vmatprep.subr.mxu0 0.0
        %2948 = vmatpush1.msra.mxu0 0.0
        %2949 = vmatprep.subr.mxu0 0.0
        %2950 = vmatpush1.msra.mxu0 0.0
        %2951 = vmatprep.subr.mxu0 0.0
        %2952 = vmatpush1.msra.mxu0 0.0
        %2953 = vmatprep.subr.mxu0 0.0
        %2954 = vmatpush1.msra.mxu0 0.0
        %2955 = vmatprep.subr.mxu0 0.0
        %2956 = vmatpush1.msra.mxu0 0.0
        %2957 = vmatprep.subr.mxu0 0.0
        %2958 = vmatpush1.msra.mxu0 0.0
        %2959 = vmatprep.subr.mxu0 0.0
        %2960 = vmatpush1.msra.mxu0 0.0
        %2961 = vmatprep.subr.mxu0 0.0
        %2962 = vmatpush1.msra.mxu0 0.0
        %2963 = vmatprep.subr.mxu0 0.0
        %2964 = vmatpush1.msra.mxu0 0.0
        %2965 = vmatprep.subr.mxu0 0.0
        %2966 = vmatpush1.msra.mxu0 0.0
        %2967 = vmatprep.subr.mxu0 0.0
        %2968 = vmatpush1.msra.mxu0 0.0
        %2969 = vmatprep.subr.mxu0 0.0
        %2970 = vmatpush1.msra.mxu0 0.0
        %2971 = vmatprep.subr.mxu0 0.0
        %2972 = vmatpush1.msra.mxu0 0.0
        %2973 = vmatprep.subr.mxu0 0.0
        %2974 = vmatpush1.msra.mxu0 0.0
        %2975 = vmatprep.subr.mxu0 0.0
        %2976 = vmatpush1.msra.mxu0 0.0
        %2977 = vmatprep.subr.mxu0 0.0
        %2978 = vmatpush1.msra.mxu0 0.0
        %2979 = vmatprep.mubr.f32.mxu0 0.0
        %2980 = vmatmul.mubr.f32.gmra.mrb[0].mxu0 %v2913
        %v2981 = vpop.f32.mrb[0].mxu0
        %v2982 = vadd.f32 0.0, %v2981
        %v2983 = vpop.f32.mrb[0].mxu0
        %2984 = vdwg.mxu0
        %v2985 = vadd.f32 %v2745, %v2982
        %2986 = vst [vmem:[%s373] sm:$0xff] %v2985
        %s2987 = sand.u32 %s193, 1
        %s2988 = scalar_lea.sflag [#allocation4], %s2987
        %s2989 = sand.u32 %s193, 1
        %s2990 = smul.addr %s2989, 8
        %s2991 = scalar_lea.vmem [#allocation11], %s2990
        // Predicated region
        $region69: #{tpu_custom_call.1} parent=47 // pred_check
          %p2992 = pneg %p203
        $region70: #{tpu_custom_call.1} parent=47 // pred_check_branch
          %2994 = sbr.rel (%p2992) target = $region72
        $region71: #{tpu_custom_call.1} parent=47 // pred_region
          %s2996 = ssub.s32 128, 128
          %2997 = vsyncadd %s2988, %s2996
          %s2998 = smul.addr %s28, 128
          %s2999 = scalar_lea.hbm %s7, %s2998
          %s3001 = sshll.u32 %s2991, 4
          %s3002 = int_to_ptr.vmem [resolvable:$true] %s3001
          %3004 = dma.vmem_to_hbm [thread:$0]  %s3002, 128, %s2999, %s2988
        $region72: #{tpu_custom_call.1} parent=47 // pred_fallthru
          _
      $region48: #{tpu_custom_call.1} parent=5 // pred_fallthru
        _
      %p3005 = scmp.le.s32.totalorder 2, %s23
      // Predicated region
      $region73: #{tpu_custom_call.1} parent=5 // pred_check
        %p3006 = pneg %p3005
      $region74: #{tpu_custom_call.1} parent=5 // pred_check_branch
        %3008 = sbr.rel (%p3006) target = $region76
      $region75: #{tpu_custom_call.1} parent=5 // pred_region
        %s3009 = ssub.s32 %s23, 2
        // Predicated region
        $region77: #{tpu_custom_call.1} parent=75 // pred_check
          %p3010 = pneg %p209
        $region78: #{tpu_custom_call.1} parent=75 // pred_check_branch
          %3012 = sbr.rel (%p3010) target = $region80
        $region79: #{tpu_custom_call.1} parent=75 // pred_region
          %s3013 = sand.u32 %s194, 1
          %s3014 = scalar_lea.sflag [#allocation4], %s3013
          %s3015 = sand.u32 %s194, 1
          %s3016 = smul.addr %s3015, 8
          %s3017 = scalar_lea.vmem [#allocation11], %s3016
          %3018 = dma.done %s3014, 128
        $region80: #{tpu_custom_call.1} parent=75 // pred_fallthru
          _
      $region76: #{tpu_custom_call.1} parent=5 // pred_fallthru
        _
    $region6: #{tpu_custom_call.1} parent=1 // loop_footer
      %s27 = sadd.s32 1, %s23
    $region7: #{tpu_custom_call.1} parent=1 // loop_footer_branch
      %22 = sbr.rel target = $region3
    $region8: #{tpu_custom_call.1} parent=1 // loop_exit
      _
    %3019 = vsyncpa [#allocation3], 1
    %s3020 = scalar_lea.sflag [#allocation3], 1
    %3021 = vsyncpa %s3020, 1
    %3022 = vsyncpa [#allocation6], 1
    %s3023 = scalar_lea.sflag [#allocation6], 1
    %3024 = vsyncpa %s3023, 1
    %3025 = vsyncpa [#allocation9], 1
    %3026 = vsyncpa [#allocation4], 1
    %s3027 = scalar_lea.sflag [#allocation4], 1
    %3028 = vsyncpa %s3027, 1

</llo_original>
